<compile_context>
chip_gen: v7x
topology: tpu7x:2x2x1
jax: 0.10.0
libtpu: 0.0.40
codegen_flags: <defaults>
</compile_context>

<pallas_src>
import functools
import math

import jax
import jax.numpy as jnp
from jax.experimental import pallas as pl
from jax.experimental.pallas import tpu as pltpu


def _round_up(x, m):
    return (x + m - 1) // m * m


# --------------------------------------------------------------------------- #
# Fused bidirectional LSTM recurrence kernel (input projection already hoisted)
# --------------------------------------------------------------------------- #
def _bilstm_chunk_kernel(lens_ref, gf_ref, gb_ref, whh_f_hbm, whh_b_hbm,
                         out_f_ref, out_b_ref,
                         whh_f, whh_b, h_f, c_f, h_b, c_b):
    """One grid step processes a chunk of TC timesteps for both directions.

    Forward handles global times [c*TC, (c+1)*TC); backward handles the
    time-reversed chunk [T_pad-(c+1)*TC, T_pad-c*TC) walking downwards.
    Gate pre-activations (x @ W_ih + b) are precomputed, so the sequential
    loop only does the small h @ W_hh matmul per step per direction.
    Padded positions (time >= lens[b]) freeze the state and emit zeros.
    """
    c = pl.program_id(0)
    TC, B_pad, G4 = gf_ref.shape
    H = G4 // 4                               # padded hidden (multiple of 128)
    T_pad = pl.num_programs(0) * TC

    @pl.when(c == 0)
    def _():
        # Copy the recurrent weights HBM -> VMEM exactly once per layer call
        # (no per-step double-buffered weight DMA) and zero the state.
        pltpu.sync_copy(whh_f_hbm, whh_f)
        pltpu.sync_copy(whh_b_hbm, whh_b)
        h_f[...] = jnp.zeros_like(h_f)
        c_f[...] = jnp.zeros_like(c_f)
        h_b[...] = jnp.zeros_like(h_b)
        c_b[...] = jnp.zeros_like(c_b)

    lens = lens_ref[...]                      # [B_pad, 1] int32, resident

    # Gate nonlinearity via the exact identity sigmoid(x) = 0.5*tanh(0.5*x)+0.5
    # so i, f, g, o are produced by ONE tanh over the whole 4*H row:
    #   act = tanh(gates * s) * s + off,  s = 0.5 (i,f,o) / 1.0 (g),
    #   off = 0.5 (i,f,o) / 0.0 (g).
    # Hoisted out of the time loop (JAX does not CSE broadcasts).
    col = jax.lax.broadcasted_iota(jnp.int32, (B_pad, G4), 1)
    is_g = jnp.logical_and(col >= 2 * H, col < 3 * H)
    g_scale = jnp.where(is_g, 1.0, 0.5).astype(jnp.float32)
    g_off = jnp.where(is_g, 0.0, 0.5).astype(jnp.float32)

    t_base = c * TC

    def lstm_cell(g_pre_bf16, h, c_state, w_ref):
        # Recurrent matmul: bf16 inputs on the MXU, f32 accumulation.
        gates = g_pre_bf16.astype(jnp.float32) + jnp.dot(
            h.astype(jnp.bfloat16), w_ref[...],
            preferred_element_type=jnp.float32)
        act = jnp.tanh(gates * g_scale) * g_scale + g_off
        # PyTorch gate order i, f, g, o; each slice is lane-aligned (H % 128 == 0).
        i_a = act[:, 0 * H:1 * H]
        f_a = act[:, 1 * H:2 * H]
        g_a = act[:, 2 * H:3 * H]
        o_a = act[:, 3 * H:4 * H]
        c_new = f_a * c_state + i_a * g_a
        h_new = o_a * jnp.tanh(c_new)
        return h_new, c_new

    def step(j, carry):
        # ---------------- forward direction: global time t_base + j ----------
        hf = h_f[...]
        cf = c_f[...]
        h_new, c_new = lstm_cell(gf_ref[j], hf, cf, whh_f)
        m = jnp.broadcast_to(
            (lens > (t_base + j)).astype(jnp.float32), hf.shape)   # one broadcast
        h_f[...] = hf + m * (h_new - hf)
        c_f[...] = cf + m * (c_new - cf)
        out_f_ref[j] = (m * h_new).astype(out_f_ref.dtype)

        # ------------- backward direction: global time T_pad-1-(t_base+j) ----
        # stored at local index TC-1-j of the (time-reversed) backward chunk.
        jb = TC - 1 - j
        hb = h_b[...]
        cb = c_b[...]
        h_newb, c_newb = lstm_cell(gb_ref[jb], hb, cb, whh_b)
        mb = jnp.broadcast_to(
            (lens > (T_pad - 1 - (t_base + j))).astype(jnp.float32), hb.shape)
        h_b[...] = hb + mb * (h_newb - hb)
        c_b[...] = cb + mb * (c_newb - cb)
        out_b_ref[jb] = (mb * h_newb).astype(out_b_ref.dtype)
        return carry

    jax.lax.fori_loop(0, TC, step, 0, unroll=True)


def _bilstm_layer(gates_all, whh_f, whh_b, lens_col, time_chunk):
    """Run one fused bidirectional LSTM layer.

    gates_all: [T_pad, B_pad, 8*H_pad] bf16 precomputed x@W_ih + b for BOTH
               directions (first 4*H_pad columns = fwd gates, last = bwd).
    whh_f/b:   [H_pad, 4*H_pad] bf16 recurrent weights (stay in HBM; copied
               once into VMEM scratch inside the kernel).
    lens_col:  [B_pad, 1] int32 valid lengths (0 for padded batch rows).
    Returns (out_f, out_b), each [T_pad, B_pad, H_pad] bf16, zeros at padded
    timesteps / batch rows / hidden units.
    """
    T_pad, B_pad, G8 = gates_all.shape
    G4 = G8 // 2
    H_pad = G4 // 4
    TC = time_chunk
    NC = T_pad // TC

    # Explicit VMEM budget (bf16 gate/output chunk streams double-buffered,
    # single-copy weights, f32 state) with generous headroom, capped for v7x.
    need = (2 * 2 * TC * B_pad * G4 * 2        # gf/gb chunks (double-buffered)
            + 2 * 2 * TC * B_pad * H_pad * 2   # out_f/out_b chunks (double-buffered)
            + 2 * H_pad * 4 * H_pad * 2        # W_hh copies (single scratch)
            + 4 * B_pad * H_pad * 4            # h/c state scratch (f32)
            + 2 * B_pad * 4)                   # lens
    vmem_limit = int(min(64 * 2**20, max(32 * 2**20, 2 * need)))

    grid_spec = pltpu.PrefetchScalarGridSpec(
        num_scalar_prefetch=0,
        grid=(NC,),
        in_specs=[
            pl.BlockSpec((B_pad, 1), lambda c: (0, 0)),                   # lens (tiny, resident)
            pl.BlockSpec((TC, B_pad, G4), lambda c: (c, 0, 0)),           # fwd gate chunk
            pl.BlockSpec((TC, B_pad, G4), lambda c: (NC - 1 - c, 0, 1)),  # bwd gate chunk (reversed)
            pl.BlockSpec(memory_space=pl.ANY),                            # W_hh fwd (HBM)
            pl.BlockSpec(memory_space=pl.ANY),                            # W_hh bwd (HBM)
        ],
        out_specs=(
            pl.BlockSpec((TC, B_pad, H_pad), lambda c: (c, 0, 0)),           # fwd out chunk
            pl.BlockSpec((TC, B_pad, H_pad), lambda c: (NC - 1 - c, 0, 0)),  # bwd out chunk
        ),
        scratch_shapes=[
            pltpu.VMEM((H_pad, 4 * H_pad), jnp.bfloat16),   # W_hh fwd (single copy)
            pltpu.VMEM((H_pad, 4 * H_pad), jnp.bfloat16),   # W_hh bwd (single copy)
            pltpu.VMEM((B_pad, H_pad), jnp.float32),        # h_f
            pltpu.VMEM((B_pad, H_pad), jnp.float32),        # c_f
            pltpu.VMEM((B_pad, H_pad), jnp.float32),        # h_b
            pltpu.VMEM((B_pad, H_pad), jnp.float32),        # c_b
        ],
    )

    return pl.pallas_call(
        _bilstm_chunk_kernel,
        out_shape=(jax.ShapeDtypeStruct((T_pad, B_pad, H_pad), jnp.bfloat16),
                   jax.ShapeDtypeStruct((T_pad, B_pad, H_pad), jnp.bfloat16)),
        grid_spec=grid_spec,
        compiler_params=pltpu.CompilerParams(
            dimension_semantics=("arbitrary",),      # time recurrence is sequential
            vmem_limit_bytes=vmem_limit),
    )(lens_col, gates_all, gates_all, whh_f, whh_b)


# --------------------------------------------------------------------------- #
# Parameters
# --------------------------------------------------------------------------- #
def init_stackedrnns_params(key, hidden_size, embedding_size, num_layers):
    """Raw PyTorch-layout params: U(-1/sqrt(H), 1/sqrt(H)) like nn.LSTM."""
    params = []
    bound = 1.0 / math.sqrt(hidden_size)
    for layer in range(num_layers):
        e_in = embedding_size if layer == 0 else 2 * hidden_size
        lp = {}
        for d in ("f", "b"):
            key, k1, k2, k3, k4 = jax.random.split(key, 5)
            lp[f"w_ih_{d}"] = jax.random.uniform(
                k1, (4 * hidden_size, e_in), minval=-bound, maxval=bound, dtype=jnp.float32)
            lp[f"w_hh_{d}"] = jax.random.uniform(
                k2, (4 * hidden_size, hidden_size), minval=-bound, maxval=bound, dtype=jnp.float32)
            lp[f"b_ih_{d}"] = jax.random.uniform(
                k3, (4 * hidden_size,), minval=-bound, maxval=bound, dtype=jnp.float32)
            lp[f"b_hh_{d}"] = jax.random.uniform(
                k4, (4 * hidden_size,), minval=-bound, maxval=bound, dtype=jnp.float32)
        params.append(lp)
    return params


def _pad_gate_cols(w_t, H, H_pad):
    """[rows, 4H] -> [rows, 4*H_pad]: each gate's H cols placed at gate*H_pad."""
    rows = w_t.shape[0]
    w = w_t.reshape(rows, 4, H)
    w = jnp.pad(w, ((0, 0), (0, 0), (0, H_pad - H)))
    return w.reshape(rows, 4 * H_pad)


def prepare_kernel_params(raw_params, hidden_size):
    """Transpose / gate-pad / fuse-directions / cast raw params for the kernel."""
    H = hidden_size
    H_pad = _round_up(H, 128)
    prepared = []
    for i, rp in enumerate(raw_params):
        w_cols, b_cols, whh = [], [], {}
        for d in ("f", "b"):
            w_ih_t = _pad_gate_cols(rp[f"w_ih_{d}"].T, H, H_pad)      # [E_in, 4H_pad]
            if i > 0:
                # Rows: previous layer's fwd half then bwd half, each padded
                # H -> H_pad (padded rows multiply provably-zero features).
                top = jnp.pad(w_ih_t[:H], ((0, H_pad - H), (0, 0)))
                bot = jnp.pad(w_ih_t[H:], ((0, H_pad - H), (0, 0)))
                w_ih_t = jnp.concatenate([top, bot], axis=0)          # [2H_pad, 4H_pad]
            w_cols.append(w_ih_t)
            bias = rp[f"b_ih_{d}"] + rp[f"b_hh_{d}"]
            b_cols.append(_pad_gate_cols(bias.reshape(1, 4 * H), H, H_pad))
            whh_t = _pad_gate_cols(rp[f"w_hh_{d}"].T, H, H_pad)       # [H, 4H_pad]
            whh_t = jnp.pad(whh_t, ((0, H_pad - H), (0, 0)))          # [H_pad, 4H_pad]
            whh[d] = whh_t.astype(jnp.bfloat16)
        prepared.append({
            "w_all": jnp.concatenate(w_cols, axis=1).astype(jnp.bfloat16),  # [K_in, 8H_pad]
            "b_all": jnp.concatenate(b_cols, axis=1),                       # [1, 8H_pad] f32
            "whh_f": whh["f"],
            "whh_b": whh["b"],
        })
    return prepared


# --------------------------------------------------------------------------- #
# Forward pass
# --------------------------------------------------------------------------- #
def stackedrnns_forward(X, X_mask, params, *, hidden_size, num_layers,
                        time_chunk=16):
    """X: [B, T, E] float; X_mask: [B, T] bool (True = padding).

    Returns [B, T, num_layers * 2 * hidden_size] float32 (eval-mode forward).
    """
    B, T, E = X.shape
    H = hidden_size
    H_pad = _round_up(H, 128)
    B_pad = _round_up(B, 8)
    TC = time_chunk
    T_pad = _round_up(T, TC)

    lens = jnp.sum(jnp.logical_not(X_mask), axis=1).astype(jnp.int32)   # [B]
    lens_col = jnp.pad(lens, (0, B_pad - B)).reshape(B_pad, 1)          # padded rows -> len 0

    x = jnp.transpose(X.astype(jnp.float32), (1, 0, 2))                 # [T, B, E]
    x = jnp.pad(x, ((0, T_pad - T), (0, B_pad - B), (0, 0)))            # [T_pad, B_pad, E]
    layer_in = x.astype(jnp.bfloat16)

    pieces = []
    for i in range(num_layers):
        p = params[i]
        # Hoisted, fused input projection: both directions in one MXU matmul.
        g = jnp.einsum("tbe,eg->tbg", layer_in, p["w_all"],
                       preferred_element_type=jnp.float32) + p["b_all"]
        g = g.astype(jnp.bfloat16)                                      # bf16 gate stream
        out_f, out_b = _bilstm_layer(g, p["whh_f"], p["whh_b"], lens_col, TC)
        pieces.append(out_f[:T, :B, :H])
        pieces.append(out_b[:T, :B, :H])
        layer_in = jnp.concatenate([out_f, out_b], axis=-1)             # bf16 [T_pad, B_pad, 2H_pad]

    output = jnp.concatenate(pieces, axis=-1).astype(jnp.float32)       # [T, B, 2H*L]
    output = jnp.transpose(output, (1, 0, 2))                           # [B, T, 2H*L]
    # Padded timesteps are already exactly zero; output dropout is identity in eval.
    return output


# --------------------------------------------------------------------------- #
# Pure-JAX f32 reference (same packed-sequence semantics) for validation
# --------------------------------------------------------------------------- #
def _reference_forward(X, X_mask, raw_params, *, hidden_size, num_layers):
    B, T, E = X.shape
    H = hidden_size
    lens = jnp.sum(jnp.logical_not(X_mask), axis=1).astype(jnp.int32)

    def run_dir(x_tbe, w_ih, w_hh, b, reverse):
        def step(carry, inp):
            h, c = carry
            x_t, t = inp
            gates = x_t @ w_ih.T + h @ w_hh.T + b
            i = jax.nn.sigmoid(gates[:, 0 * H:1 * H])
            f = jax.nn.sigmoid(gates[:, 1 * H:2 * H])
            g = jnp.tanh(gates[:, 2 * H:3 * H])
            o = jax.nn.sigmoid(gates[:, 3 * H:4 * H])
            c_new = f * c + i * g
            h_new = o * jnp.tanh(c_new)
            valid = (t < lens)[:, None]
            return ((jnp.where(valid, h_new, h), jnp.where(valid, c_new, c)),
                    jnp.where(valid, h_new, 0.0))
        ts = jnp.arange(T)
        xs = (x_tbe[::-1], ts[::-1]) if reverse else (x_tbe, ts)
        init = (jnp.zeros((B, H), jnp.float32), jnp.zeros((B, H), jnp.float32))
        _, outs = jax.lax.scan(step, init, xs)
        return outs[::-1] if reverse else outs

    layer_in = jnp.transpose(X.astype(jnp.float32), (1, 0, 2))
    outs_all = []
    for i in range(num_layers):
        rp = raw_params[i]
        of = run_dir(layer_in, rp["w_ih_f"], rp["w_hh_f"], rp["b_ih_f"] + rp["b_hh_f"], False)
        ob = run_dir(layer_in, rp["w_ih_b"], rp["w_hh_b"], rp["b_ih_b"] + rp["b_hh_b"], True)
        out = jnp.concatenate([of, ob], axis=-1)
        outs_all.append(out)
        layer_in = out
    return jnp.transpose(jnp.concatenate(outs_all, axis=-1), (1, 0, 2))


if __name__ == "__main__":
    B, T, E, H, L = 2, 10, 32, 32, 2
    TC = 4                                   # time chunk (T not a multiple -> exercises padding)

    key = jax.random.PRNGKey(0)
    k_param, k_x = jax.random.split(key)

    raw_params = init_stackedrnns_params(k_param, H, E, L)
    kparams = prepare_kernel_params(raw_params, H)

    X = jax.random.normal(k_x, (B, T, E), dtype=jnp.float32)
    lengths = jnp.array([10, 6], dtype=jnp.int32)                # per-sequence valid lengths
    X_mask = jnp.arange(T)[None, :] >= lengths[:, None]          # True = padding

    fwd = jax.jit(functools.partial(stackedrnns_forward, hidden_size=H,
                                    num_layers=L, time_chunk=TC))
    out = jax.block_until_ready(fwd(X, X_mask, kparams))

    assert out.shape == (B, T, L * 2 * H), out.shape
    # Packed-sequence semantics: padded timesteps must be exactly zero.
    assert bool(jnp.all(out[1, 6:, :] == 0.0))
    assert bool(jnp.all(jnp.isfinite(out)))

    # Numerical check vs pure-f32 JAX reference (kernel uses bf16 matmul inputs
    # and bf16 gate/output streams).
    ref = _reference_forward(X, X_mask, raw_params, hidden_size=H, num_layers=L)
    max_err = float(jnp.max(jnp.abs(out - ref)))
    assert max_err < 5e-2, max_err

    print("KERNEL_OK")
</pallas_src>

<mosaic_0001>
module attributes {stable_mosaic.version = 11 : i64} {
  func.func @_bilstm_chunk_kernel(%arg0: i32, %arg1: memref<8x1xi32, #tpu.memory_space<vmem>>, %arg2: memref<4x8x512xbf16, #tpu.memory_space<vmem>>, %arg3: memref<4x8x512xbf16, #tpu.memory_space<vmem>>, %arg4: memref<128x512xbf16, #tpu.memory_space<any>>, %arg5: memref<128x512xbf16, #tpu.memory_space<any>>, %arg6: memref<4x8x128xbf16, #tpu.memory_space<vmem>>, %arg7: memref<4x8x128xbf16, #tpu.memory_space<vmem>>, %arg8: memref<128x512xbf16, #tpu.memory_space<vmem>>, %arg9: memref<128x512xbf16, #tpu.memory_space<vmem>>, %arg10: memref<8x128xf32, #tpu.memory_space<vmem>>, %arg11: memref<8x128xf32, #tpu.memory_space<vmem>>, %arg12: memref<8x128xf32, #tpu.memory_space<vmem>>, %arg13: memref<8x128xf32, #tpu.memory_space<vmem>>) attributes {dimension_semantics = [#tpu.dimension_semantics<arbitrary>], iteration_bounds = array<i64: 3>, scalar_prefetch = 0 : i64, scratch_operands = 6 : i64, tpu.core_type = #tpu.core_type<tc>, window_params = [{pipeline_mode = #tpu.pipeline_mode<synchronous>, transform_indices = @transform_0, window_bounds = array<i64: 8, 1>}, {transform_indices = @transform_1, window_bounds = array<i64: 4, 8, 512>}, {transform_indices = @transform_2, window_bounds = array<i64: 4, 8, 512>}, {}, {}, {transform_indices = @transform_5, window_bounds = array<i64: 4, 8, 128>}, {transform_indices = @transform_6, window_bounds = array<i64: 4, 8, 128>}]} {
    %c0_i32 = arith.constant 0 : i32
    %0 = arith.cmpi eq, %arg0, %c0_i32 : i32
    %1 = arith.extui %0 : i1 to i32
    %c0_i32_0 = arith.constant 0 : i32
    %2 = arith.cmpi ne, %1, %c0_i32_0 : i32
    scf.if %2 {
      "tpu.region"() ({
        %385 = tpu.sem_alloc : memref<!tpu.dma_semaphore, #tpu.memory_space<semaphore_mem>>
        tpu.enqueue_dma source(%arg4 : memref<128x512xbf16, #tpu.memory_space<any>>) target(%arg8 : memref<128x512xbf16, #tpu.memory_space<vmem>>) target_semaphore(%385 : memref<!tpu.dma_semaphore, #tpu.memory_space<semaphore_mem>>)
        tpu.wait_dma2 semaphore(%385 : memref<!tpu.dma_semaphore, #tpu.memory_space<semaphore_mem>>) src(%arg4 : memref<128x512xbf16, #tpu.memory_space<any>>) dst(%arg8 : memref<128x512xbf16, #tpu.memory_space<vmem>>)
        tpu.yield
      }) : () -> ()
      "tpu.region"() ({
        %385 = tpu.sem_alloc : memref<!tpu.dma_semaphore, #tpu.memory_space<semaphore_mem>>
        tpu.enqueue_dma source(%arg5 : memref<128x512xbf16, #tpu.memory_space<any>>) target(%arg9 : memref<128x512xbf16, #tpu.memory_space<vmem>>) target_semaphore(%385 : memref<!tpu.dma_semaphore, #tpu.memory_space<semaphore_mem>>)
        tpu.wait_dma2 semaphore(%385 : memref<!tpu.dma_semaphore, #tpu.memory_space<semaphore_mem>>) src(%arg5 : memref<128x512xbf16, #tpu.memory_space<any>>) dst(%arg9 : memref<128x512xbf16, #tpu.memory_space<vmem>>)
        tpu.yield
      }) : () -> ()
      %cst_134 = arith.constant 0.000000e+00 : f32
      %377 = vector.broadcast %cst_134 : f32 to vector<8x128xf32>
      %c0_135 = arith.constant 0 : index
      %c0_136 = arith.constant 0 : index
      %378 = vector.load %arg10[%c0_135, %c0_136] : memref<8x128xf32, #tpu.memory_space<vmem>>, vector<8x128xf32>
      tpu.vector_store %arg10[%c0_135, %c0_136], %377 {strides = array<i32>} : memref<8x128xf32, #tpu.memory_space<vmem>>, vector<8x128xf32>,
      %cst_137 = arith.constant 0.000000e+00 : f32
      %379 = vector.broadcast %cst_137 : f32 to vector<8x128xf32>
      %c0_138 = arith.constant 0 : index
      %c0_139 = arith.constant 0 : index
      %380 = vector.load %arg11[%c0_138, %c0_139] : memref<8x128xf32, #tpu.memory_space<vmem>>, vector<8x128xf32>
      tpu.vector_store %arg11[%c0_138, %c0_139], %379 {strides = array<i32>} : memref<8x128xf32, #tpu.memory_space<vmem>>, vector<8x128xf32>,
      %cst_140 = arith.constant 0.000000e+00 : f32
      %381 = vector.broadcast %cst_140 : f32 to vector<8x128xf32>
      %c0_141 = arith.constant 0 : index
      %c0_142 = arith.constant 0 : index
      %382 = vector.load %arg12[%c0_141, %c0_142] : memref<8x128xf32, #tpu.memory_space<vmem>>, vector<8x128xf32>
      tpu.vector_store %arg12[%c0_141, %c0_142], %381 {strides = array<i32>} : memref<8x128xf32, #tpu.memory_space<vmem>>, vector<8x128xf32>,
      %cst_143 = arith.constant 0.000000e+00 : f32
      %383 = vector.broadcast %cst_143 : f32 to vector<8x128xf32>
      %c0_144 = arith.constant 0 : index
      %c0_145 = arith.constant 0 : index
      %384 = vector.load %arg13[%c0_144, %c0_145] : memref<8x128xf32, #tpu.memory_space<vmem>>, vector<8x128xf32>
      tpu.vector_store %arg13[%c0_144, %c0_145], %383 {strides = array<i32>} : memref<8x128xf32, #tpu.memory_space<vmem>>, vector<8x128xf32>,
    } else {
    }
    %c0 = arith.constant 0 : index
    %c0_1 = arith.constant 0 : index
    %3 = vector.load %arg1[%c0, %c0_1] : memref<8x1xi32, #tpu.memory_space<vmem>>, vector<8x1xi32>
    %4 = tpu.iota {dimensions = array<i32: 1>} : vector<8x512xi32>
    %c256_i32 = arith.constant 256 : i32
    %5 = vector.broadcast %c256_i32 : i32 to vector<8x512xi32>
    %6 = arith.cmpi sge, %4, %5 : vector<8x512xi32>
    %c384_i32 = arith.constant 384 : i32
    %7 = vector.broadcast %c384_i32 : i32 to vector<8x512xi32>
    %8 = arith.cmpi slt, %4, %7 : vector<8x512xi32>
    %9 = arith.andi %6, %8 : vector<8x512xi1>
    %cst = arith.constant 1.000000e+00 : f32
    %cst_2 = arith.constant 5.000000e-01 : f32
    %10 = vector.broadcast %cst : f32 to vector<8x512xf32>
    %11 = vector.broadcast %cst_2 : f32 to vector<8x512xf32>
    %12 = arith.select %9, %10, %11 : vector<8x512xi1>, vector<8x512xf32>
    %cst_3 = arith.constant 0.000000e+00 : f32
    %cst_4 = arith.constant 5.000000e-01 : f32
    %13 = vector.broadcast %cst_3 : f32 to vector<8x512xf32>
    %14 = vector.broadcast %cst_4 : f32 to vector<8x512xf32>
    %15 = arith.select %9, %13, %14 : vector<8x512xi1>, vector<8x512xf32>
    %c4_i32 = arith.constant 4 : i32
    %16 = arith.muli %arg0, %c4_i32 : i32
    %c0_i32_5 = arith.constant 0 : i32
    %c0_6 = arith.constant 0 : index
    %c0_7 = arith.constant 0 : index
    %17 = vector.load %arg10[%c0_6, %c0_7] : memref<8x128xf32, #tpu.memory_space<vmem>>, vector<8x128xf32>
    %c0_8 = arith.constant 0 : index
    %c0_9 = arith.constant 0 : index
    %18 = vector.load %arg11[%c0_8, %c0_9] : memref<8x128xf32, #tpu.memory_space<vmem>>, vector<8x128xf32>
    %19 = arith.index_cast %c0_i32_5 : i32 to index
    %c0_10 = arith.constant 0 : index
    %c0_11 = arith.constant 0 : index
    %20 = vector.load %arg2[%19, %c0_10, %c0_11] : memref<4x8x512xbf16, #tpu.memory_space<vmem>>, vector<1x8x512xbf16>
    %21 = vector.shape_cast %20 : vector<1x8x512xbf16> to vector<8x512xbf16>
    %22 = arith.extf %21 : vector<8x512xbf16> to vector<8x512xf32>
    %23 = arith.truncf %17 : vector<8x128xf32> to vector<8x128xbf16>
    %c0_12 = arith.constant 0 : index
    %c0_13 = arith.constant 0 : index
    %24 = vector.load %arg8[%c0_12, %c0_13] : memref<128x512xbf16, #tpu.memory_space<vmem>>, vector<128x512xbf16>
    %cst_14 = arith.constant dense<0.000000e+00> : vector<8x512xf32>
    %25 = tpu.matmul %23, %24, %cst_14 {dimension_numbers = #tpu.dot_dimension_numbers<[1], [0], [0], [1], [0, 0, 1, 1], [], []>} : vector<8x128xbf16>, vector<128x512xbf16>, vector<8x512xf32> -> vector<8x512xf32>
    %26 = arith.addf %22, %25 : vector<8x512xf32>
    %27 = arith.mulf %26, %12 : vector<8x512xf32>
    %28 = math.tanh %27 : vector<8x512xf32>
    %29 = arith.mulf %28, %12 : vector<8x512xf32>
    %30 = arith.addf %29, %15 : vector<8x512xf32>
    %31 = vector.extract_strided_slice %30 {offsets = [0, 0], sizes = [8, 128], strides = [1, 1]} : vector<8x512xf32> to vector<8x128xf32>
    %32 = vector.extract_strided_slice %30 {offsets = [0, 128], sizes = [8, 128], strides = [1, 1]} : vector<8x512xf32> to vector<8x128xf32>
    %33 = vector.extract_strided_slice %30 {offsets = [0, 256], sizes = [8, 128], strides = [1, 1]} : vector<8x512xf32> to vector<8x128xf32>
    %34 = vector.extract_strided_slice %30 {offsets = [0, 384], sizes = [8, 128], strides = [1, 1]} : vector<8x512xf32> to vector<8x128xf32>
    %35 = arith.mulf %32, %18 : vector<8x128xf32>
    %36 = arith.mulf %31, %33 : vector<8x128xf32>
    %37 = arith.addf %35, %36 : vector<8x128xf32>
    %38 = math.tanh %37 : vector<8x128xf32>
    %39 = arith.mulf %34, %38 : vector<8x128xf32>
    %40 = arith.addi %16, %c0_i32_5 : i32
    %41 = vector.broadcast %40 : i32 to vector<8x1xi32>
    %42 = arith.cmpi sgt, %3, %41 : vector<8x1xi32>
    %43 = arith.extui %42 : vector<8x1xi1> to vector<8x1xi32>
    %44 = arith.sitofp %43 : vector<8x1xi32> to vector<8x1xf32>
    %45 = vector.shape_cast %44 : vector<8x1xf32> to vector<8x1xf32>
    %46 = vector.broadcast %45 : vector<8x1xf32> to vector<8x128xf32>
    %47 = arith.subf %39, %17 : vector<8x128xf32>
    %48 = arith.mulf %46, %47 : vector<8x128xf32>
    %49 = arith.addf %17, %48 : vector<8x128xf32>
    %c0_15 = arith.constant 0 : index
    %c0_16 = arith.constant 0 : index
    %50 = vector.load %arg10[%c0_15, %c0_16] : memref<8x128xf32, #tpu.memory_space<vmem>>, vector<8x128xf32>
    tpu.vector_store %arg10[%c0_15, %c0_16], %49 {strides = array<i32>} : memref<8x128xf32, #tpu.memory_space<vmem>>, vector<8x128xf32>,
    %51 = arith.subf %37, %18 : vector<8x128xf32>
    %52 = arith.mulf %46, %51 : vector<8x128xf32>
    %53 = arith.addf %18, %52 : vector<8x128xf32>
    %c0_17 = arith.constant 0 : index
    %c0_18 = arith.constant 0 : index
    %54 = vector.load %arg11[%c0_17, %c0_18] : memref<8x128xf32, #tpu.memory_space<vmem>>, vector<8x128xf32>
    tpu.vector_store %arg11[%c0_17, %c0_18], %53 {strides = array<i32>} : memref<8x128xf32, #tpu.memory_space<vmem>>, vector<8x128xf32>,
    %55 = arith.mulf %46, %39 : vector<8x128xf32>
    %56 = arith.truncf %55 : vector<8x128xf32> to vector<8x128xbf16>
    %57 = arith.index_cast %c0_i32_5 : i32 to index
    %c0_19 = arith.constant 0 : index
    %c0_20 = arith.constant 0 : index
    %58 = vector.load %arg6[%57, %c0_19, %c0_20] : memref<4x8x128xbf16, #tpu.memory_space<vmem>>, vector<1x8x128xbf16>
    %59 = vector.shape_cast %58 : vector<1x8x128xbf16> to vector<8x128xbf16>
    %60 = vector.shape_cast %56 : vector<8x128xbf16> to vector<1x8x128xbf16>
    tpu.vector_store %arg6[%57, %c0_19, %c0_20], %60 {strides = array<i32>} : memref<4x8x128xbf16, #tpu.memory_space<vmem>>, vector<1x8x128xbf16>,
    %c3_i32 = arith.constant 3 : i32
    %61 = arith.subi %c3_i32, %c0_i32_5 : i32
    %c0_21 = arith.constant 0 : index
    %c0_22 = arith.constant 0 : index
    %62 = vector.load %arg12[%c0_21, %c0_22] : memref<8x128xf32, #tpu.memory_space<vmem>>, vector<8x128xf32>
    %c0_23 = arith.constant 0 : index
    %c0_24 = arith.constant 0 : index
    %63 = vector.load %arg13[%c0_23, %c0_24] : memref<8x128xf32, #tpu.memory_space<vmem>>, vector<8x128xf32>
    %64 = arith.index_cast %61 : i32 to index
    %c0_25 = arith.constant 0 : index
    %c0_26 = arith.constant 0 : index
    %65 = vector.load %arg3[%64, %c0_25, %c0_26] : memref<4x8x512xbf16, #tpu.memory_space<vmem>>, vector<1x8x512xbf16>
    %66 = vector.shape_cast %65 : vector<1x8x512xbf16> to vector<8x512xbf16>
    %67 = arith.extf %66 : vector<8x512xbf16> to vector<8x512xf32>
    %68 = arith.truncf %62 : vector<8x128xf32> to vector<8x128xbf16>
    %c0_27 = arith.constant 0 : index
    %c0_28 = arith.constant 0 : index
    %69 = vector.load %arg9[%c0_27, %c0_28] : memref<128x512xbf16, #tpu.memory_space<vmem>>, vector<128x512xbf16>
    %cst_29 = arith.constant dense<0.000000e+00> : vector<8x512xf32>
    %70 = tpu.matmul %68, %69, %cst_29 {dimension_numbers = #tpu.dot_dimension_numbers<[1], [0], [0], [1], [0, 0, 1, 1], [], []>} : vector<8x128xbf16>, vector<128x512xbf16>, vector<8x512xf32> -> vector<8x512xf32>
    %71 = arith.addf %67, %70 : vector<8x512xf32>
    %72 = arith.mulf %71, %12 : vector<8x512xf32>
    %73 = math.tanh %72 : vector<8x512xf32>
    %74 = arith.mulf %73, %12 : vector<8x512xf32>
    %75 = arith.addf %74, %15 : vector<8x512xf32>
    %76 = vector.extract_strided_slice %75 {offsets = [0, 0], sizes = [8, 128], strides = [1, 1]} : vector<8x512xf32> to vector<8x128xf32>
    %77 = vector.extract_strided_slice %75 {offsets = [0, 128], sizes = [8, 128], strides = [1, 1]} : vector<8x512xf32> to vector<8x128xf32>
    %78 = vector.extract_strided_slice %75 {offsets = [0, 256], sizes = [8, 128], strides = [1, 1]} : vector<8x512xf32> to vector<8x128xf32>
    %79 = vector.extract_strided_slice %75 {offsets = [0, 384], sizes = [8, 128], strides = [1, 1]} : vector<8x512xf32> to vector<8x128xf32>
    %80 = arith.mulf %77, %63 : vector<8x128xf32>
    %81 = arith.mulf %76, %78 : vector<8x128xf32>
    %82 = arith.addf %80, %81 : vector<8x128xf32>
    %83 = math.tanh %82 : vector<8x128xf32>
    %84 = arith.mulf %79, %83 : vector<8x128xf32>
    %85 = arith.addi %16, %c0_i32_5 : i32
    %c11_i32 = arith.constant 11 : i32
    %86 = arith.subi %c11_i32, %85 : i32
    %87 = vector.broadcast %86 : i32 to vector<8x1xi32>
    %88 = arith.cmpi sgt, %3, %87 : vector<8x1xi32>
    %89 = arith.extui %88 : vector<8x1xi1> to vector<8x1xi32>
    %90 = arith.sitofp %89 : vector<8x1xi32> to vector<8x1xf32>
    %91 = vector.shape_cast %90 : vector<8x1xf32> to vector<8x1xf32>
    %92 = vector.broadcast %91 : vector<8x1xf32> to vector<8x128xf32>
    %93 = arith.subf %84, %62 : vector<8x128xf32>
    %94 = arith.mulf %92, %93 : vector<8x128xf32>
    %95 = arith.addf %62, %94 : vector<8x128xf32>
    %c0_30 = arith.constant 0 : index
    %c0_31 = arith.constant 0 : index
    %96 = vector.load %arg12[%c0_30, %c0_31] : memref<8x128xf32, #tpu.memory_space<vmem>>, vector<8x128xf32>
    tpu.vector_store %arg12[%c0_30, %c0_31], %95 {strides = array<i32>} : memref<8x128xf32, #tpu.memory_space<vmem>>, vector<8x128xf32>,
    %97 = arith.subf %82, %63 : vector<8x128xf32>
    %98 = arith.mulf %92, %97 : vector<8x128xf32>
    %99 = arith.addf %63, %98 : vector<8x128xf32>
    %c0_32 = arith.constant 0 : index
    %c0_33 = arith.constant 0 : index
    %100 = vector.load %arg13[%c0_32, %c0_33] : memref<8x128xf32, #tpu.memory_space<vmem>>, vector<8x128xf32>
    tpu.vector_store %arg13[%c0_32, %c0_33], %99 {strides = array<i32>} : memref<8x128xf32, #tpu.memory_space<vmem>>, vector<8x128xf32>,
    %101 = arith.mulf %92, %84 : vector<8x128xf32>
    %102 = arith.truncf %101 : vector<8x128xf32> to vector<8x128xbf16>
    %103 = arith.index_cast %61 : i32 to index
    %c0_34 = arith.constant 0 : index
    %c0_35 = arith.constant 0 : index
    %104 = vector.load %arg7[%103, %c0_34, %c0_35] : memref<4x8x128xbf16, #tpu.memory_space<vmem>>, vector<1x8x128xbf16>
    %105 = vector.shape_cast %104 : vector<1x8x128xbf16> to vector<8x128xbf16>
    %106 = vector.shape_cast %102 : vector<8x128xbf16> to vector<1x8x128xbf16>
    tpu.vector_store %arg7[%103, %c0_34, %c0_35], %106 {strides = array<i32>} : memref<4x8x128xbf16, #tpu.memory_space<vmem>>, vector<1x8x128xbf16>,
    %c1_i32 = arith.constant 1 : i32
    %c0_36 = arith.constant 0 : index
    %c0_37 = arith.constant 0 : index
    %107 = vector.load %arg10[%c0_36, %c0_37] : memref<8x128xf32, #tpu.memory_space<vmem>>, vector<8x128xf32>
    %c0_38 = arith.constant 0 : index
    %c0_39 = arith.constant 0 : index
    %108 = vector.load %arg11[%c0_38, %c0_39] : memref<8x128xf32, #tpu.memory_space<vmem>>, vector<8x128xf32>
    %109 = arith.index_cast %c1_i32 : i32 to index
    %c0_40 = arith.constant 0 : index
    %c0_41 = arith.constant 0 : index
    %110 = vector.load %arg2[%109, %c0_40, %c0_41] : memref<4x8x512xbf16, #tpu.memory_space<vmem>>, vector<1x8x512xbf16>
    %111 = vector.shape_cast %110 : vector<1x8x512xbf16> to vector<8x512xbf16>
    %112 = arith.extf %111 : vector<8x512xbf16> to vector<8x512xf32>
    %113 = arith.truncf %107 : vector<8x128xf32> to vector<8x128xbf16>
    %c0_42 = arith.constant 0 : index
    %c0_43 = arith.constant 0 : index
    %114 = vector.load %arg8[%c0_42, %c0_43] : memref<128x512xbf16, #tpu.memory_space<vmem>>, vector<128x512xbf16>
    %cst_44 = arith.constant dense<0.000000e+00> : vector<8x512xf32>
    %115 = tpu.matmul %113, %114, %cst_44 {dimension_numbers = #tpu.dot_dimension_numbers<[1], [0], [0], [1], [0, 0, 1, 1], [], []>} : vector<8x128xbf16>, vector<128x512xbf16>, vector<8x512xf32> -> vector<8x512xf32>
    %116 = arith.addf %112, %115 : vector<8x512xf32>
    %117 = arith.mulf %116, %12 : vector<8x512xf32>
    %118 = math.tanh %117 : vector<8x512xf32>
    %119 = arith.mulf %118, %12 : vector<8x512xf32>
    %120 = arith.addf %119, %15 : vector<8x512xf32>
    %121 = vector.extract_strided_slice %120 {offsets = [0, 0], sizes = [8, 128], strides = [1, 1]} : vector<8x512xf32> to vector<8x128xf32>
    %122 = vector.extract_strided_slice %120 {offsets = [0, 128], sizes = [8, 128], strides = [1, 1]} : vector<8x512xf32> to vector<8x128xf32>
    %123 = vector.extract_strided_slice %120 {offsets = [0, 256], sizes = [8, 128], strides = [1, 1]} : vector<8x512xf32> to vector<8x128xf32>
    %124 = vector.extract_strided_slice %120 {offsets = [0, 384], sizes = [8, 128], strides = [1, 1]} : vector<8x512xf32> to vector<8x128xf32>
    %125 = arith.mulf %122, %108 : vector<8x128xf32>
    %126 = arith.mulf %121, %123 : vector<8x128xf32>
    %127 = arith.addf %125, %126 : vector<8x128xf32>
    %128 = math.tanh %127 : vector<8x128xf32>
    %129 = arith.mulf %124, %128 : vector<8x128xf32>
    %130 = arith.addi %16, %c1_i32 : i32
    %131 = vector.broadcast %130 : i32 to vector<8x1xi32>
    %132 = arith.cmpi sgt, %3, %131 : vector<8x1xi32>
    %133 = arith.extui %132 : vector<8x1xi1> to vector<8x1xi32>
    %134 = arith.sitofp %133 : vector<8x1xi32> to vector<8x1xf32>
    %135 = vector.shape_cast %134 : vector<8x1xf32> to vector<8x1xf32>
    %136 = vector.broadcast %135 : vector<8x1xf32> to vector<8x128xf32>
    %137 = arith.subf %129, %107 : vector<8x128xf32>
    %138 = arith.mulf %136, %137 : vector<8x128xf32>
    %139 = arith.addf %107, %138 : vector<8x128xf32>
    %c0_45 = arith.constant 0 : index
    %c0_46 = arith.constant 0 : index
    %140 = vector.load %arg10[%c0_45, %c0_46] : memref<8x128xf32, #tpu.memory_space<vmem>>, vector<8x128xf32>
    tpu.vector_store %arg10[%c0_45, %c0_46], %139 {strides = array<i32>} : memref<8x128xf32, #tpu.memory_space<vmem>>, vector<8x128xf32>,
    %141 = arith.subf %127, %108 : vector<8x128xf32>
    %142 = arith.mulf %136, %141 : vector<8x128xf32>
    %143 = arith.addf %108, %142 : vector<8x128xf32>
    %c0_47 = arith.constant 0 : index
    %c0_48 = arith.constant 0 : index
    %144 = vector.load %arg11[%c0_47, %c0_48] : memref<8x128xf32, #tpu.memory_space<vmem>>, vector<8x128xf32>
    tpu.vector_store %arg11[%c0_47, %c0_48], %143 {strides = array<i32>} : memref<8x128xf32, #tpu.memory_space<vmem>>, vector<8x128xf32>,
    %145 = arith.mulf %136, %129 : vector<8x128xf32>
    %146 = arith.truncf %145 : vector<8x128xf32> to vector<8x128xbf16>
    %147 = arith.index_cast %c1_i32 : i32 to index
    %c0_49 = arith.constant 0 : index
    %c0_50 = arith.constant 0 : index
    %148 = vector.load %arg6[%147, %c0_49, %c0_50] : memref<4x8x128xbf16, #tpu.memory_space<vmem>>, vector<1x8x128xbf16>
    %149 = vector.shape_cast %148 : vector<1x8x128xbf16> to vector<8x128xbf16>
    %150 = vector.shape_cast %146 : vector<8x128xbf16> to vector<1x8x128xbf16>
    tpu.vector_store %arg6[%147, %c0_49, %c0_50], %150 {strides = array<i32>} : memref<4x8x128xbf16, #tpu.memory_space<vmem>>, vector<1x8x128xbf16>,
    %c3_i32_51 = arith.constant 3 : i32
    %151 = arith.subi %c3_i32_51, %c1_i32 : i32
    %c0_52 = arith.constant 0 : index
    %c0_53 = arith.constant 0 : index
    %152 = vector.load %arg12[%c0_52, %c0_53] : memref<8x128xf32, #tpu.memory_space<vmem>>, vector<8x128xf32>
    %c0_54 = arith.constant 0 : index
    %c0_55 = arith.constant 0 : index
    %153 = vector.load %arg13[%c0_54, %c0_55] : memref<8x128xf32, #tpu.memory_space<vmem>>, vector<8x128xf32>
    %154 = arith.index_cast %151 : i32 to index
    %c0_56 = arith.constant 0 : index
    %c0_57 = arith.constant 0 : index
    %155 = vector.load %arg3[%154, %c0_56, %c0_57] : memref<4x8x512xbf16, #tpu.memory_space<vmem>>, vector<1x8x512xbf16>
    %156 = vector.shape_cast %155 : vector<1x8x512xbf16> to vector<8x512xbf16>
    %157 = arith.extf %156 : vector<8x512xbf16> to vector<8x512xf32>
    %158 = arith.truncf %152 : vector<8x128xf32> to vector<8x128xbf16>
    %c0_58 = arith.constant 0 : index
    %c0_59 = arith.constant 0 : index
    %159 = vector.load %arg9[%c0_58, %c0_59] : memref<128x512xbf16, #tpu.memory_space<vmem>>, vector<128x512xbf16>
    %cst_60 = arith.constant dense<0.000000e+00> : vector<8x512xf32>
    %160 = tpu.matmul %158, %159, %cst_60 {dimension_numbers = #tpu.dot_dimension_numbers<[1], [0], [0], [1], [0, 0, 1, 1], [], []>} : vector<8x128xbf16>, vector<128x512xbf16>, vector<8x512xf32> -> vector<8x512xf32>
    %161 = arith.addf %157, %160 : vector<8x512xf32>
    %162 = arith.mulf %161, %12 : vector<8x512xf32>
    %163 = math.tanh %162 : vector<8x512xf32>
    %164 = arith.mulf %163, %12 : vector<8x512xf32>
    %165 = arith.addf %164, %15 : vector<8x512xf32>
    %166 = vector.extract_strided_slice %165 {offsets = [0, 0], sizes = [8, 128], strides = [1, 1]} : vector<8x512xf32> to vector<8x128xf32>
    %167 = vector.extract_strided_slice %165 {offsets = [0, 128], sizes = [8, 128], strides = [1, 1]} : vector<8x512xf32> to vector<8x128xf32>
    %168 = vector.extract_strided_slice %165 {offsets = [0, 256], sizes = [8, 128], strides = [1, 1]} : vector<8x512xf32> to vector<8x128xf32>
    %169 = vector.extract_strided_slice %165 {offsets = [0, 384], sizes = [8, 128], strides = [1, 1]} : vector<8x512xf32> to vector<8x128xf32>
    %170 = arith.mulf %167, %153 : vector<8x128xf32>
    %171 = arith.mulf %166, %168 : vector<8x128xf32>
    %172 = arith.addf %170, %171 : vector<8x128xf32>
    %173 = math.tanh %172 : vector<8x128xf32>
    %174 = arith.mulf %169, %173 : vector<8x128xf32>
    %175 = arith.addi %16, %c1_i32 : i32
    %c11_i32_61 = arith.constant 11 : i32
    %176 = arith.subi %c11_i32_61, %175 : i32
    %177 = vector.broadcast %176 : i32 to vector<8x1xi32>
    %178 = arith.cmpi sgt, %3, %177 : vector<8x1xi32>
    %179 = arith.extui %178 : vector<8x1xi1> to vector<8x1xi32>
    %180 = arith.sitofp %179 : vector<8x1xi32> to vector<8x1xf32>
    %181 = vector.shape_cast %180 : vector<8x1xf32> to vector<8x1xf32>
    %182 = vector.broadcast %181 : vector<8x1xf32> to vector<8x128xf32>
    %183 = arith.subf %174, %152 : vector<8x128xf32>
    %184 = arith.mulf %182, %183 : vector<8x128xf32>
    %185 = arith.addf %152, %184 : vector<8x128xf32>
    %c0_62 = arith.constant 0 : index
    %c0_63 = arith.constant 0 : index
    %186 = vector.load %arg12[%c0_62, %c0_63] : memref<8x128xf32, #tpu.memory_space<vmem>>, vector<8x128xf32>
    tpu.vector_store %arg12[%c0_62, %c0_63], %185 {strides = array<i32>} : memref<8x128xf32, #tpu.memory_space<vmem>>, vector<8x128xf32>,
    %187 = arith.subf %172, %153 : vector<8x128xf32>
    %188 = arith.mulf %182, %187 : vector<8x128xf32>
    %189 = arith.addf %153, %188 : vector<8x128xf32>
    %c0_64 = arith.constant 0 : index
    %c0_65 = arith.constant 0 : index
    %190 = vector.load %arg13[%c0_64, %c0_65] : memref<8x128xf32, #tpu.memory_space<vmem>>, vector<8x128xf32>
    tpu.vector_store %arg13[%c0_64, %c0_65], %189 {strides = array<i32>} : memref<8x128xf32, #tpu.memory_space<vmem>>, vector<8x128xf32>,
    %191 = arith.mulf %182, %174 : vector<8x128xf32>
    %192 = arith.truncf %191 : vector<8x128xf32> to vector<8x128xbf16>
    %193 = arith.index_cast %151 : i32 to index
    %c0_66 = arith.constant 0 : index
    %c0_67 = arith.constant 0 : index
    %194 = vector.load %arg7[%193, %c0_66, %c0_67] : memref<4x8x128xbf16, #tpu.memory_space<vmem>>, vector<1x8x128xbf16>
    %195 = vector.shape_cast %194 : vector<1x8x128xbf16> to vector<8x128xbf16>
    %196 = vector.shape_cast %192 : vector<8x128xbf16> to vector<1x8x128xbf16>
    tpu.vector_store %arg7[%193, %c0_66, %c0_67], %196 {strides = array<i32>} : memref<4x8x128xbf16, #tpu.memory_space<vmem>>, vector<1x8x128xbf16>,
    %c2_i32 = arith.constant 2 : i32
    %c0_68 = arith.constant 0 : index
    %c0_69 = arith.constant 0 : index
    %197 = vector.load %arg10[%c0_68, %c0_69] : memref<8x128xf32, #tpu.memory_space<vmem>>, vector<8x128xf32>
    %c0_70 = arith.constant 0 : index
    %c0_71 = arith.constant 0 : index
    %198 = vector.load %arg11[%c0_70, %c0_71] : memref<8x128xf32, #tpu.memory_space<vmem>>, vector<8x128xf32>
    %199 = arith.index_cast %c2_i32 : i32 to index
    %c0_72 = arith.constant 0 : index
    %c0_73 = arith.constant 0 : index
    %200 = vector.load %arg2[%199, %c0_72, %c0_73] : memref<4x8x512xbf16, #tpu.memory_space<vmem>>, vector<1x8x512xbf16>
    %201 = vector.shape_cast %200 : vector<1x8x512xbf16> to vector<8x512xbf16>
    %202 = arith.extf %201 : vector<8x512xbf16> to vector<8x512xf32>
    %203 = arith.truncf %197 : vector<8x128xf32> to vector<8x128xbf16>
    %c0_74 = arith.constant 0 : index
    %c0_75 = arith.constant 0 : index
    %204 = vector.load %arg8[%c0_74, %c0_75] : memref<128x512xbf16, #tpu.memory_space<vmem>>, vector<128x512xbf16>
    %cst_76 = arith.constant dense<0.000000e+00> : vector<8x512xf32>
    %205 = tpu.matmul %203, %204, %cst_76 {dimension_numbers = #tpu.dot_dimension_numbers<[1], [0], [0], [1], [0, 0, 1, 1], [], []>} : vector<8x128xbf16>, vector<128x512xbf16>, vector<8x512xf32> -> vector<8x512xf32>
    %206 = arith.addf %202, %205 : vector<8x512xf32>
    %207 = arith.mulf %206, %12 : vector<8x512xf32>
    %208 = math.tanh %207 : vector<8x512xf32>
    %209 = arith.mulf %208, %12 : vector<8x512xf32>
    %210 = arith.addf %209, %15 : vector<8x512xf32>
    %211 = vector.extract_strided_slice %210 {offsets = [0, 0], sizes = [8, 128], strides = [1, 1]} : vector<8x512xf32> to vector<8x128xf32>
    %212 = vector.extract_strided_slice %210 {offsets = [0, 128], sizes = [8, 128], strides = [1, 1]} : vector<8x512xf32> to vector<8x128xf32>
    %213 = vector.extract_strided_slice %210 {offsets = [0, 256], sizes = [8, 128], strides = [1, 1]} : vector<8x512xf32> to vector<8x128xf32>
    %214 = vector.extract_strided_slice %210 {offsets = [0, 384], sizes = [8, 128], strides = [1, 1]} : vector<8x512xf32> to vector<8x128xf32>
    %215 = arith.mulf %212, %198 : vector<8x128xf32>
    %216 = arith.mulf %211, %213 : vector<8x128xf32>
    %217 = arith.addf %215, %216 : vector<8x128xf32>
    %218 = math.tanh %217 : vector<8x128xf32>
    %219 = arith.mulf %214, %218 : vector<8x128xf32>
    %220 = arith.addi %16, %c2_i32 : i32
    %221 = vector.broadcast %220 : i32 to vector<8x1xi32>
    %222 = arith.cmpi sgt, %3, %221 : vector<8x1xi32>
    %223 = arith.extui %222 : vector<8x1xi1> to vector<8x1xi32>
    %224 = arith.sitofp %223 : vector<8x1xi32> to vector<8x1xf32>
    %225 = vector.shape_cast %224 : vector<8x1xf32> to vector<8x1xf32>
    %226 = vector.broadcast %225 : vector<8x1xf32> to vector<8x128xf32>
    %227 = arith.subf %219, %197 : vector<8x128xf32>
    %228 = arith.mulf %226, %227 : vector<8x128xf32>
    %229 = arith.addf %197, %228 : vector<8x128xf32>
    %c0_77 = arith.constant 0 : index
    %c0_78 = arith.constant 0 : index
    %230 = vector.load %arg10[%c0_77, %c0_78] : memref<8x128xf32, #tpu.memory_space<vmem>>, vector<8x128xf32>
    tpu.vector_store %arg10[%c0_77, %c0_78], %229 {strides = array<i32>} : memref<8x128xf32, #tpu.memory_space<vmem>>, vector<8x128xf32>,
    %231 = arith.subf %217, %198 : vector<8x128xf32>
    %232 = arith.mulf %226, %231 : vector<8x128xf32>
    %233 = arith.addf %198, %232 : vector<8x128xf32>
    %c0_79 = arith.constant 0 : index
    %c0_80 = arith.constant 0 : index
    %234 = vector.load %arg11[%c0_79, %c0_80] : memref<8x128xf32, #tpu.memory_space<vmem>>, vector<8x128xf32>
    tpu.vector_store %arg11[%c0_79, %c0_80], %233 {strides = array<i32>} : memref<8x128xf32, #tpu.memory_space<vmem>>, vector<8x128xf32>,
    %235 = arith.mulf %226, %219 : vector<8x128xf32>
    %236 = arith.truncf %235 : vector<8x128xf32> to vector<8x128xbf16>
    %237 = arith.index_cast %c2_i32 : i32 to index
    %c0_81 = arith.constant 0 : index
    %c0_82 = arith.constant 0 : index
    %238 = vector.load %arg6[%237, %c0_81, %c0_82] : memref<4x8x128xbf16, #tpu.memory_space<vmem>>, vector<1x8x128xbf16>
    %239 = vector.shape_cast %238 : vector<1x8x128xbf16> to vector<8x128xbf16>
    %240 = vector.shape_cast %236 : vector<8x128xbf16> to vector<1x8x128xbf16>
    tpu.vector_store %arg6[%237, %c0_81, %c0_82], %240 {strides = array<i32>} : memref<4x8x128xbf16, #tpu.memory_space<vmem>>, vector<1x8x128xbf16>,
    %c3_i32_83 = arith.constant 3 : i32
    %241 = arith.subi %c3_i32_83, %c2_i32 : i32
    %c0_84 = arith.constant 0 : index
    %c0_85 = arith.constant 0 : index
    %242 = vector.load %arg12[%c0_84, %c0_85] : memref<8x128xf32, #tpu.memory_space<vmem>>, vector<8x128xf32>
    %c0_86 = arith.constant 0 : index
    %c0_87 = arith.constant 0 : index
    %243 = vector.load %arg13[%c0_86, %c0_87] : memref<8x128xf32, #tpu.memory_space<vmem>>, vector<8x128xf32>
    %244 = arith.index_cast %241 : i32 to index
    %c0_88 = arith.constant 0 : index
    %c0_89 = arith.constant 0 : index
    %245 = vector.load %arg3[%244, %c0_88, %c0_89] : memref<4x8x512xbf16, #tpu.memory_space<vmem>>, vector<1x8x512xbf16>
    %246 = vector.shape_cast %245 : vector<1x8x512xbf16> to vector<8x512xbf16>
    %247 = arith.extf %246 : vector<8x512xbf16> to vector<8x512xf32>
    %248 = arith.truncf %242 : vector<8x128xf32> to vector<8x128xbf16>
    %c0_90 = arith.constant 0 : index
    %c0_91 = arith.constant 0 : index
    %249 = vector.load %arg9[%c0_90, %c0_91] : memref<128x512xbf16, #tpu.memory_space<vmem>>, vector<128x512xbf16>
    %cst_92 = arith.constant dense<0.000000e+00> : vector<8x512xf32>
    %250 = tpu.matmul %248, %249, %cst_92 {dimension_numbers = #tpu.dot_dimension_numbers<[1], [0], [0], [1], [0, 0, 1, 1], [], []>} : vector<8x128xbf16>, vector<128x512xbf16>, vector<8x512xf32> -> vector<8x512xf32>
    %251 = arith.addf %247, %250 : vector<8x512xf32>
    %252 = arith.mulf %251, %12 : vector<8x512xf32>
    %253 = math.tanh %252 : vector<8x512xf32>
    %254 = arith.mulf %253, %12 : vector<8x512xf32>
    %255 = arith.addf %254, %15 : vector<8x512xf32>
    %256 = vector.extract_strided_slice %255 {offsets = [0, 0], sizes = [8, 128], strides = [1, 1]} : vector<8x512xf32> to vector<8x128xf32>
    %257 = vector.extract_strided_slice %255 {offsets = [0, 128], sizes = [8, 128], strides = [1, 1]} : vector<8x512xf32> to vector<8x128xf32>
    %258 = vector.extract_strided_slice %255 {offsets = [0, 256], sizes = [8, 128], strides = [1, 1]} : vector<8x512xf32> to vector<8x128xf32>
    %259 = vector.extract_strided_slice %255 {offsets = [0, 384], sizes = [8, 128], strides = [1, 1]} : vector<8x512xf32> to vector<8x128xf32>
    %260 = arith.mulf %257, %243 : vector<8x128xf32>
    %261 = arith.mulf %256, %258 : vector<8x128xf32>
    %262 = arith.addf %260, %261 : vector<8x128xf32>
    %263 = math.tanh %262 : vector<8x128xf32>
    %264 = arith.mulf %259, %263 : vector<8x128xf32>
    %265 = arith.addi %16, %c2_i32 : i32
    %c11_i32_93 = arith.constant 11 : i32
    %266 = arith.subi %c11_i32_93, %265 : i32
    %267 = vector.broadcast %266 : i32 to vector<8x1xi32>
    %268 = arith.cmpi sgt, %3, %267 : vector<8x1xi32>
    %269 = arith.extui %268 : vector<8x1xi1> to vector<8x1xi32>
    %270 = arith.sitofp %269 : vector<8x1xi32> to vector<8x1xf32>
    %271 = vector.shape_cast %270 : vector<8x1xf32> to vector<8x1xf32>
    %272 = vector.broadcast %271 : vector<8x1xf32> to vector<8x128xf32>
    %273 = arith.subf %264, %242 : vector<8x128xf32>
    %274 = arith.mulf %272, %273 : vector<8x128xf32>
    %275 = arith.addf %242, %274 : vector<8x128xf32>
    %c0_94 = arith.constant 0 : index
    %c0_95 = arith.constant 0 : index
    %276 = vector.load %arg12[%c0_94, %c0_95] : memref<8x128xf32, #tpu.memory_space<vmem>>, vector<8x128xf32>
    tpu.vector_store %arg12[%c0_94, %c0_95], %275 {strides = array<i32>} : memref<8x128xf32, #tpu.memory_space<vmem>>, vector<8x128xf32>,
    %277 = arith.subf %262, %243 : vector<8x128xf32>
    %278 = arith.mulf %272, %277 : vector<8x128xf32>
    %279 = arith.addf %243, %278 : vector<8x128xf32>
    %c0_96 = arith.constant 0 : index
    %c0_97 = arith.constant 0 : index
    %280 = vector.load %arg13[%c0_96, %c0_97] : memref<8x128xf32, #tpu.memory_space<vmem>>, vector<8x128xf32>
    tpu.vector_store %arg13[%c0_96, %c0_97], %279 {strides = array<i32>} : memref<8x128xf32, #tpu.memory_space<vmem>>, vector<8x128xf32>,
    %281 = arith.mulf %272, %264 : vector<8x128xf32>
    %282 = arith.truncf %281 : vector<8x128xf32> to vector<8x128xbf16>
    %283 = arith.index_cast %241 : i32 to index
    %c0_98 = arith.constant 0 : index
    %c0_99 = arith.constant 0 : index
    %284 = vector.load %arg7[%283, %c0_98, %c0_99] : memref<4x8x128xbf16, #tpu.memory_space<vmem>>, vector<1x8x128xbf16>
    %285 = vector.shape_cast %284 : vector<1x8x128xbf16> to vector<8x128xbf16>
    %286 = vector.shape_cast %282 : vector<8x128xbf16> to vector<1x8x128xbf16>
    tpu.vector_store %arg7[%283, %c0_98, %c0_99], %286 {strides = array<i32>} : memref<4x8x128xbf16, #tpu.memory_space<vmem>>, vector<1x8x128xbf16>,
    %c3_i32_100 = arith.constant 3 : i32
    %c0_101 = arith.constant 0 : index
    %c0_102 = arith.constant 0 : index
    %287 = vector.load %arg10[%c0_101, %c0_102] : memref<8x128xf32, #tpu.memory_space<vmem>>, vector<8x128xf32>
    %c0_103 = arith.constant 0 : index
    %c0_104 = arith.constant 0 : index
    %288 = vector.load %arg11[%c0_103, %c0_104] : memref<8x128xf32, #tpu.memory_space<vmem>>, vector<8x128xf32>
    %289 = arith.index_cast %c3_i32_100 : i32 to index
    %c0_105 = arith.constant 0 : index
    %c0_106 = arith.constant 0 : index
    %290 = vector.load %arg2[%289, %c0_105, %c0_106] : memref<4x8x512xbf16, #tpu.memory_space<vmem>>, vector<1x8x512xbf16>
    %291 = vector.shape_cast %290 : vector<1x8x512xbf16> to vector<8x512xbf16>
    %292 = arith.extf %291 : vector<8x512xbf16> to vector<8x512xf32>
    %293 = arith.truncf %287 : vector<8x128xf32> to vector<8x128xbf16>
    %c0_107 = arith.constant 0 : index
    %c0_108 = arith.constant 0 : index
    %294 = vector.load %arg8[%c0_107, %c0_108] : memref<128x512xbf16, #tpu.memory_space<vmem>>, vector<128x512xbf16>
    %cst_109 = arith.constant dense<0.000000e+00> : vector<8x512xf32>
    %295 = tpu.matmul %293, %294, %cst_109 {dimension_numbers = #tpu.dot_dimension_numbers<[1], [0], [0], [1], [0, 0, 1, 1], [], []>} : vector<8x128xbf16>, vector<128x512xbf16>, vector<8x512xf32> -> vector<8x512xf32>
    %296 = arith.addf %292, %295 : vector<8x512xf32>
    %297 = arith.mulf %296, %12 : vector<8x512xf32>
    %298 = math.tanh %297 : vector<8x512xf32>
    %299 = arith.mulf %298, %12 : vector<8x512xf32>
    %300 = arith.addf %299, %15 : vector<8x512xf32>
    %301 = vector.extract_strided_slice %300 {offsets = [0, 0], sizes = [8, 128], strides = [1, 1]} : vector<8x512xf32> to vector<8x128xf32>
    %302 = vector.extract_strided_slice %300 {offsets = [0, 128], sizes = [8, 128], strides = [1, 1]} : vector<8x512xf32> to vector<8x128xf32>
    %303 = vector.extract_strided_slice %300 {offsets = [0, 256], sizes = [8, 128], strides = [1, 1]} : vector<8x512xf32> to vector<8x128xf32>
    %304 = vector.extract_strided_slice %300 {offsets = [0, 384], sizes = [8, 128], strides = [1, 1]} : vector<8x512xf32> to vector<8x128xf32>
    %305 = arith.mulf %302, %288 : vector<8x128xf32>
    %306 = arith.mulf %301, %303 : vector<8x128xf32>
    %307 = arith.addf %305, %306 : vector<8x128xf32>
    %308 = math.tanh %307 : vector<8x128xf32>
    %309 = arith.mulf %304, %308 : vector<8x128xf32>
    %310 = arith.addi %16, %c3_i32_100 : i32
    %311 = vector.broadcast %310 : i32 to vector<8x1xi32>
    %312 = arith.cmpi sgt, %3, %311 : vector<8x1xi32>
    %313 = arith.extui %312 : vector<8x1xi1> to vector<8x1xi32>
    %314 = arith.sitofp %313 : vector<8x1xi32> to vector<8x1xf32>
    %315 = vector.shape_cast %314 : vector<8x1xf32> to vector<8x1xf32>
    %316 = vector.broadcast %315 : vector<8x1xf32> to vector<8x128xf32>
    %317 = arith.subf %309, %287 : vector<8x128xf32>
    %318 = arith.mulf %316, %317 : vector<8x128xf32>
    %319 = arith.addf %287, %318 : vector<8x128xf32>
    %c0_110 = arith.constant 0 : index
    %c0_111 = arith.constant 0 : index
    %320 = vector.load %arg10[%c0_110, %c0_111] : memref<8x128xf32, #tpu.memory_space<vmem>>, vector<8x128xf32>
    tpu.vector_store %arg10[%c0_110, %c0_111], %319 {strides = array<i32>} : memref<8x128xf32, #tpu.memory_space<vmem>>, vector<8x128xf32>,
    %321 = arith.subf %307, %288 : vector<8x128xf32>
    %322 = arith.mulf %316, %321 : vector<8x128xf32>
    %323 = arith.addf %288, %322 : vector<8x128xf32>
    %c0_112 = arith.constant 0 : index
    %c0_113 = arith.constant 0 : index
    %324 = vector.load %arg11[%c0_112, %c0_113] : memref<8x128xf32, #tpu.memory_space<vmem>>, vector<8x128xf32>
    tpu.vector_store %arg11[%c0_112, %c0_113], %323 {strides = array<i32>} : memref<8x128xf32, #tpu.memory_space<vmem>>, vector<8x128xf32>,
    %325 = arith.mulf %316, %309 : vector<8x128xf32>
    %326 = arith.truncf %325 : vector<8x128xf32> to vector<8x128xbf16>
    %327 = arith.index_cast %c3_i32_100 : i32 to index
    %c0_114 = arith.constant 0 : index
    %c0_115 = arith.constant 0 : index
    %328 = vector.load %arg6[%327, %c0_114, %c0_115] : memref<4x8x128xbf16, #tpu.memory_space<vmem>>, vector<1x8x128xbf16>
    %329 = vector.shape_cast %328 : vector<1x8x128xbf16> to vector<8x128xbf16>
    %330 = vector.shape_cast %326 : vector<8x128xbf16> to vector<1x8x128xbf16>
    tpu.vector_store %arg6[%327, %c0_114, %c0_115], %330 {strides = array<i32>} : memref<4x8x128xbf16, #tpu.memory_space<vmem>>, vector<1x8x128xbf16>,
    %c3_i32_116 = arith.constant 3 : i32
    %331 = arith.subi %c3_i32_116, %c3_i32_100 : i32
    %c0_117 = arith.constant 0 : index
    %c0_118 = arith.constant 0 : index
    %332 = vector.load %arg12[%c0_117, %c0_118] : memref<8x128xf32, #tpu.memory_space<vmem>>, vector<8x128xf32>
    %c0_119 = arith.constant 0 : index
    %c0_120 = arith.constant 0 : index
    %333 = vector.load %arg13[%c0_119, %c0_120] : memref<8x128xf32, #tpu.memory_space<vmem>>, vector<8x128xf32>
    %334 = arith.index_cast %331 : i32 to index
    %c0_121 = arith.constant 0 : index
    %c0_122 = arith.constant 0 : index
    %335 = vector.load %arg3[%334, %c0_121, %c0_122] : memref<4x8x512xbf16, #tpu.memory_space<vmem>>, vector<1x8x512xbf16>
    %336 = vector.shape_cast %335 : vector<1x8x512xbf16> to vector<8x512xbf16>
    %337 = arith.extf %336 : vector<8x512xbf16> to vector<8x512xf32>
    %338 = arith.truncf %332 : vector<8x128xf32> to vector<8x128xbf16>
    %c0_123 = arith.constant 0 : index
    %c0_124 = arith.constant 0 : index
    %339 = vector.load %arg9[%c0_123, %c0_124] : memref<128x512xbf16, #tpu.memory_space<vmem>>, vector<128x512xbf16>
    %cst_125 = arith.constant dense<0.000000e+00> : vector<8x512xf32>
    %340 = tpu.matmul %338, %339, %cst_125 {dimension_numbers = #tpu.dot_dimension_numbers<[1], [0], [0], [1], [0, 0, 1, 1], [], []>} : vector<8x128xbf16>, vector<128x512xbf16>, vector<8x512xf32> -> vector<8x512xf32>
    %341 = arith.addf %337, %340 : vector<8x512xf32>
    %342 = arith.mulf %341, %12 : vector<8x512xf32>
    %343 = math.tanh %342 : vector<8x512xf32>
    %344 = arith.mulf %343, %12 : vector<8x512xf32>
    %345 = arith.addf %344, %15 : vector<8x512xf32>
    %346 = vector.extract_strided_slice %345 {offsets = [0, 0], sizes = [8, 128], strides = [1, 1]} : vector<8x512xf32> to vector<8x128xf32>
    %347 = vector.extract_strided_slice %345 {offsets = [0, 128], sizes = [8, 128], strides = [1, 1]} : vector<8x512xf32> to vector<8x128xf32>
    %348 = vector.extract_strided_slice %345 {offsets = [0, 256], sizes = [8, 128], strides = [1, 1]} : vector<8x512xf32> to vector<8x128xf32>
    %349 = vector.extract_strided_slice %345 {offsets = [0, 384], sizes = [8, 128], strides = [1, 1]} : vector<8x512xf32> to vector<8x128xf32>
    %350 = arith.mulf %347, %333 : vector<8x128xf32>
    %351 = arith.mulf %346, %348 : vector<8x128xf32>
    %352 = arith.addf %350, %351 : vector<8x128xf32>
    %353 = math.tanh %352 : vector<8x128xf32>
    %354 = arith.mulf %349, %353 : vector<8x128xf32>
    %355 = arith.addi %16, %c3_i32_100 : i32
    %c11_i32_126 = arith.constant 11 : i32
    %356 = arith.subi %c11_i32_126, %355 : i32
    %357 = vector.broadcast %356 : i32 to vector<8x1xi32>
    %358 = arith.cmpi sgt, %3, %357 : vector<8x1xi32>
    %359 = arith.extui %358 : vector<8x1xi1> to vector<8x1xi32>
    %360 = arith.sitofp %359 : vector<8x1xi32> to vector<8x1xf32>
    %361 = vector.shape_cast %360 : vector<8x1xf32> to vector<8x1xf32>
    %362 = vector.broadcast %361 : vector<8x1xf32> to vector<8x128xf32>
    %363 = arith.subf %354, %332 : vector<8x128xf32>
    %364 = arith.mulf %362, %363 : vector<8x128xf32>
    %365 = arith.addf %332, %364 : vector<8x128xf32>
    %c0_127 = arith.constant 0 : index
    %c0_128 = arith.constant 0 : index
    %366 = vector.load %arg12[%c0_127, %c0_128] : memref<8x128xf32, #tpu.memory_space<vmem>>, vector<8x128xf32>
    tpu.vector_store %arg12[%c0_127, %c0_128], %365 {strides = array<i32>} : memref<8x128xf32, #tpu.memory_space<vmem>>, vector<8x128xf32>,
    %367 = arith.subf %352, %333 : vector<8x128xf32>
    %368 = arith.mulf %362, %367 : vector<8x128xf32>
    %369 = arith.addf %333, %368 : vector<8x128xf32>
    %c0_129 = arith.constant 0 : index
    %c0_130 = arith.constant 0 : index
    %370 = vector.load %arg13[%c0_129, %c0_130] : memref<8x128xf32, #tpu.memory_space<vmem>>, vector<8x128xf32>
    tpu.vector_store %arg13[%c0_129, %c0_130], %369 {strides = array<i32>} : memref<8x128xf32, #tpu.memory_space<vmem>>, vector<8x128xf32>,
    %371 = arith.mulf %362, %354 : vector<8x128xf32>
    %372 = arith.truncf %371 : vector<8x128xf32> to vector<8x128xbf16>
    %373 = arith.index_cast %331 : i32 to index
    %c0_131 = arith.constant 0 : index
    %c0_132 = arith.constant 0 : index
    %374 = vector.load %arg7[%373, %c0_131, %c0_132] : memref<4x8x128xbf16, #tpu.memory_space<vmem>>, vector<1x8x128xbf16>
    %375 = vector.shape_cast %374 : vector<1x8x128xbf16> to vector<8x128xbf16>
    %376 = vector.shape_cast %372 : vector<8x128xbf16> to vector<1x8x128xbf16>
    tpu.vector_store %arg7[%373, %c0_131, %c0_132], %376 {strides = array<i32>} : memref<4x8x128xbf16, #tpu.memory_space<vmem>>, vector<1x8x128xbf16>,
    %c4_i32_133 = arith.constant 4 : i32
    return
  }
  func.func @transform_0(%arg0: i32) -> (i32, i32) {
    %c0_i32 = arith.constant 0 : i32
    %c0_i32_0 = arith.constant 0 : i32
    %c0_i32_1 = arith.constant 0 : i32
    return %c0_i32, %c0_i32_0 : i32, i32
  }
  func.func @transform_1(%arg0: i32) -> (i32, i32, i32) {
    %c0_i32 = arith.constant 0 : i32
    %c0_i32_0 = arith.constant 0 : i32
    %c0_i32_1 = arith.constant 0 : i32
    return %arg0, %c0_i32, %c0_i32_0 : i32, i32, i32
  }
  func.func @transform_2(%arg0: i32) -> (i32, i32, i32) {
    %c2_i32 = arith.constant 2 : i32
    %0 = arith.subi %c2_i32, %arg0 : i32
    %c0_i32 = arith.constant 0 : i32
    %c1_i32 = arith.constant 1 : i32
    %c0_i32_0 = arith.constant 0 : i32
    return %0, %c0_i32, %c1_i32 : i32, i32, i32
  }
  func.func @transform_5(%arg0: i32) -> (i32, i32, i32) {
    %c0_i32 = arith.constant 0 : i32
    %c0_i32_0 = arith.constant 0 : i32
    %c0_i32_1 = arith.constant 0 : i32
    return %arg0, %c0_i32, %c0_i32_0 : i32, i32, i32
  }
  func.func @transform_6(%arg0: i32) -> (i32, i32, i32) {
    %c2_i32 = arith.constant 2 : i32
    %0 = arith.subi %c2_i32, %arg0 : i32
    %c0_i32 = arith.constant 0 : i32
    %c0_i32_0 = arith.constant 0 : i32
    %c0_i32_1 = arith.constant 0 : i32
    return %0, %c0_i32, %c0_i32_0 : i32, i32, i32
  }
}

</mosaic_0001>

<llo_original>
// kernel: stackedrnns_forward.2
$region0: #{stackedrnns_forward.2}
  #allocation0 [shape = 'u32[]', space=smem, size = 0x4, offset = 0x4, fixed_abs, tag = 'smem constant byte address 0x4 - core index']
  #allocation1 [shape = 'u32[144,128]{1,0:T(1,128)}', space=vmem, size = 0x12000, scoped, tag = 'internal scratch']
  #allocation2 [shape = 'bf16[128,512]{1,0:T(16,128)(2,1)}', space=vmem, size = 0x20000, scoped, tag = 'scratch operand']
  #allocation3 [shape = 'bf16[128,512]{1,0:T(16,128)(2,1)}', space=vmem, size = 0x20000, scoped, tag = 'scratch operand']
  #allocation4 [shape = 'f32[8,128]{1,0:T(8,128)}', space=vmem, size = 0x1000, scoped, tag = 'scratch operand']
  #allocation5 [shape = 'f32[8,128]{1,0:T(8,128)}', space=vmem, size = 0x1000, scoped, tag = 'scratch operand']
  #allocation6 [shape = 'f32[8,128]{1,0:T(8,128)}', space=vmem, size = 0x1000, scoped, tag = 'scratch operand']
  #allocation7 [shape = 'f32[8,128]{1,0:T(8,128)}', space=vmem, size = 0x1000, scoped, tag = 'scratch operand']
  #allocation11 [shape = 's32[]', space=sflag, size = 0x4, offset = 0, fixed_abs, tag = 'sflag constant byte address 0x0 - dummy sync flag']
  #allocation13 [shape = 's32[]', space=sflag, size = 0x4, offset = 0, fixed_abs, tag = 'sflag constant byte address 0x0 - dummy sync flag']
  %s0 = inlined_call_operand.vmem [shape: s32[8,1], index: 0, kind: input, shape index: {}]
  %s1 = inlined_call_operand.vmem [shape: bf16[12,8,1024], index: 1, kind: input, shape index: {}, may-alias: {1,2}]
  %s2 = inlined_call_operand.vmem [shape: bf16[12,8,1024], index: 2, kind: input, shape index: {}, may-alias: {1,2}]
  %s3 = inlined_call_operand.vmem [shape: bf16[128,512], index: 3, kind: input, shape index: {}]
  %s4 = inlined_call_operand.vmem [shape: bf16[128,512], index: 4, kind: input, shape index: {}]
  %s5 = inlined_call_operand.vmem [shape: bf16[12,8,128], index: 5, kind: output, shape index: {0}]
  %s6 = inlined_call_operand.vmem [shape: bf16[12,8,128], index: 6, kind: output, shape index: {1}]
  %7 = xla_tuple %s5, %s6
  %s8 = sld [smem:[#allocation0]]
  $region179: #{stackedrnns_forward.2} parent=0
    _
  %s10 = ssub.s32 1, %s8
  %s11 = scalar_select 0, %s10, %s8
  $region1: #{stackedrnns_forward.2} parent=0
    #allocation8 [shape = 'u8[65536]{0}', space=vmem, size = 0x10000, scoped, tag = 'input window, operand 1']
    #allocation9 [shape = 'u8[65536]{0}', space=vmem, size = 0x10000, scoped, tag = 'input window, operand 2']
    loop: start=0, step=1, limit=5
    $region2: #{stackedrnns_forward.2} parent=1 // loop_pre_header
      _
    $region3: #{stackedrnns_forward.2} parent=1 // loop_header
      %s13 = sphi 0, %s17
      %p14 = scmp.ge.s32.totalorder %s13, 5
      %s21 = sphi 0, %s21
      %s23 = sphi 0, %s21
      %s24 = sphi 0, %s23
      %s38 = sphi 0, %s24
      %s44 = sphi 0, %s46
      %s47 = sphi 0, %s44
      %s48 = sphi 0, %s47
      %s64 = sphi 0, %s48
      %s72 = sphi 0, %s74
      %s75 = sphi 0, %s72
      %s76 = sphi 0, %s75
      %s92 = sphi 0, %s76
      %s98 = sphi 0, %s100
      %s101 = sphi 0, %s98
      %s102 = sphi 0, %s101
      %s118 = sphi 0, %s102
      %s126 = sphi 0, %s128
      %s129 = sphi 0, %s126
      %s130 = sphi 0, %s129
      %s146 = sphi 0, %s130
    $region4: #{stackedrnns_forward.2} parent=1 // loop_header_branch
      %16 = sbr.rel (%p14) target = $region8
    $region5: #{stackedrnns_forward.2} parent=1 // loop_body
      %s18 = ssub.s32 %s13, 1
      %s19 = ssub.s32 %s13, 2
      %s20 = sadd.s32 %s13, 1
      %s22 = sadd.s32 %s21, 1
      %p25 = scmp.eq.s32.totalorder %s13, 2
      %p26 = scmp.ne.s32.totalorder %s21, %s23
      %p27 = scmp.eq.s32.totalorder %s13, 0
      %p28 = por %p26, %p27
      %p29 = scmp.ne.s32.totalorder %s21, %s23
      %p30 = scmp.eq.s32.totalorder %s18, 2
      %p31 = por %p29, %p30
      %p32 = scmp.ne.s32.totalorder %s23, %s24
      %p33 = scmp.eq.s32.totalorder %s18, 0
      %p34 = por %p32, %p33
      %p35 = scmp.ne.s32.totalorder %s23, %s24
      %p36 = scmp.eq.s32.totalorder %s19, 2
      %p37 = por %p35, %p36
      %p39 = scmp.ne.s32.totalorder %s24, %s38
      %p40 = scmp.eq.s32.totalorder %s19, 0
      %p41 = por %p39, %p40
      %s42 = ssub.s32 %s13, %s20
      %p43 = scmp.eq.s32.totalorder %s42, 0
      %s45 = sadd.s32 %s44, 1
      %s46 = scalar_select %p43, %s44, %s45
      %p49 = pneg %p43
      %p50 = scmp.eq.s32.totalorder %s13, 2
      %p51 = por %p49, %p50
      %p52 = scmp.ne.s32.totalorder %s44, %s47
      %p53 = scmp.eq.s32.totalorder %s13, 0
      %p54 = por %p52, %p53
      %p55 = scmp.ne.s32.totalorder %s44, %s47
      %p56 = scmp.eq.s32.totalorder %s18, 2
      %p57 = por %p55, %p56
      %p58 = scmp.ne.s32.totalorder %s47, %s48
      %p59 = scmp.eq.s32.totalorder %s18, 0
      %p60 = por %p58, %p59
      %p61 = scmp.ne.s32.totalorder %s47, %s48
      %p62 = scmp.eq.s32.totalorder %s19, 2
      %p63 = por %p61, %p62
      %p65 = scmp.ne.s32.totalorder %s48, %s64
      %p66 = scmp.eq.s32.totalorder %s19, 0
      %p67 = por %p65, %p66
      %s68 = ssub.s32 2, %s13
      %s69 = ssub.s32 2, %s20
      %s70 = ssub.s32 %s68, %s69
      %p71 = scmp.eq.s32.totalorder %s70, 0
      %s73 = sadd.s32 %s72, 1
      %s74 = scalar_select %p71, %s72, %s73
      %p77 = pneg %p71
      %p78 = scmp.eq.s32.totalorder %s13, 2
      %p79 = por %p77, %p78
      %p80 = scmp.ne.s32.totalorder %s72, %s75
      %p81 = scmp.eq.s32.totalorder %s13, 0
      %p82 = por %p80, %p81
      %p83 = scmp.ne.s32.totalorder %s72, %s75
      %p84 = scmp.eq.s32.totalorder %s18, 2
      %p85 = por %p83, %p84
      %p86 = scmp.ne.s32.totalorder %s75, %s76
      %p87 = scmp.eq.s32.totalorder %s18, 0
      %p88 = por %p86, %p87
      %p89 = scmp.ne.s32.totalorder %s75, %s76
      %p90 = scmp.eq.s32.totalorder %s19, 2
      %p91 = por %p89, %p90
      %p93 = scmp.ne.s32.totalorder %s76, %s92
      %p94 = scmp.eq.s32.totalorder %s19, 0
      %p95 = por %p93, %p94
      %s96 = ssub.s32 %s13, %s20
      %p97 = scmp.eq.s32.totalorder %s96, 0
      %s99 = sadd.s32 %s98, 1
      %s100 = scalar_select %p97, %s98, %s99
      %p103 = pneg %p97
      %p104 = scmp.eq.s32.totalorder %s13, 2
      %p105 = por %p103, %p104
      %p106 = scmp.ne.s32.totalorder %s98, %s101
      %p107 = scmp.eq.s32.totalorder %s13, 0
      %p108 = por %p106, %p107
      %p109 = scmp.ne.s32.totalorder %s98, %s101
      %p110 = scmp.eq.s32.totalorder %s18, 2
      %p111 = por %p109, %p110
      %p112 = scmp.ne.s32.totalorder %s101, %s102
      %p113 = scmp.eq.s32.totalorder %s18, 0
      %p114 = por %p112, %p113
      %p115 = scmp.ne.s32.totalorder %s101, %s102
      %p116 = scmp.eq.s32.totalorder %s19, 2
      %p117 = por %p115, %p116
      %p119 = scmp.ne.s32.totalorder %s102, %s118
      %p120 = scmp.eq.s32.totalorder %s19, 0
      %p121 = por %p119, %p120
      %s122 = ssub.s32 2, %s13
      %s123 = ssub.s32 2, %s20
      %s124 = ssub.s32 %s122, %s123
      %p125 = scmp.eq.s32.totalorder %s124, 0
      %s127 = sadd.s32 %s126, 1
      %s128 = scalar_select %p125, %s126, %s127
      %p131 = pneg %p125
      %p132 = scmp.eq.s32.totalorder %s13, 2
      %p133 = por %p131, %p132
      %p134 = scmp.ne.s32.totalorder %s126, %s129
      %p135 = scmp.eq.s32.totalorder %s13, 0
      %p136 = por %p134, %p135
      %p137 = scmp.ne.s32.totalorder %s126, %s129
      %p138 = scmp.eq.s32.totalorder %s18, 2
      %p139 = por %p137, %p138
      %p140 = scmp.ne.s32.totalorder %s129, %s130
      %p141 = scmp.eq.s32.totalorder %s18, 0
      %p142 = por %p140, %p141
      %p143 = scmp.ne.s32.totalorder %s129, %s130
      %p144 = scmp.eq.s32.totalorder %s19, 2
      %p145 = por %p143, %p144
      %p147 = scmp.ne.s32.totalorder %s130, %s146
      %p148 = scmp.eq.s32.totalorder %s19, 0
      %p149 = por %p147, %p148
      %p150 = scmp.le.s32.totalorder 1, %s13
      %p151 = scmp.lt.s32.totalorder %s13, 4
      %p152 = pnand %p150, %p151
      %p153 = pneg %p152
      // Predicated region
      $region9: #{stackedrnns_forward.2} parent=5 // pred_check
        _
      $region10: #{stackedrnns_forward.2} parent=5 // pred_check_branch
        %155 = sbr.rel (%p152) target = $region12
      $region11: #{stackedrnns_forward.2} parent=5 // pred_region
        %s156 = ssub.s32 %s13, 1
        // Predicated region
        $region13: #{stackedrnns_forward.2} parent=11 // pred_check
          %p157 = pneg %p34
        $region14: #{stackedrnns_forward.2} parent=11 // pred_check_branch
          %159 = sbr.rel (%p157) target = $region16
        $region15: #{stackedrnns_forward.2} parent=11 // pred_region
          _
        $region16: #{stackedrnns_forward.2} parent=11 // pred_fallthru
          _
      $region12: #{stackedrnns_forward.2} parent=5 // pred_fallthru
        _
      %p160 = scmp.lt.s32.totalorder %s13, 3
      // Predicated region
      $region17: #{stackedrnns_forward.2} parent=5 // pred_check
        %p161 = pneg %p160
      $region18: #{stackedrnns_forward.2} parent=5 // pred_check_branch
        %163 = sbr.rel (%p161) target = $region20
      $region19: #{stackedrnns_forward.2} parent=5 // pred_region
        // Predicated region
        $region21: #{stackedrnns_forward.2} parent=19 // pred_check
          %p164 = pneg %p54
        $region22: #{stackedrnns_forward.2} parent=19 // pred_check_branch
          %166 = sbr.rel (%p164) target = $region24
        $region23: #{stackedrnns_forward.2} parent=19 // pred_region
          %s167 = sand.u32 %s44, 1
          %s168 = sand.u32 %s44, 1
          %s169 = smul.addr %s168, 64
          %s170 = scalar_lea.vmem [#allocation8], %s169
          %s171 = smul.u32 4, %s13
          %s172 = smul.addr %s171, 8
          %s173 = smul.addr %s172, 4
          %s174 = scalar_lea.vmem %s1, %s173
          // Predicated region
          $region25: #{stackedrnns_forward.2} parent=23 // pred_check
            _
          $region26: #{stackedrnns_forward.2} parent=23 // pred_check_branch
            %176 = sbr.rel (0) target = $region28
          $region27: #{stackedrnns_forward.2} parent=23 // pred_region
            // Predicated region
            $region29: #{stackedrnns_forward.2} parent=27 // pred_check
              _
            $region30: #{stackedrnns_forward.2} parent=27 // pred_check_branch
              %178 = sbr.rel (0) target = $region32
            $region31: #{stackedrnns_forward.2} parent=27 // pred_region
              loop: start=0, step=1, limit=1
              $region33: #{stackedrnns_forward.2} parent=31 // loop_pre_header
                _
              $region34: #{stackedrnns_forward.2} parent=31 // loop_header
                %s180 = sphi 0, %s184
                %p181 = scmp.ge.s32.totalorder %s180, 1
                %s185 = sphi %s174, %s174
                %s186 = sphi %s170, %s170
              $region35: #{stackedrnns_forward.2} parent=31 // loop_header_branch
                %183 = sbr.rel (%p181) target = $region39
              $region36: #{stackedrnns_forward.2} parent=31 // loop_body
                %v187 = vld [vmem:[%s185] sm:$0xff]
                %188 = vst [vmem:[%s186] sm:$0xff] %v187
                %v189 = vld [vmem:[%s185 + $0x8] sm:$0xff]
                %190 = vst [vmem:[%s186 + $0x8] sm:$0xff] %v189
                %v191 = vld [vmem:[%s185 + $0x20] sm:$0xff]
                %192 = vst [vmem:[%s186 + $0x10] sm:$0xff] %v191
                %v193 = vld [vmem:[%s185 + $0x28] sm:$0xff]
                %194 = vst [vmem:[%s186 + $0x18] sm:$0xff] %v193
                %v195 = vld [vmem:[%s185 + $0x40] sm:$0xff]
                %196 = vst [vmem:[%s186 + $0x20] sm:$0xff] %v195
                %v197 = vld [vmem:[%s185 + $0x48] sm:$0xff]
                %198 = vst [vmem:[%s186 + $0x28] sm:$0xff] %v197
                %v199 = vld [vmem:[%s185 + $0x60] sm:$0xff]
                %200 = vst [vmem:[%s186 + $0x30] sm:$0xff] %v199
                %v201 = vld [vmem:[%s185 + $0x68] sm:$0xff]
                %202 = vst [vmem:[%s186 + $0x38] sm:$0xff] %v201
              $region37: #{stackedrnns_forward.2} parent=31 // loop_footer
                %s184 = sadd.s32 1, %s180
              $region38: #{stackedrnns_forward.2} parent=31 // loop_footer_branch
                %179 = sbr.rel target = $region34
              $region39: #{stackedrnns_forward.2} parent=31 // loop_exit
                _
            $region32: #{stackedrnns_forward.2} parent=27 // pred_fallthru
              _
            // Predicated region
            $region40: #{stackedrnns_forward.2} parent=27 // pred_check
              _
            $region41: #{stackedrnns_forward.2} parent=27 // pred_check_branch
              %204 = sbr.rel target = $region43
            $region42: #{stackedrnns_forward.2} parent=27 // pred_region
              _
            $region43: #{stackedrnns_forward.2} parent=27 // pred_fallthru
              _
          $region28: #{stackedrnns_forward.2} parent=23 // pred_fallthru
            _
          %205 = vnop
        $region24: #{stackedrnns_forward.2} parent=19 // pred_fallthru
          _
        // Predicated region
        $region44: #{stackedrnns_forward.2} parent=19 // pred_check
          %p206 = pneg %p82
        $region45: #{stackedrnns_forward.2} parent=19 // pred_check_branch
          %208 = sbr.rel (%p206) target = $region47
        $region46: #{stackedrnns_forward.2} parent=19 // pred_region
          %s209 = sand.u32 %s72, 1
          %s210 = sand.u32 %s72, 1
          %s211 = smul.addr %s210, 64
          %s212 = scalar_lea.vmem [#allocation9], %s211
          %s213 = ssub.s32 2, %s13
          %s214 = smul.u32 4, %s213
          %s215 = smul.addr %s214, 8
          %s216 = sadd.s32 4, %s215
          %s217 = smul.addr %s216, 4
          %s218 = scalar_lea.vmem %s2, %s217
          // Predicated region
          $region48: #{stackedrnns_forward.2} parent=46 // pred_check
            _
          $region49: #{stackedrnns_forward.2} parent=46 // pred_check_branch
            %220 = sbr.rel (0) target = $region51
          $region50: #{stackedrnns_forward.2} parent=46 // pred_region
            // Predicated region
            $region52: #{stackedrnns_forward.2} parent=50 // pred_check
              _
            $region53: #{stackedrnns_forward.2} parent=50 // pred_check_branch
              %222 = sbr.rel (0) target = $region55
            $region54: #{stackedrnns_forward.2} parent=50 // pred_region
              loop: start=0, step=1, limit=1
              $region56: #{stackedrnns_forward.2} parent=54 // loop_pre_header
                _
              $region57: #{stackedrnns_forward.2} parent=54 // loop_header
                %s224 = sphi 0, %s228
                %p225 = scmp.ge.s32.totalorder %s224, 1
                %s229 = sphi %s218, %s218
                %s230 = sphi %s212, %s212
              $region58: #{stackedrnns_forward.2} parent=54 // loop_header_branch
                %227 = sbr.rel (%p225) target = $region62
              $region59: #{stackedrnns_forward.2} parent=54 // loop_body
                %v231 = vld [vmem:[%s229] sm:$0xff]
                %232 = vst [vmem:[%s230] sm:$0xff] %v231
                %v233 = vld [vmem:[%s229 + $0x8] sm:$0xff]
                %234 = vst [vmem:[%s230 + $0x8] sm:$0xff] %v233
                %v235 = vld [vmem:[%s229 + $0x20] sm:$0xff]
                %236 = vst [vmem:[%s230 + $0x10] sm:$0xff] %v235
                %v237 = vld [vmem:[%s229 + $0x28] sm:$0xff]
                %238 = vst [vmem:[%s230 + $0x18] sm:$0xff] %v237
                %v239 = vld [vmem:[%s229 + $0x40] sm:$0xff]
                %240 = vst [vmem:[%s230 + $0x20] sm:$0xff] %v239
                %v241 = vld [vmem:[%s229 + $0x48] sm:$0xff]
                %242 = vst [vmem:[%s230 + $0x28] sm:$0xff] %v241
                %v243 = vld [vmem:[%s229 + $0x60] sm:$0xff]
                %244 = vst [vmem:[%s230 + $0x30] sm:$0xff] %v243
                %v245 = vld [vmem:[%s229 + $0x68] sm:$0xff]
                %246 = vst [vmem:[%s230 + $0x38] sm:$0xff] %v245
              $region60: #{stackedrnns_forward.2} parent=54 // loop_footer
                %s228 = sadd.s32 1, %s224
              $region61: #{stackedrnns_forward.2} parent=54 // loop_footer_branch
                %223 = sbr.rel target = $region57
              $region62: #{stackedrnns_forward.2} parent=54 // loop_exit
                _
            $region55: #{stackedrnns_forward.2} parent=50 // pred_fallthru
              _
            // Predicated region
            $region63: #{stackedrnns_forward.2} parent=50 // pred_check
              _
            $region64: #{stackedrnns_forward.2} parent=50 // pred_check_branch
              %248 = sbr.rel target = $region66
            $region65: #{stackedrnns_forward.2} parent=50 // pred_region
              _
            $region66: #{stackedrnns_forward.2} parent=50 // pred_fallthru
              _
          $region51: #{stackedrnns_forward.2} parent=46 // pred_fallthru
            _
          %249 = vnop
        $region47: #{stackedrnns_forward.2} parent=19 // pred_fallthru
          _
      $region20: #{stackedrnns_forward.2} parent=5 // pred_fallthru
        _
      %p250 = scmp.le.s32.totalorder 1, %s13
      %p251 = scmp.lt.s32.totalorder %s13, 4
      %p252 = pnand %p250, %p251
      %p253 = pneg %p252
      // Predicated region
      $region67: #{stackedrnns_forward.2} parent=5 // pred_check
        _
      $region68: #{stackedrnns_forward.2} parent=5 // pred_check_branch
        %255 = sbr.rel (%p252) target = $region70
      $region69: #{stackedrnns_forward.2} parent=5 // pred_region
        %s256 = ssub.s32 %s13, 1
        %s257 = sand.u32 %s47, 1
        %s258 = sand.u32 %s47, 1
        %s259 = smul.addr %s258, 64
        %s260 = scalar_lea.vmem [#allocation8], %s259
        // Predicated region
        $region71: #{stackedrnns_forward.2} parent=69 // pred_check
          %p261 = pneg %p60
        $region72: #{stackedrnns_forward.2} parent=69 // pred_check_branch
          %263 = sbr.rel (%p261) target = $region74
        $region73: #{stackedrnns_forward.2} parent=69 // pred_region
          _
        $region74: #{stackedrnns_forward.2} parent=69 // pred_fallthru
          _
        %s264 = sand.u32 %s75, 1
        %s265 = sand.u32 %s75, 1
        %s266 = smul.addr %s265, 64
        %s267 = scalar_lea.vmem [#allocation9], %s266
        // Predicated region
        $region75: #{stackedrnns_forward.2} parent=69 // pred_check
          %p268 = pneg %p88
        $region76: #{stackedrnns_forward.2} parent=69 // pred_check_branch
          %270 = sbr.rel (%p268) target = $region78
        $region77: #{stackedrnns_forward.2} parent=69 // pred_region
          _
        $region78: #{stackedrnns_forward.2} parent=69 // pred_fallthru
          _
        %p271 = pneg %p34
        %p272 = pneg %p31
        %s273 = sand.u32 %s47, 1
        %s274 = sand.u32 %s47, 1
        %s275 = smul.addr %s274, 64
        %s276 = scalar_lea.vmem [#allocation8], %s275
        %p277 = pneg %p60
        %p278 = pneg %p57
        %s279 = sand.u32 %s75, 1
        %s280 = sand.u32 %s75, 1
        %s281 = smul.addr %s280, 64
        %s282 = scalar_lea.vmem [#allocation9], %s281
        %p283 = pneg %p88
        %p284 = pneg %p85
        %p285 = pneg %p114
        %p286 = pneg %p111
        %s287 = smul.u32 4, %s18
        %p288 = scmp.lt.s32.totalorder %s287, 11
        %s289 = scalar_select %p288, %s287, 11
        %s290 = smul.addr %s289, 4
        %s291 = scalar_lea.vmem %s5, %s290
        %p292 = pneg %p142
        %p293 = pneg %p139
        %s294 = ssub.s32 2, %s18
        %s295 = smul.u32 4, %s294
        %p296 = scmp.lt.s32.totalorder %s295, 11
        %s297 = scalar_select %p296, %s295, 11
        %s298 = smul.addr %s297, 4
        %s299 = scalar_lea.vmem %s6, %s298
        %s300 = smul.u32 4, %s18
        %s301 = ssub.s32 2, %s18
        %s302 = smul.u32 4, %s301
        %s303 = smul.u32 4, %s18
        %p304 = scmp.lt.s32.totalorder %s303, 11
        %s305 = scalar_select %p304, %s303, 11
        %s306 = smul.addr %s305, 4
        %s307 = scalar_lea.vmem %s5, %s306
        %s308 = smul.u32 4, %s18
        %s309 = ssub.s32 2, %s18
        %s310 = smul.u32 4, %s309
        %p311 = scmp.lt.s32.totalorder %s310, 11
        %s312 = scalar_select %p311, %s310, 11
        %s313 = smul.addr %s312, 4
        %s314 = scalar_lea.vmem %s6, %s313
        %s315 = ssub.s32 2, %s18
        %s316 = smul.u32 4, %s315
        %p318 = scmp.eq.s32.totalorder %s18, 0
        // Predicated region
        $region79: #{stackedrnns_forward.2} parent=69 // pred_check
          %p319 = pneg %p318
        $region80: #{stackedrnns_forward.2} parent=69 // pred_check_branch
          %321 = sbr.rel (%p319) target = $region82
        $region81: #{stackedrnns_forward.2} parent=69 // pred_region
          $region83: #{stackedrnns_forward.2} parent=81
            #allocation10 [shape = 's32[1]{0}', space=sflag, size = 0x4, scoped, tag = 'scoped memory for stackedrnns_forward.2']
            %p323 = scmp.lt.u32.totalorder 4, 8
            %p324 = pneg %p323
            // Predicated region
            $region84: #{stackedrnns_forward.2} parent=83 // pred_check
              _
            $region85: #{stackedrnns_forward.2} parent=83 // pred_check_branch
              %326 = sbr.rel (%p323) target = $region87
            $region86: #{stackedrnns_forward.2} parent=83 // pred_region
              %s467 = sand.u32 4, 7
              %p468 = scmp.eq.s32.totalorder %s467, 0
              %p469 = pneg %p468
              // Predicated region
              $region99: #{stackedrnns_forward.2} parent=86 // pred_check
                _
              $region100: #{stackedrnns_forward.2} parent=86 // pred_check_branch
                %471 = sbr.rel (%p468) target = $region102
              $region101: #{stackedrnns_forward.2} parent=86 // pred_region
                %s472 = sand.u32 4, 7
                %s473 = ssub.s32 4, %s472
                %s474 = scalar_lea.vmem %s3, %s473
                %s475 = ssub.s32 4, %s472
                %s476 = scalar_lea.vmem [#allocation2], %s475
                loop: start=0, step=1, limit=1
                $region103: #{stackedrnns_forward.2} parent=101 // loop_pre_header
                  _
                $region104: #{stackedrnns_forward.2} parent=101 // loop_header
                  %s478 = sphi 0, %s482
                  %p479 = scmp.ge.s32.totalorder %s478, 1
                  %s483 = sphi %s3, %s3
                  %s484 = sphi [#allocation2], [#allocation2]
                $region105: #{stackedrnns_forward.2} parent=101 // loop_header_branch
                  %481 = sbr.rel (%p479) target = $region109
                $region106: #{stackedrnns_forward.2} parent=101 // loop_body
                  _
                $region107: #{stackedrnns_forward.2} parent=101 // loop_footer
                  %s482 = sadd.s32 1, %s478
                $region108: #{stackedrnns_forward.2} parent=101 // loop_footer_branch
                  %477 = sbr.rel target = $region104
                $region109: #{stackedrnns_forward.2} parent=101 // loop_exit
                  _
                %s485 = sshllo.u32 0, %s472
                loop: start=0, step=1, limit=1
                $region110: #{stackedrnns_forward.2} parent=101 // loop_pre_header
                  _
                $region111: #{stackedrnns_forward.2} parent=101 // loop_header
                  %s487 = sphi 0, %s491
                  %p488 = scmp.ge.s32.totalorder %s487, 1
                  %s492 = sphi %s474, %s474
                  %s493 = sphi %s476, %s476
                $region112: #{stackedrnns_forward.2} parent=101 // loop_header_branch
                  %490 = sbr.rel (%p488) target = $region116
                $region113: #{stackedrnns_forward.2} parent=101 // loop_body
                  %v494 = vld [vmem:[%s492] sm:%s485]
                  %495 = vst [vmem:[%s493] sm:%s485] %v494
                  %v496 = vld [vmem:[%s492 + $0x10] sm:%s485]
                  %497 = vst [vmem:[%s493 + $0x4] sm:%s485] %v496
                  %v498 = vld [vmem:[%s492 + $0x4] sm:%s485]
                  %499 = vst [vmem:[%s493 + $0x8] sm:%s485] %v498
                  %v500 = vld [vmem:[%s492 + $0x14] sm:%s485]
                  %501 = vst [vmem:[%s493 + $0xc] sm:%s485] %v500
                  %v502 = vld [vmem:[%s492 + $0x8] sm:%s485]
                  %503 = vst [vmem:[%s493 + $0x10] sm:%s485] %v502
                  %v504 = vld [vmem:[%s492 + $0x18] sm:%s485]
                  %505 = vst [vmem:[%s493 + $0x14] sm:%s485] %v504
                  %v506 = vld [vmem:[%s492 + $0xc] sm:%s485]
                  %507 = vst [vmem:[%s493 + $0x18] sm:%s485] %v506
                  %v508 = vld [vmem:[%s492 + $0x1c] sm:%s485]
                  %509 = vst [vmem:[%s493 + $0x1c] sm:%s485] %v508
                  %v510 = vld [vmem:[%s492 + $0x20] sm:%s485]
                  %511 = vst [vmem:[%s493 + $0x20] sm:%s485] %v510
                  %v512 = vld [vmem:[%s492 + $0x30] sm:%s485]
                  %513 = vst [vmem:[%s493 + $0x24] sm:%s485] %v512
                  %v514 = vld [vmem:[%s492 + $0x24] sm:%s485]
                  %515 = vst [vmem:[%s493 + $0x28] sm:%s485] %v514
                  %v516 = vld [vmem:[%s492 + $0x34] sm:%s485]
                  %517 = vst [vmem:[%s493 + $0x2c] sm:%s485] %v516
                  %v518 = vld [vmem:[%s492 + $0x28] sm:%s485]
                  %519 = vst [vmem:[%s493 + $0x30] sm:%s485] %v518
                  %v520 = vld [vmem:[%s492 + $0x38] sm:%s485]
                  %521 = vst [vmem:[%s493 + $0x34] sm:%s485] %v520
                  %v522 = vld [vmem:[%s492 + $0x2c] sm:%s485]
                  %523 = vst [vmem:[%s493 + $0x38] sm:%s485] %v522
                  %v524 = vld [vmem:[%s492 + $0x3c] sm:%s485]
                  %525 = vst [vmem:[%s493 + $0x3c] sm:%s485] %v524
                  %v526 = vld [vmem:[%s492 + $0x40] sm:%s485]
                  %527 = vst [vmem:[%s493 + $0x40] sm:%s485] %v526
                  %v528 = vld [vmem:[%s492 + $0x50] sm:%s485]
                  %529 = vst [vmem:[%s493 + $0x44] sm:%s485] %v528
                  %v530 = vld [vmem:[%s492 + $0x44] sm:%s485]
                  %531 = vst [vmem:[%s493 + $0x48] sm:%s485] %v530
                  %v532 = vld [vmem:[%s492 + $0x54] sm:%s485]
                  %533 = vst [vmem:[%s493 + $0x4c] sm:%s485] %v532
                  %v534 = vld [vmem:[%s492 + $0x48] sm:%s485]
                  %535 = vst [vmem:[%s493 + $0x50] sm:%s485] %v534
                  %v536 = vld [vmem:[%s492 + $0x58] sm:%s485]
                  %537 = vst [vmem:[%s493 + $0x54] sm:%s485] %v536
                  %v538 = vld [vmem:[%s492 + $0x4c] sm:%s485]
                  %539 = vst [vmem:[%s493 + $0x58] sm:%s485] %v538
                  %v540 = vld [vmem:[%s492 + $0x5c] sm:%s485]
                  %541 = vst [vmem:[%s493 + $0x5c] sm:%s485] %v540
                  %v542 = vld [vmem:[%s492 + $0x60] sm:%s485]
                  %543 = vst [vmem:[%s493 + $0x60] sm:%s485] %v542
                  %v544 = vld [vmem:[%s492 + $0x70] sm:%s485]
                  %545 = vst [vmem:[%s493 + $0x64] sm:%s485] %v544
                  %v546 = vld [vmem:[%s492 + $0x64] sm:%s485]
                  %547 = vst [vmem:[%s493 + $0x68] sm:%s485] %v546
                  %v548 = vld [vmem:[%s492 + $0x74] sm:%s485]
                  %549 = vst [vmem:[%s493 + $0x6c] sm:%s485] %v548
                  %v550 = vld [vmem:[%s492 + $0x68] sm:%s485]
                  %551 = vst [vmem:[%s493 + $0x70] sm:%s485] %v550
                  %v552 = vld [vmem:[%s492 + $0x78] sm:%s485]
                  %553 = vst [vmem:[%s493 + $0x74] sm:%s485] %v552
                  %v554 = vld [vmem:[%s492 + $0x6c] sm:%s485]
                  %555 = vst [vmem:[%s493 + $0x78] sm:%s485] %v554
                  %v556 = vld [vmem:[%s492 + $0x7c] sm:%s485]
                  %557 = vst [vmem:[%s493 + $0x7c] sm:%s485] %v556
                  %v558 = vld [vmem:[%s492 + $0x80] sm:%s485]
                  %559 = vst [vmem:[%s493 + $0x80] sm:%s485] %v558
                  %v560 = vld [vmem:[%s492 + $0x90] sm:%s485]
                  %561 = vst [vmem:[%s493 + $0x84] sm:%s485] %v560
                  %v562 = vld [vmem:[%s492 + $0x84] sm:%s485]
                  %563 = vst [vmem:[%s493 + $0x88] sm:%s485] %v562
                  %v564 = vld [vmem:[%s492 + $0x94] sm:%s485]
                  %565 = vst [vmem:[%s493 + $0x8c] sm:%s485] %v564
                  %v566 = vld [vmem:[%s492 + $0x88] sm:%s485]
                  %567 = vst [vmem:[%s493 + $0x90] sm:%s485] %v566
                  %v568 = vld [vmem:[%s492 + $0x98] sm:%s485]
                  %569 = vst [vmem:[%s493 + $0x94] sm:%s485] %v568
                  %v570 = vld [vmem:[%s492 + $0x8c] sm:%s485]
                  %571 = vst [vmem:[%s493 + $0x98] sm:%s485] %v570
                  %v572 = vld [vmem:[%s492 + $0x9c] sm:%s485]
                  %573 = vst [vmem:[%s493 + $0x9c] sm:%s485] %v572
                  %v574 = vld [vmem:[%s492 + $0xa0] sm:%s485]
                  %575 = vst [vmem:[%s493 + $0xa0] sm:%s485] %v574
                  %v576 = vld [vmem:[%s492 + $0xb0] sm:%s485]
                  %577 = vst [vmem:[%s493 + $0xa4] sm:%s485] %v576
                  %v578 = vld [vmem:[%s492 + $0xa4] sm:%s485]
                  %579 = vst [vmem:[%s493 + $0xa8] sm:%s485] %v578
                  %v580 = vld [vmem:[%s492 + $0xb4] sm:%s485]
                  %581 = vst [vmem:[%s493 + $0xac] sm:%s485] %v580
                  %v582 = vld [vmem:[%s492 + $0xa8] sm:%s485]
                  %583 = vst [vmem:[%s493 + $0xb0] sm:%s485] %v582
                  %v584 = vld [vmem:[%s492 + $0xb8] sm:%s485]
                  %585 = vst [vmem:[%s493 + $0xb4] sm:%s485] %v584
                  %v586 = vld [vmem:[%s492 + $0xac] sm:%s485]
                  %587 = vst [vmem:[%s493 + $0xb8] sm:%s485] %v586
                  %v588 = vld [vmem:[%s492 + $0xbc] sm:%s485]
                  %589 = vst [vmem:[%s493 + $0xbc] sm:%s485] %v588
                  %v590 = vld [vmem:[%s492 + $0xc0] sm:%s485]
                  %591 = vst [vmem:[%s493 + $0xc0] sm:%s485] %v590
                  %v592 = vld [vmem:[%s492 + $0xd0] sm:%s485]
                  %593 = vst [vmem:[%s493 + $0xc4] sm:%s485] %v592
                  %v594 = vld [vmem:[%s492 + $0xc4] sm:%s485]
                  %595 = vst [vmem:[%s493 + $0xc8] sm:%s485] %v594
                  %v596 = vld [vmem:[%s492 + $0xd4] sm:%s485]
                  %597 = vst [vmem:[%s493 + $0xcc] sm:%s485] %v596
                  %v598 = vld [vmem:[%s492 + $0xc8] sm:%s485]
                  %599 = vst [vmem:[%s493 + $0xd0] sm:%s485] %v598
                  %v600 = vld [vmem:[%s492 + $0xd8] sm:%s485]
                  %601 = vst [vmem:[%s493 + $0xd4] sm:%s485] %v600
                  %v602 = vld [vmem:[%s492 + $0xcc] sm:%s485]
                  %603 = vst [vmem:[%s493 + $0xd8] sm:%s485] %v602
                  %v604 = vld [vmem:[%s492 + $0xdc] sm:%s485]
                  %605 = vst [vmem:[%s493 + $0xdc] sm:%s485] %v604
                  %v606 = vld [vmem:[%s492 + $0xe0] sm:%s485]
                  %607 = vst [vmem:[%s493 + $0xe0] sm:%s485] %v606
                  %v608 = vld [vmem:[%s492 + $0xf0] sm:%s485]
                  %609 = vst [vmem:[%s493 + $0xe4] sm:%s485] %v608
                  %v610 = vld [vmem:[%s492 + $0xe4] sm:%s485]
                  %611 = vst [vmem:[%s493 + $0xe8] sm:%s485] %v610
                  %v612 = vld [vmem:[%s492 + $0xf4] sm:%s485]
                  %613 = vst [vmem:[%s493 + $0xec] sm:%s485] %v612
                  %v614 = vld [vmem:[%s492 + $0xe8] sm:%s485]
                  %615 = vst [vmem:[%s493 + $0xf0] sm:%s485] %v614
                  %v616 = vld [vmem:[%s492 + $0xf8] sm:%s485]
                  %617 = vst [vmem:[%s493 + $0xf4] sm:%s485] %v616
                  %v618 = vld [vmem:[%s492 + $0xec] sm:%s485]
                  %619 = vst [vmem:[%s493 + $0xf8] sm:%s485] %v618
                  %v620 = vld [vmem:[%s492 + $0xfc] sm:%s485]
                  %621 = vst [vmem:[%s493 + $0xfc] sm:%s485] %v620
                $region114: #{stackedrnns_forward.2} parent=101 // loop_footer
                  %s491 = sadd.s32 1, %s487
                $region115: #{stackedrnns_forward.2} parent=101 // loop_footer_branch
                  %486 = sbr.rel target = $region111
                $region116: #{stackedrnns_forward.2} parent=101 // loop_exit
                  _
              $region102: #{stackedrnns_forward.2} parent=86 // pred_fallthru
                _
            $region87: #{stackedrnns_forward.2} parent=83 // pred_fallthru
              _
            // Predicated region
            $region88: #{stackedrnns_forward.2} parent=83 // pred_check
              %p327 = pneg %p323
            $region89: #{stackedrnns_forward.2} parent=83 // pred_check_branch
              %329 = sbr.rel (%p327) target = $region91
            $region90: #{stackedrnns_forward.2} parent=83 // pred_region
              %s330 = sshllo.u32 0, 4
              loop: start=0, step=1, limit=1
              $region92: #{stackedrnns_forward.2} parent=90 // loop_pre_header
                _
              $region93: #{stackedrnns_forward.2} parent=90 // loop_header
                %s332 = sphi 0, %s336
                %p333 = scmp.ge.s32.totalorder %s332, 1
                %s337 = sphi %s3, %s3
                %s338 = sphi [#allocation2], [#allocation2]
              $region94: #{stackedrnns_forward.2} parent=90 // loop_header_branch
                %335 = sbr.rel (%p333) target = $region98
              $region95: #{stackedrnns_forward.2} parent=90 // loop_body
                %v339 = vld [vmem:[%s337] sm:%s330]
                %340 = vst [vmem:[%s338] sm:%s330] %v339
                %v341 = vld [vmem:[%s337 + $0x10] sm:%s330]
                %342 = vst [vmem:[%s338 + $0x4] sm:%s330] %v341
                %v343 = vld [vmem:[%s337 + $0x4] sm:%s330]
                %344 = vst [vmem:[%s338 + $0x8] sm:%s330] %v343
                %v345 = vld [vmem:[%s337 + $0x14] sm:%s330]
                %346 = vst [vmem:[%s338 + $0xc] sm:%s330] %v345
                %v347 = vld [vmem:[%s337 + $0x8] sm:%s330]
                %348 = vst [vmem:[%s338 + $0x10] sm:%s330] %v347
                %v349 = vld [vmem:[%s337 + $0x18] sm:%s330]
                %350 = vst [vmem:[%s338 + $0x14] sm:%s330] %v349
                %v351 = vld [vmem:[%s337 + $0xc] sm:%s330]
                %352 = vst [vmem:[%s338 + $0x18] sm:%s330] %v351
                %v353 = vld [vmem:[%s337 + $0x1c] sm:%s330]
                %354 = vst [vmem:[%s338 + $0x1c] sm:%s330] %v353
                %v355 = vld [vmem:[%s337 + $0x20] sm:%s330]
                %356 = vst [vmem:[%s338 + $0x20] sm:%s330] %v355
                %v357 = vld [vmem:[%s337 + $0x30] sm:%s330]
                %358 = vst [vmem:[%s338 + $0x24] sm:%s330] %v357
                %v359 = vld [vmem:[%s337 + $0x24] sm:%s330]
                %360 = vst [vmem:[%s338 + $0x28] sm:%s330] %v359
                %v361 = vld [vmem:[%s337 + $0x34] sm:%s330]
                %362 = vst [vmem:[%s338 + $0x2c] sm:%s330] %v361
                %v363 = vld [vmem:[%s337 + $0x28] sm:%s330]
                %364 = vst [vmem:[%s338 + $0x30] sm:%s330] %v363
                %v365 = vld [vmem:[%s337 + $0x38] sm:%s330]
                %366 = vst [vmem:[%s338 + $0x34] sm:%s330] %v365
                %v367 = vld [vmem:[%s337 + $0x2c] sm:%s330]
                %368 = vst [vmem:[%s338 + $0x38] sm:%s330] %v367
                %v369 = vld [vmem:[%s337 + $0x3c] sm:%s330]
                %370 = vst [vmem:[%s338 + $0x3c] sm:%s330] %v369
                %v371 = vld [vmem:[%s337 + $0x40] sm:%s330]
                %372 = vst [vmem:[%s338 + $0x40] sm:%s330] %v371
                %v373 = vld [vmem:[%s337 + $0x50] sm:%s330]
                %374 = vst [vmem:[%s338 + $0x44] sm:%s330] %v373
                %v375 = vld [vmem:[%s337 + $0x44] sm:%s330]
                %376 = vst [vmem:[%s338 + $0x48] sm:%s330] %v375
                %v377 = vld [vmem:[%s337 + $0x54] sm:%s330]
                %378 = vst [vmem:[%s338 + $0x4c] sm:%s330] %v377
                %v379 = vld [vmem:[%s337 + $0x48] sm:%s330]
                %380 = vst [vmem:[%s338 + $0x50] sm:%s330] %v379
                %v381 = vld [vmem:[%s337 + $0x58] sm:%s330]
                %382 = vst [vmem:[%s338 + $0x54] sm:%s330] %v381
                %v383 = vld [vmem:[%s337 + $0x4c] sm:%s330]
                %384 = vst [vmem:[%s338 + $0x58] sm:%s330] %v383
                %v385 = vld [vmem:[%s337 + $0x5c] sm:%s330]
                %386 = vst [vmem:[%s338 + $0x5c] sm:%s330] %v385
                %v387 = vld [vmem:[%s337 + $0x60] sm:%s330]
                %388 = vst [vmem:[%s338 + $0x60] sm:%s330] %v387
                %v389 = vld [vmem:[%s337 + $0x70] sm:%s330]
                %390 = vst [vmem:[%s338 + $0x64] sm:%s330] %v389
                %v391 = vld [vmem:[%s337 + $0x64] sm:%s330]
                %392 = vst [vmem:[%s338 + $0x68] sm:%s330] %v391
                %v393 = vld [vmem:[%s337 + $0x74] sm:%s330]
                %394 = vst [vmem:[%s338 + $0x6c] sm:%s330] %v393
                %v395 = vld [vmem:[%s337 + $0x68] sm:%s330]
                %396 = vst [vmem:[%s338 + $0x70] sm:%s330] %v395
                %v397 = vld [vmem:[%s337 + $0x78] sm:%s330]
                %398 = vst [vmem:[%s338 + $0x74] sm:%s330] %v397
                %v399 = vld [vmem:[%s337 + $0x6c] sm:%s330]
                %400 = vst [vmem:[%s338 + $0x78] sm:%s330] %v399
                %v401 = vld [vmem:[%s337 + $0x7c] sm:%s330]
                %402 = vst [vmem:[%s338 + $0x7c] sm:%s330] %v401
                %v403 = vld [vmem:[%s337 + $0x80] sm:%s330]
                %404 = vst [vmem:[%s338 + $0x80] sm:%s330] %v403
                %v405 = vld [vmem:[%s337 + $0x90] sm:%s330]
                %406 = vst [vmem:[%s338 + $0x84] sm:%s330] %v405
                %v407 = vld [vmem:[%s337 + $0x84] sm:%s330]
                %408 = vst [vmem:[%s338 + $0x88] sm:%s330] %v407
                %v409 = vld [vmem:[%s337 + $0x94] sm:%s330]
                %410 = vst [vmem:[%s338 + $0x8c] sm:%s330] %v409
                %v411 = vld [vmem:[%s337 + $0x88] sm:%s330]
                %412 = vst [vmem:[%s338 + $0x90] sm:%s330] %v411
                %v413 = vld [vmem:[%s337 + $0x98] sm:%s330]
                %414 = vst [vmem:[%s338 + $0x94] sm:%s330] %v413
                %v415 = vld [vmem:[%s337 + $0x8c] sm:%s330]
                %416 = vst [vmem:[%s338 + $0x98] sm:%s330] %v415
                %v417 = vld [vmem:[%s337 + $0x9c] sm:%s330]
                %418 = vst [vmem:[%s338 + $0x9c] sm:%s330] %v417
                %v419 = vld [vmem:[%s337 + $0xa0] sm:%s330]
                %420 = vst [vmem:[%s338 + $0xa0] sm:%s330] %v419
                %v421 = vld [vmem:[%s337 + $0xb0] sm:%s330]
                %422 = vst [vmem:[%s338 + $0xa4] sm:%s330] %v421
                %v423 = vld [vmem:[%s337 + $0xa4] sm:%s330]
                %424 = vst [vmem:[%s338 + $0xa8] sm:%s330] %v423
                %v425 = vld [vmem:[%s337 + $0xb4] sm:%s330]
                %426 = vst [vmem:[%s338 + $0xac] sm:%s330] %v425
                %v427 = vld [vmem:[%s337 + $0xa8] sm:%s330]
                %428 = vst [vmem:[%s338 + $0xb0] sm:%s330] %v427
                %v429 = vld [vmem:[%s337 + $0xb8] sm:%s330]
                %430 = vst [vmem:[%s338 + $0xb4] sm:%s330] %v429
                %v431 = vld [vmem:[%s337 + $0xac] sm:%s330]
                %432 = vst [vmem:[%s338 + $0xb8] sm:%s330] %v431
                %v433 = vld [vmem:[%s337 + $0xbc] sm:%s330]
                %434 = vst [vmem:[%s338 + $0xbc] sm:%s330] %v433
                %v435 = vld [vmem:[%s337 + $0xc0] sm:%s330]
                %436 = vst [vmem:[%s338 + $0xc0] sm:%s330] %v435
                %v437 = vld [vmem:[%s337 + $0xd0] sm:%s330]
                %438 = vst [vmem:[%s338 + $0xc4] sm:%s330] %v437
                %v439 = vld [vmem:[%s337 + $0xc4] sm:%s330]
                %440 = vst [vmem:[%s338 + $0xc8] sm:%s330] %v439
                %v441 = vld [vmem:[%s337 + $0xd4] sm:%s330]
                %442 = vst [vmem:[%s338 + $0xcc] sm:%s330] %v441
                %v443 = vld [vmem:[%s337 + $0xc8] sm:%s330]
                %444 = vst [vmem:[%s338 + $0xd0] sm:%s330] %v443
                %v445 = vld [vmem:[%s337 + $0xd8] sm:%s330]
                %446 = vst [vmem:[%s338 + $0xd4] sm:%s330] %v445
                %v447 = vld [vmem:[%s337 + $0xcc] sm:%s330]
                %448 = vst [vmem:[%s338 + $0xd8] sm:%s330] %v447
                %v449 = vld [vmem:[%s337 + $0xdc] sm:%s330]
                %450 = vst [vmem:[%s338 + $0xdc] sm:%s330] %v449
                %v451 = vld [vmem:[%s337 + $0xe0] sm:%s330]
                %452 = vst [vmem:[%s338 + $0xe0] sm:%s330] %v451
                %v453 = vld [vmem:[%s337 + $0xf0] sm:%s330]
                %454 = vst [vmem:[%s338 + $0xe4] sm:%s330] %v453
                %v455 = vld [vmem:[%s337 + $0xe4] sm:%s330]
                %456 = vst [vmem:[%s338 + $0xe8] sm:%s330] %v455
                %v457 = vld [vmem:[%s337 + $0xf4] sm:%s330]
                %458 = vst [vmem:[%s338 + $0xec] sm:%s330] %v457
                %v459 = vld [vmem:[%s337 + $0xe8] sm:%s330]
                %460 = vst [vmem:[%s338 + $0xf0] sm:%s330] %v459
                %v461 = vld [vmem:[%s337 + $0xf8] sm:%s330]
                %462 = vst [vmem:[%s338 + $0xf4] sm:%s330] %v461
                %v463 = vld [vmem:[%s337 + $0xec] sm:%s330]
                %464 = vst [vmem:[%s338 + $0xf8] sm:%s330] %v463
                %v465 = vld [vmem:[%s337 + $0xfc] sm:%s330]
                %466 = vst [vmem:[%s338 + $0xfc] sm:%s330] %v465
              $region96: #{stackedrnns_forward.2} parent=90 // loop_footer
                %s336 = sadd.s32 1, %s332
              $region97: #{stackedrnns_forward.2} parent=90 // loop_footer_branch
                %331 = sbr.rel target = $region93
              $region98: #{stackedrnns_forward.2} parent=90 // loop_exit
                _
            $region91: #{stackedrnns_forward.2} parent=83 // pred_fallthru
              _
            // Predicated region
            $region117: #{stackedrnns_forward.2} parent=83 // pred_check
              _
            $region118: #{stackedrnns_forward.2} parent=83 // pred_check_branch
              %624 = sbr.rel (0) target = $region120
            $region119: #{stackedrnns_forward.2} parent=83 // pred_region
              %625 = vsyncadd [#allocation10], 4096
            $region120: #{stackedrnns_forward.2} parent=83 // pred_fallthru
              _
            %s626 = smul.u32 4, 16
            %s627 = smul.u32 %s626, 4
            %s628 = sshll.u32 %s627, 4
            %629 = dma.done [#allocation10], %s628
          $region121: #{stackedrnns_forward.2} parent=81
            #allocation12 [shape = 's32[1]{0}', space=sflag, size = 0x4, scoped, tag = 'scoped memory for stackedrnns_forward.2']
            %p631 = scmp.lt.u32.totalorder 4, 8
            %p632 = pneg %p631
            // Predicated region
            $region122: #{stackedrnns_forward.2} parent=121 // pred_check
              _
            $region123: #{stackedrnns_forward.2} parent=121 // pred_check_branch
              %634 = sbr.rel (%p631) target = $region125
            $region124: #{stackedrnns_forward.2} parent=121 // pred_region
              %s775 = sand.u32 4, 7
              %p776 = scmp.eq.s32.totalorder %s775, 0
              %p777 = pneg %p776
              // Predicated region
              $region137: #{stackedrnns_forward.2} parent=124 // pred_check
                _
              $region138: #{stackedrnns_forward.2} parent=124 // pred_check_branch
                %779 = sbr.rel (%p776) target = $region140
              $region139: #{stackedrnns_forward.2} parent=124 // pred_region
                %s780 = sand.u32 4, 7
                %s781 = ssub.s32 4, %s780
                %s782 = scalar_lea.vmem %s4, %s781
                %s783 = ssub.s32 4, %s780
                %s784 = scalar_lea.vmem [#allocation3], %s783
                loop: start=0, step=1, limit=1
                $region141: #{stackedrnns_forward.2} parent=139 // loop_pre_header
                  _
                $region142: #{stackedrnns_forward.2} parent=139 // loop_header
                  %s786 = sphi 0, %s790
                  %p787 = scmp.ge.s32.totalorder %s786, 1
                  %s791 = sphi %s4, %s4
                  %s792 = sphi [#allocation3], [#allocation3]
                $region143: #{stackedrnns_forward.2} parent=139 // loop_header_branch
                  %789 = sbr.rel (%p787) target = $region147
                $region144: #{stackedrnns_forward.2} parent=139 // loop_body
                  _
                $region145: #{stackedrnns_forward.2} parent=139 // loop_footer
                  %s790 = sadd.s32 1, %s786
                $region146: #{stackedrnns_forward.2} parent=139 // loop_footer_branch
                  %785 = sbr.rel target = $region142
                $region147: #{stackedrnns_forward.2} parent=139 // loop_exit
                  _
                %s793 = sshllo.u32 0, %s780
                loop: start=0, step=1, limit=1
                $region148: #{stackedrnns_forward.2} parent=139 // loop_pre_header
                  _
                $region149: #{stackedrnns_forward.2} parent=139 // loop_header
                  %s795 = sphi 0, %s799
                  %p796 = scmp.ge.s32.totalorder %s795, 1
                  %s800 = sphi %s782, %s782
                  %s801 = sphi %s784, %s784
                $region150: #{stackedrnns_forward.2} parent=139 // loop_header_branch
                  %798 = sbr.rel (%p796) target = $region154
                $region151: #{stackedrnns_forward.2} parent=139 // loop_body
                  %v802 = vld [vmem:[%s800] sm:%s793]
                  %803 = vst [vmem:[%s801] sm:%s793] %v802
                  %v804 = vld [vmem:[%s800 + $0x10] sm:%s793]
                  %805 = vst [vmem:[%s801 + $0x4] sm:%s793] %v804
                  %v806 = vld [vmem:[%s800 + $0x4] sm:%s793]
                  %807 = vst [vmem:[%s801 + $0x8] sm:%s793] %v806
                  %v808 = vld [vmem:[%s800 + $0x14] sm:%s793]
                  %809 = vst [vmem:[%s801 + $0xc] sm:%s793] %v808
                  %v810 = vld [vmem:[%s800 + $0x8] sm:%s793]
                  %811 = vst [vmem:[%s801 + $0x10] sm:%s793] %v810
                  %v812 = vld [vmem:[%s800 + $0x18] sm:%s793]
                  %813 = vst [vmem:[%s801 + $0x14] sm:%s793] %v812
                  %v814 = vld [vmem:[%s800 + $0xc] sm:%s793]
                  %815 = vst [vmem:[%s801 + $0x18] sm:%s793] %v814
                  %v816 = vld [vmem:[%s800 + $0x1c] sm:%s793]
                  %817 = vst [vmem:[%s801 + $0x1c] sm:%s793] %v816
                  %v818 = vld [vmem:[%s800 + $0x20] sm:%s793]
                  %819 = vst [vmem:[%s801 + $0x20] sm:%s793] %v818
                  %v820 = vld [vmem:[%s800 + $0x30] sm:%s793]
                  %821 = vst [vmem:[%s801 + $0x24] sm:%s793] %v820
                  %v822 = vld [vmem:[%s800 + $0x24] sm:%s793]
                  %823 = vst [vmem:[%s801 + $0x28] sm:%s793] %v822
                  %v824 = vld [vmem:[%s800 + $0x34] sm:%s793]
                  %825 = vst [vmem:[%s801 + $0x2c] sm:%s793] %v824
                  %v826 = vld [vmem:[%s800 + $0x28] sm:%s793]
                  %827 = vst [vmem:[%s801 + $0x30] sm:%s793] %v826
                  %v828 = vld [vmem:[%s800 + $0x38] sm:%s793]
                  %829 = vst [vmem:[%s801 + $0x34] sm:%s793] %v828
                  %v830 = vld [vmem:[%s800 + $0x2c] sm:%s793]
                  %831 = vst [vmem:[%s801 + $0x38] sm:%s793] %v830
                  %v832 = vld [vmem:[%s800 + $0x3c] sm:%s793]
                  %833 = vst [vmem:[%s801 + $0x3c] sm:%s793] %v832
                  %v834 = vld [vmem:[%s800 + $0x40] sm:%s793]
                  %835 = vst [vmem:[%s801 + $0x40] sm:%s793] %v834
                  %v836 = vld [vmem:[%s800 + $0x50] sm:%s793]
                  %837 = vst [vmem:[%s801 + $0x44] sm:%s793] %v836
                  %v838 = vld [vmem:[%s800 + $0x44] sm:%s793]
                  %839 = vst [vmem:[%s801 + $0x48] sm:%s793] %v838
                  %v840 = vld [vmem:[%s800 + $0x54] sm:%s793]
                  %841 = vst [vmem:[%s801 + $0x4c] sm:%s793] %v840
                  %v842 = vld [vmem:[%s800 + $0x48] sm:%s793]
                  %843 = vst [vmem:[%s801 + $0x50] sm:%s793] %v842
                  %v844 = vld [vmem:[%s800 + $0x58] sm:%s793]
                  %845 = vst [vmem:[%s801 + $0x54] sm:%s793] %v844
                  %v846 = vld [vmem:[%s800 + $0x4c] sm:%s793]
                  %847 = vst [vmem:[%s801 + $0x58] sm:%s793] %v846
                  %v848 = vld [vmem:[%s800 + $0x5c] sm:%s793]
                  %849 = vst [vmem:[%s801 + $0x5c] sm:%s793] %v848
                  %v850 = vld [vmem:[%s800 + $0x60] sm:%s793]
                  %851 = vst [vmem:[%s801 + $0x60] sm:%s793] %v850
                  %v852 = vld [vmem:[%s800 + $0x70] sm:%s793]
                  %853 = vst [vmem:[%s801 + $0x64] sm:%s793] %v852
                  %v854 = vld [vmem:[%s800 + $0x64] sm:%s793]
                  %855 = vst [vmem:[%s801 + $0x68] sm:%s793] %v854
                  %v856 = vld [vmem:[%s800 + $0x74] sm:%s793]
                  %857 = vst [vmem:[%s801 + $0x6c] sm:%s793] %v856
                  %v858 = vld [vmem:[%s800 + $0x68] sm:%s793]
                  %859 = vst [vmem:[%s801 + $0x70] sm:%s793] %v858
                  %v860 = vld [vmem:[%s800 + $0x78] sm:%s793]
                  %861 = vst [vmem:[%s801 + $0x74] sm:%s793] %v860
                  %v862 = vld [vmem:[%s800 + $0x6c] sm:%s793]
                  %863 = vst [vmem:[%s801 + $0x78] sm:%s793] %v862
                  %v864 = vld [vmem:[%s800 + $0x7c] sm:%s793]
                  %865 = vst [vmem:[%s801 + $0x7c] sm:%s793] %v864
                  %v866 = vld [vmem:[%s800 + $0x80] sm:%s793]
                  %867 = vst [vmem:[%s801 + $0x80] sm:%s793] %v866
                  %v868 = vld [vmem:[%s800 + $0x90] sm:%s793]
                  %869 = vst [vmem:[%s801 + $0x84] sm:%s793] %v868
                  %v870 = vld [vmem:[%s800 + $0x84] sm:%s793]
                  %871 = vst [vmem:[%s801 + $0x88] sm:%s793] %v870
                  %v872 = vld [vmem:[%s800 + $0x94] sm:%s793]
                  %873 = vst [vmem:[%s801 + $0x8c] sm:%s793] %v872
                  %v874 = vld [vmem:[%s800 + $0x88] sm:%s793]
                  %875 = vst [vmem:[%s801 + $0x90] sm:%s793] %v874
                  %v876 = vld [vmem:[%s800 + $0x98] sm:%s793]
                  %877 = vst [vmem:[%s801 + $0x94] sm:%s793] %v876
                  %v878 = vld [vmem:[%s800 + $0x8c] sm:%s793]
                  %879 = vst [vmem:[%s801 + $0x98] sm:%s793] %v878
                  %v880 = vld [vmem:[%s800 + $0x9c] sm:%s793]
                  %881 = vst [vmem:[%s801 + $0x9c] sm:%s793] %v880
                  %v882 = vld [vmem:[%s800 + $0xa0] sm:%s793]
                  %883 = vst [vmem:[%s801 + $0xa0] sm:%s793] %v882
                  %v884 = vld [vmem:[%s800 + $0xb0] sm:%s793]
                  %885 = vst [vmem:[%s801 + $0xa4] sm:%s793] %v884
                  %v886 = vld [vmem:[%s800 + $0xa4] sm:%s793]
                  %887 = vst [vmem:[%s801 + $0xa8] sm:%s793] %v886
                  %v888 = vld [vmem:[%s800 + $0xb4] sm:%s793]
                  %889 = vst [vmem:[%s801 + $0xac] sm:%s793] %v888
                  %v890 = vld [vmem:[%s800 + $0xa8] sm:%s793]
                  %891 = vst [vmem:[%s801 + $0xb0] sm:%s793] %v890
                  %v892 = vld [vmem:[%s800 + $0xb8] sm:%s793]
                  %893 = vst [vmem:[%s801 + $0xb4] sm:%s793] %v892
                  %v894 = vld [vmem:[%s800 + $0xac] sm:%s793]
                  %895 = vst [vmem:[%s801 + $0xb8] sm:%s793] %v894
                  %v896 = vld [vmem:[%s800 + $0xbc] sm:%s793]
                  %897 = vst [vmem:[%s801 + $0xbc] sm:%s793] %v896
                  %v898 = vld [vmem:[%s800 + $0xc0] sm:%s793]
                  %899 = vst [vmem:[%s801 + $0xc0] sm:%s793] %v898
                  %v900 = vld [vmem:[%s800 + $0xd0] sm:%s793]
                  %901 = vst [vmem:[%s801 + $0xc4] sm:%s793] %v900
                  %v902 = vld [vmem:[%s800 + $0xc4] sm:%s793]
                  %903 = vst [vmem:[%s801 + $0xc8] sm:%s793] %v902
                  %v904 = vld [vmem:[%s800 + $0xd4] sm:%s793]
                  %905 = vst [vmem:[%s801 + $0xcc] sm:%s793] %v904
                  %v906 = vld [vmem:[%s800 + $0xc8] sm:%s793]
                  %907 = vst [vmem:[%s801 + $0xd0] sm:%s793] %v906
                  %v908 = vld [vmem:[%s800 + $0xd8] sm:%s793]
                  %909 = vst [vmem:[%s801 + $0xd4] sm:%s793] %v908
                  %v910 = vld [vmem:[%s800 + $0xcc] sm:%s793]
                  %911 = vst [vmem:[%s801 + $0xd8] sm:%s793] %v910
                  %v912 = vld [vmem:[%s800 + $0xdc] sm:%s793]
                  %913 = vst [vmem:[%s801 + $0xdc] sm:%s793] %v912
                  %v914 = vld [vmem:[%s800 + $0xe0] sm:%s793]
                  %915 = vst [vmem:[%s801 + $0xe0] sm:%s793] %v914
                  %v916 = vld [vmem:[%s800 + $0xf0] sm:%s793]
                  %917 = vst [vmem:[%s801 + $0xe4] sm:%s793] %v916
                  %v918 = vld [vmem:[%s800 + $0xe4] sm:%s793]
                  %919 = vst [vmem:[%s801 + $0xe8] sm:%s793] %v918
                  %v920 = vld [vmem:[%s800 + $0xf4] sm:%s793]
                  %921 = vst [vmem:[%s801 + $0xec] sm:%s793] %v920
                  %v922 = vld [vmem:[%s800 + $0xe8] sm:%s793]
                  %923 = vst [vmem:[%s801 + $0xf0] sm:%s793] %v922
                  %v924 = vld [vmem:[%s800 + $0xf8] sm:%s793]
                  %925 = vst [vmem:[%s801 + $0xf4] sm:%s793] %v924
                  %v926 = vld [vmem:[%s800 + $0xec] sm:%s793]
                  %927 = vst [vmem:[%s801 + $0xf8] sm:%s793] %v926
                  %v928 = vld [vmem:[%s800 + $0xfc] sm:%s793]
                  %929 = vst [vmem:[%s801 + $0xfc] sm:%s793] %v928
                $region152: #{stackedrnns_forward.2} parent=139 // loop_footer
                  %s799 = sadd.s32 1, %s795
                $region153: #{stackedrnns_forward.2} parent=139 // loop_footer_branch
                  %794 = sbr.rel target = $region149
                $region154: #{stackedrnns_forward.2} parent=139 // loop_exit
                  _
              $region140: #{stackedrnns_forward.2} parent=124 // pred_fallthru
                _
            $region125: #{stackedrnns_forward.2} parent=121 // pred_fallthru
              _
            // Predicated region
            $region126: #{stackedrnns_forward.2} parent=121 // pred_check
              %p635 = pneg %p631
            $region127: #{stackedrnns_forward.2} parent=121 // pred_check_branch
              %637 = sbr.rel (%p635) target = $region129
            $region128: #{stackedrnns_forward.2} parent=121 // pred_region
              %s638 = sshllo.u32 0, 4
              loop: start=0, step=1, limit=1
              $region130: #{stackedrnns_forward.2} parent=128 // loop_pre_header
                _
              $region131: #{stackedrnns_forward.2} parent=128 // loop_header
                %s640 = sphi 0, %s644
                %p641 = scmp.ge.s32.totalorder %s640, 1
                %s645 = sphi %s4, %s4
                %s646 = sphi [#allocation3], [#allocation3]
              $region132: #{stackedrnns_forward.2} parent=128 // loop_header_branch
                %643 = sbr.rel (%p641) target = $region136
              $region133: #{stackedrnns_forward.2} parent=128 // loop_body
                %v647 = vld [vmem:[%s645] sm:%s638]
                %648 = vst [vmem:[%s646] sm:%s638] %v647
                %v649 = vld [vmem:[%s645 + $0x10] sm:%s638]
                %650 = vst [vmem:[%s646 + $0x4] sm:%s638] %v649
                %v651 = vld [vmem:[%s645 + $0x4] sm:%s638]
                %652 = vst [vmem:[%s646 + $0x8] sm:%s638] %v651
                %v653 = vld [vmem:[%s645 + $0x14] sm:%s638]
                %654 = vst [vmem:[%s646 + $0xc] sm:%s638] %v653
                %v655 = vld [vmem:[%s645 + $0x8] sm:%s638]
                %656 = vst [vmem:[%s646 + $0x10] sm:%s638] %v655
                %v657 = vld [vmem:[%s645 + $0x18] sm:%s638]
                %658 = vst [vmem:[%s646 + $0x14] sm:%s638] %v657
                %v659 = vld [vmem:[%s645 + $0xc] sm:%s638]
                %660 = vst [vmem:[%s646 + $0x18] sm:%s638] %v659
                %v661 = vld [vmem:[%s645 + $0x1c] sm:%s638]
                %662 = vst [vmem:[%s646 + $0x1c] sm:%s638] %v661
                %v663 = vld [vmem:[%s645 + $0x20] sm:%s638]
                %664 = vst [vmem:[%s646 + $0x20] sm:%s638] %v663
                %v665 = vld [vmem:[%s645 + $0x30] sm:%s638]
                %666 = vst [vmem:[%s646 + $0x24] sm:%s638] %v665
                %v667 = vld [vmem:[%s645 + $0x24] sm:%s638]
                %668 = vst [vmem:[%s646 + $0x28] sm:%s638] %v667
                %v669 = vld [vmem:[%s645 + $0x34] sm:%s638]
                %670 = vst [vmem:[%s646 + $0x2c] sm:%s638] %v669
                %v671 = vld [vmem:[%s645 + $0x28] sm:%s638]
                %672 = vst [vmem:[%s646 + $0x30] sm:%s638] %v671
                %v673 = vld [vmem:[%s645 + $0x38] sm:%s638]
                %674 = vst [vmem:[%s646 + $0x34] sm:%s638] %v673
                %v675 = vld [vmem:[%s645 + $0x2c] sm:%s638]
                %676 = vst [vmem:[%s646 + $0x38] sm:%s638] %v675
                %v677 = vld [vmem:[%s645 + $0x3c] sm:%s638]
                %678 = vst [vmem:[%s646 + $0x3c] sm:%s638] %v677
                %v679 = vld [vmem:[%s645 + $0x40] sm:%s638]
                %680 = vst [vmem:[%s646 + $0x40] sm:%s638] %v679
                %v681 = vld [vmem:[%s645 + $0x50] sm:%s638]
                %682 = vst [vmem:[%s646 + $0x44] sm:%s638] %v681
                %v683 = vld [vmem:[%s645 + $0x44] sm:%s638]
                %684 = vst [vmem:[%s646 + $0x48] sm:%s638] %v683
                %v685 = vld [vmem:[%s645 + $0x54] sm:%s638]
                %686 = vst [vmem:[%s646 + $0x4c] sm:%s638] %v685
                %v687 = vld [vmem:[%s645 + $0x48] sm:%s638]
                %688 = vst [vmem:[%s646 + $0x50] sm:%s638] %v687
                %v689 = vld [vmem:[%s645 + $0x58] sm:%s638]
                %690 = vst [vmem:[%s646 + $0x54] sm:%s638] %v689
                %v691 = vld [vmem:[%s645 + $0x4c] sm:%s638]
                %692 = vst [vmem:[%s646 + $0x58] sm:%s638] %v691
                %v693 = vld [vmem:[%s645 + $0x5c] sm:%s638]
                %694 = vst [vmem:[%s646 + $0x5c] sm:%s638] %v693
                %v695 = vld [vmem:[%s645 + $0x60] sm:%s638]
                %696 = vst [vmem:[%s646 + $0x60] sm:%s638] %v695
                %v697 = vld [vmem:[%s645 + $0x70] sm:%s638]
                %698 = vst [vmem:[%s646 + $0x64] sm:%s638] %v697
                %v699 = vld [vmem:[%s645 + $0x64] sm:%s638]
                %700 = vst [vmem:[%s646 + $0x68] sm:%s638] %v699
                %v701 = vld [vmem:[%s645 + $0x74] sm:%s638]
                %702 = vst [vmem:[%s646 + $0x6c] sm:%s638] %v701
                %v703 = vld [vmem:[%s645 + $0x68] sm:%s638]
                %704 = vst [vmem:[%s646 + $0x70] sm:%s638] %v703
                %v705 = vld [vmem:[%s645 + $0x78] sm:%s638]
                %706 = vst [vmem:[%s646 + $0x74] sm:%s638] %v705
                %v707 = vld [vmem:[%s645 + $0x6c] sm:%s638]
                %708 = vst [vmem:[%s646 + $0x78] sm:%s638] %v707
                %v709 = vld [vmem:[%s645 + $0x7c] sm:%s638]
                %710 = vst [vmem:[%s646 + $0x7c] sm:%s638] %v709
                %v711 = vld [vmem:[%s645 + $0x80] sm:%s638]
                %712 = vst [vmem:[%s646 + $0x80] sm:%s638] %v711
                %v713 = vld [vmem:[%s645 + $0x90] sm:%s638]
                %714 = vst [vmem:[%s646 + $0x84] sm:%s638] %v713
                %v715 = vld [vmem:[%s645 + $0x84] sm:%s638]
                %716 = vst [vmem:[%s646 + $0x88] sm:%s638] %v715
                %v717 = vld [vmem:[%s645 + $0x94] sm:%s638]
                %718 = vst [vmem:[%s646 + $0x8c] sm:%s638] %v717
                %v719 = vld [vmem:[%s645 + $0x88] sm:%s638]
                %720 = vst [vmem:[%s646 + $0x90] sm:%s638] %v719
                %v721 = vld [vmem:[%s645 + $0x98] sm:%s638]
                %722 = vst [vmem:[%s646 + $0x94] sm:%s638] %v721
                %v723 = vld [vmem:[%s645 + $0x8c] sm:%s638]
                %724 = vst [vmem:[%s646 + $0x98] sm:%s638] %v723
                %v725 = vld [vmem:[%s645 + $0x9c] sm:%s638]
                %726 = vst [vmem:[%s646 + $0x9c] sm:%s638] %v725
                %v727 = vld [vmem:[%s645 + $0xa0] sm:%s638]
                %728 = vst [vmem:[%s646 + $0xa0] sm:%s638] %v727
                %v729 = vld [vmem:[%s645 + $0xb0] sm:%s638]
                %730 = vst [vmem:[%s646 + $0xa4] sm:%s638] %v729
                %v731 = vld [vmem:[%s645 + $0xa4] sm:%s638]
                %732 = vst [vmem:[%s646 + $0xa8] sm:%s638] %v731
                %v733 = vld [vmem:[%s645 + $0xb4] sm:%s638]
                %734 = vst [vmem:[%s646 + $0xac] sm:%s638] %v733
                %v735 = vld [vmem:[%s645 + $0xa8] sm:%s638]
                %736 = vst [vmem:[%s646 + $0xb0] sm:%s638] %v735
                %v737 = vld [vmem:[%s645 + $0xb8] sm:%s638]
                %738 = vst [vmem:[%s646 + $0xb4] sm:%s638] %v737
                %v739 = vld [vmem:[%s645 + $0xac] sm:%s638]
                %740 = vst [vmem:[%s646 + $0xb8] sm:%s638] %v739
                %v741 = vld [vmem:[%s645 + $0xbc] sm:%s638]
                %742 = vst [vmem:[%s646 + $0xbc] sm:%s638] %v741
                %v743 = vld [vmem:[%s645 + $0xc0] sm:%s638]
                %744 = vst [vmem:[%s646 + $0xc0] sm:%s638] %v743
                %v745 = vld [vmem:[%s645 + $0xd0] sm:%s638]
                %746 = vst [vmem:[%s646 + $0xc4] sm:%s638] %v745
                %v747 = vld [vmem:[%s645 + $0xc4] sm:%s638]
                %748 = vst [vmem:[%s646 + $0xc8] sm:%s638] %v747
                %v749 = vld [vmem:[%s645 + $0xd4] sm:%s638]
                %750 = vst [vmem:[%s646 + $0xcc] sm:%s638] %v749
                %v751 = vld [vmem:[%s645 + $0xc8] sm:%s638]
                %752 = vst [vmem:[%s646 + $0xd0] sm:%s638] %v751
                %v753 = vld [vmem:[%s645 + $0xd8] sm:%s638]
                %754 = vst [vmem:[%s646 + $0xd4] sm:%s638] %v753
                %v755 = vld [vmem:[%s645 + $0xcc] sm:%s638]
                %756 = vst [vmem:[%s646 + $0xd8] sm:%s638] %v755
                %v757 = vld [vmem:[%s645 + $0xdc] sm:%s638]
                %758 = vst [vmem:[%s646 + $0xdc] sm:%s638] %v757
                %v759 = vld [vmem:[%s645 + $0xe0] sm:%s638]
                %760 = vst [vmem:[%s646 + $0xe0] sm:%s638] %v759
                %v761 = vld [vmem:[%s645 + $0xf0] sm:%s638]
                %762 = vst [vmem:[%s646 + $0xe4] sm:%s638] %v761
                %v763 = vld [vmem:[%s645 + $0xe4] sm:%s638]
                %764 = vst [vmem:[%s646 + $0xe8] sm:%s638] %v763
                %v765 = vld [vmem:[%s645 + $0xf4] sm:%s638]
                %766 = vst [vmem:[%s646 + $0xec] sm:%s638] %v765
                %v767 = vld [vmem:[%s645 + $0xe8] sm:%s638]
                %768 = vst [vmem:[%s646 + $0xf0] sm:%s638] %v767
                %v769 = vld [vmem:[%s645 + $0xf8] sm:%s638]
                %770 = vst [vmem:[%s646 + $0xf4] sm:%s638] %v769
                %v771 = vld [vmem:[%s645 + $0xec] sm:%s638]
                %772 = vst [vmem:[%s646 + $0xf8] sm:%s638] %v771
                %v773 = vld [vmem:[%s645 + $0xfc] sm:%s638]
                %774 = vst [vmem:[%s646 + $0xfc] sm:%s638] %v773
              $region134: #{stackedrnns_forward.2} parent=128 // loop_footer
                %s644 = sadd.s32 1, %s640
              $region135: #{stackedrnns_forward.2} parent=128 // loop_footer_branch
                %639 = sbr.rel target = $region131
              $region136: #{stackedrnns_forward.2} parent=128 // loop_exit
                _
            $region129: #{stackedrnns_forward.2} parent=121 // pred_fallthru
              _
            // Predicated region
            $region155: #{stackedrnns_forward.2} parent=121 // pred_check
              _
            $region156: #{stackedrnns_forward.2} parent=121 // pred_check_branch
              %932 = sbr.rel (0) target = $region158
            $region157: #{stackedrnns_forward.2} parent=121 // pred_region
              %933 = vsyncadd [#allocation12], 4096
            $region158: #{stackedrnns_forward.2} parent=121 // pred_fallthru
              _
            %s934 = smul.u32 4, 16
            %s935 = smul.u32 %s934, 4
            %s936 = sshll.u32 %s935, 4
            %937 = dma.done [#allocation12], %s936
          %938 = vst [vmem:[#allocation4] sm:$0xff] 0.0
          %939 = vst [vmem:[#allocation5] sm:$0xff] 0.0
          %940 = vst [vmem:[#allocation6] sm:$0xff] 0.0
          %941 = vst [vmem:[#allocation7] sm:$0xff] 0.0
        $region82: #{stackedrnns_forward.2} parent=69 // pred_fallthru
          _
        %v942 = vld [vmem:[%s0] sm:$0xff]
        %v943 = vlaneseq
        %v944 = vand.u32 %v943, 127
        %v945 = vadd.s32 %v944, 128
        %v946 = vadd.s32 %v944, 256
        %v947 = vadd.s32 %v944, 384
        %vm948 = vcmp.ge.s32.totalorder %v944, 256
        %vm949 = vcmp.ge.s32.totalorder %v945, 256
        %vm950 = vcmp.ge.s32.totalorder %v946, 256
        %vm951 = vcmp.ge.s32.totalorder %v947, 256
        %vm952 = vcmp.lt.s32.totalorder %v944, 384
        %vm953 = vcmp.lt.s32.totalorder %v945, 384
        %vm954 = vcmp.lt.s32.totalorder %v946, 384
        %vm955 = vcmp.lt.s32.totalorder %v947, 384
        %vm956 = vmand %vm948, %vm952
        %vm957 = vmand %vm949, %vm953
        %vm958 = vmand %vm950, %vm954
        %vm959 = vmand %vm951, %vm955
        %v960 = vsel %vm956, 1.0, 0.5
        %v961 = vsel %vm957, 1.0, 0.5
        %v962 = vsel %vm958, 1.0, 0.5
        %v963 = vsel %vm959, 1.0, 0.5
        %v964 = vsel %vm956, 0.0, 0.5
        %v965 = vsel %vm957, 0.0, 0.5
        %v966 = vsel %vm958, 0.0, 0.5
        %v967 = vsel %vm959, 0.0, 0.5
        %s968 = smul.u32 %s18, 4
        %v969 = vld [vmem:[#allocation4] sm:$0xff]
        %v970 = vld [vmem:[#allocation5] sm:$0xff]
        %v971 = vld [vmem:[%s260] sm:$0xff]
        %v972 = vld [vmem:[%s260 + $0x8] sm:$0xff]
        %v973 = vunpack.c.l.bf16 %v971
        %v974 = vunpack.c.h.bf16 %v971
        %v975 = vunpack.c.l.bf16 %v972
        %v976 = vunpack.c.h.bf16 %v972
        %v977 = vpack.c.bf16 %v969, %v969
        %v978 = vld [vmem:[#allocation2] sm:$0xff]
        %v979 = vld [vmem:[#allocation2 + $0x8] sm:$0xff]
        %v980 = vld [vmem:[#allocation2 + $0x10] sm:$0xff]
        %v981 = vld [vmem:[#allocation2 + $0x18] sm:$0xff]
        %v982 = vld [vmem:[#allocation2 + $0x20] sm:$0xff]
        %v983 = vld [vmem:[#allocation2 + $0x28] sm:$0xff]
        %v984 = vld [vmem:[#allocation2 + $0x30] sm:$0xff]
        %v985 = vld [vmem:[#allocation2 + $0x38] sm:$0xff]
        %v986 = vld [vmem:[#allocation2 + $0x40] sm:$0xff]
        %v987 = vld [vmem:[#allocation2 + $0x48] sm:$0xff]
        %v988 = vld [vmem:[#allocation2 + $0x50] sm:$0xff]
        %v989 = vld [vmem:[#allocation2 + $0x58] sm:$0xff]
        %v990 = vld [vmem:[#allocation2 + $0x60] sm:$0xff]
        %v991 = vld [vmem:[#allocation2 + $0x68] sm:$0xff]
        %v992 = vld [vmem:[#allocation2 + $0x70] sm:$0xff]
        %v993 = vld [vmem:[#allocation2 + $0x78] sm:$0xff]
        %v994 = vld [vmem:[#allocation2 + $0x80] sm:$0xff]
        %v995 = vld [vmem:[#allocation2 + $0x88] sm:$0xff]
        %v996 = vld [vmem:[#allocation2 + $0x90] sm:$0xff]
        %v997 = vld [vmem:[#allocation2 + $0x98] sm:$0xff]
        %v998 = vld [vmem:[#allocation2 + $0xa0] sm:$0xff]
        %v999 = vld [vmem:[#allocation2 + $0xa8] sm:$0xff]
        %v1000 = vld [vmem:[#allocation2 + $0xb0] sm:$0xff]
        %v1001 = vld [vmem:[#allocation2 + $0xb8] sm:$0xff]
        %v1002 = vld [vmem:[#allocation2 + $0xc0] sm:$0xff]
        %v1003 = vld [vmem:[#allocation2 + $0xc8] sm:$0xff]
        %v1004 = vld [vmem:[#allocation2 + $0xd0] sm:$0xff]
        %v1005 = vld [vmem:[#allocation2 + $0xd8] sm:$0xff]
        %v1006 = vld [vmem:[#allocation2 + $0xe0] sm:$0xff]
        %v1007 = vld [vmem:[#allocation2 + $0xe8] sm:$0xff]
        %v1008 = vld [vmem:[#allocation2 + $0xf0] sm:$0xff]
        %v1009 = vld [vmem:[#allocation2 + $0xf8] sm:$0xff]
        %1010 = vmatprep.subr.bf16.mxu0 %v979
        %1011 = vmatpush1.bf16.msra.mxu0 %v978
        %1012 = vmatprep.subr.bf16.mxu0 %v983
        %1013 = vmatpush1.bf16.msra.mxu0 %v982
        %1014 = vmatprep.subr.bf16.mxu0 %v987
        %1015 = vmatpush1.bf16.msra.mxu0 %v986
        %1016 = vmatprep.subr.bf16.mxu0 %v991
        %1017 = vmatpush1.bf16.msra.mxu0 %v990
        %1018 = vmatprep.subr.bf16.mxu0 %v995
        %1019 = vmatpush1.bf16.msra.mxu0 %v994
        %1020 = vmatprep.subr.bf16.mxu0 %v999
        %1021 = vmatpush1.bf16.msra.mxu0 %v998
        %1022 = vmatprep.subr.bf16.mxu0 %v1003
        %1023 = vmatpush1.bf16.msra.mxu0 %v1002
        %1024 = vmatprep.subr.bf16.mxu0 %v1007
        %1025 = vmatpush1.bf16.msra.mxu0 %v1006
        %1026 = vmatprep.subr.bf16.mxu0 0
        %1027 = vmatpush1.bf16.msra.mxu0 0
        %1028 = vmatprep.subr.bf16.mxu0 0
        %1029 = vmatpush1.bf16.msra.mxu0 0
        %1030 = vmatprep.subr.bf16.mxu0 0
        %1031 = vmatpush1.bf16.msra.mxu0 0
        %1032 = vmatprep.subr.bf16.mxu0 0
        %1033 = vmatpush1.bf16.msra.mxu0 0
        %1034 = vmatprep.subr.bf16.mxu0 0
        %1035 = vmatpush1.bf16.msra.mxu0 0
        %1036 = vmatprep.subr.bf16.mxu0 0
        %1037 = vmatpush1.bf16.msra.mxu0 0
        %1038 = vmatprep.subr.bf16.mxu0 0
        %1039 = vmatpush1.bf16.msra.mxu0 0
        %1040 = vmatprep.subr.bf16.mxu0 0
        %1041 = vmatpush1.bf16.msra.mxu0 0
        %1042 = vmatprep.mubr.bf16.mxu0 0
        %1043 = vmatmul.mubr.bf16.gmra.mrb[0].mxu0 %v977
        %v1044 = vpop.f32.mrb[0].mxu0
        %v1045 = vadd.f32 0.0, %v1044
        %v1046 = vpop.f32.mrb[0].mxu0
        %v1047 = vadd.f32 0.0, %v1046
        %v1048 = vpop.f32.mrb[0].mxu0
        %v1049 = vpop.f32.mrb[0].mxu0
        %1050 = vdwg.mxu0
        %1051 = vmatprep.subr.bf16.mxu0 %v981
        %1052 = vmatpush1.bf16.msra.mxu0 %v980
        %1053 = vmatprep.subr.bf16.mxu0 %v985
        %1054 = vmatpush1.bf16.msra.mxu0 %v984
        %1055 = vmatprep.subr.bf16.mxu0 %v989
        %1056 = vmatpush1.bf16.msra.mxu0 %v988
        %1057 = vmatprep.subr.bf16.mxu0 %v993
        %1058 = vmatpush1.bf16.msra.mxu0 %v992
        %1059 = vmatprep.subr.bf16.mxu0 %v997
        %1060 = vmatpush1.bf16.msra.mxu0 %v996
        %1061 = vmatprep.subr.bf16.mxu0 %v1001
        %1062 = vmatpush1.bf16.msra.mxu0 %v1000
        %1063 = vmatprep.subr.bf16.mxu0 %v1005
        %1064 = vmatpush1.bf16.msra.mxu0 %v1004
        %1065 = vmatprep.subr.bf16.mxu0 %v1009
        %1066 = vmatpush1.bf16.msra.mxu0 %v1008
        %1067 = vmatprep.subr.bf16.mxu0 0
        %1068 = vmatpush1.bf16.msra.mxu0 0
        %1069 = vmatprep.subr.bf16.mxu0 0
        %1070 = vmatpush1.bf16.msra.mxu0 0
        %1071 = vmatprep.subr.bf16.mxu0 0
        %1072 = vmatpush1.bf16.msra.mxu0 0
        %1073 = vmatprep.subr.bf16.mxu0 0
        %1074 = vmatpush1.bf16.msra.mxu0 0
        %1075 = vmatprep.subr.bf16.mxu0 0
        %1076 = vmatpush1.bf16.msra.mxu0 0
        %1077 = vmatprep.subr.bf16.mxu0 0
        %1078 = vmatpush1.bf16.msra.mxu0 0
        %1079 = vmatprep.subr.bf16.mxu0 0
        %1080 = vmatpush1.bf16.msra.mxu0 0
        %1081 = vmatprep.subr.bf16.mxu0 0
        %1082 = vmatpush1.bf16.msra.mxu0 0
        %1083 = vmatprep.mubr.bf16.mxu0 0
        %1084 = vmatmul.mubr.bf16.gmra.mrb[0].mxu0 %v977
        %v1085 = vpop.f32.mrb[0].mxu0
        %v1086 = vadd.f32 0.0, %v1085
        %v1087 = vpop.f32.mrb[0].mxu0
        %v1088 = vadd.f32 0.0, %v1087
        %v1089 = vpop.f32.mrb[0].mxu0
        %v1090 = vpop.f32.mrb[0].mxu0
        %1091 = vdwg.mxu0
        %v1092 = vadd.f32 %v973, %v1045
        %v1093 = vadd.f32 %v974, %v1047
        %v1094 = vadd.f32 %v975, %v1086
        %v1095 = vadd.f32 %v976, %v1088
        %v1096 = vmul.f32 %v1092, %v960
        %v1097 = vmul.f32 %v1093, %v961
        %v1098 = vmul.f32 %v1094, %v962
        %v1099 = vmul.f32 %v1095, %v963
        %v1100 = vtanh.pop %v1096
        %v1101 = vtanh.pop %v1097
        %v1102 = vtanh.pop %v1098
        %v1103 = vtanh.pop %v1099
        %v1104 = vmul.f32 %v1100, %v960
        %v1105 = vmul.f32 %v1101, %v961
        %v1106 = vmul.f32 %v1102, %v962
        %v1107 = vmul.f32 %v1103, %v963
        %v1108 = vadd.f32 %v1104, %v964
        %v1109 = vadd.f32 %v1105, %v965
        %v1110 = vadd.f32 %v1106, %v966
        %v1111 = vadd.f32 %v1107, %v967
        %v1112 = vmul.f32 %v1109, %v970
        %v1113 = vmul.f32 %v1108, %v1110
        %v1114 = vadd.f32 %v1112, %v1113
        %v1115 = vtanh.pop %v1114
        %v1116 = vmul.f32 %v1111, %v1115
        %v1117 = vstv %s968
        %vm1118 = vcmp.gt.s32.totalorder %v942, %v1117
        %v1119 = vsel %vm1118, 1, 0
        %v1120 = vcvt.s32.f32 %v1119
        %1122 = vset.pattern.permute.xlu0 0
        %1123 = vperm.xlu0 %1122, %v1120
        %v1124 = vpop.permute.xlu0 %1123
        %v1126 = vsub.f32 %v1116, %v969
        %v1127 = vmul.f32 %v1124, %v1126
        %v1128 = vadd.f32 %v969, %v1127
        %1129 = vst [vmem:[#allocation4] sm:$0xff] %v1128
        %v1130 = vsub.f32 %v1114, %v970
        %v1131 = vmul.f32 %v1124, %v1130
        %v1132 = vadd.f32 %v970, %v1131
        %1133 = vst [vmem:[#allocation5] sm:$0xff] %v1132
        %v1134 = vmul.f32 %v1124, %v1116
        %v1135 = vpack.c.bf16 %v1134, %v1134
        %1136 = vst [vmem:[%s307] sm:$0xf] %v1135
        %v1137 = vld [vmem:[#allocation6] sm:$0xff]
        %v1138 = vld [vmem:[#allocation7] sm:$0xff]
        %s1139 = scalar_lea.vmem %s267, 48 [#allocation9]
        %v1140 = vld [vmem:[%s1139] sm:$0xff]
        %v1141 = vld [vmem:[%s1139 + $0x8] sm:$0xff]
        %v1142 = vunpack.c.l.bf16 %v1140
        %v1143 = vunpack.c.h.bf16 %v1140
        %v1144 = vunpack.c.l.bf16 %v1141
        %v1145 = vunpack.c.h.bf16 %v1141
        %v1146 = vpack.c.bf16 %v1137, %v1137
        %v1147 = vld [vmem:[#allocation3] sm:$0xff]
        %v1148 = vld [vmem:[#allocation3 + $0x8] sm:$0xff]
        %v1149 = vld [vmem:[#allocation3 + $0x10] sm:$0xff]
        %v1150 = vld [vmem:[#allocation3 + $0x18] sm:$0xff]
        %v1151 = vld [vmem:[#allocation3 + $0x20] sm:$0xff]
        %v1152 = vld [vmem:[#allocation3 + $0x28] sm:$0xff]
        %v1153 = vld [vmem:[#allocation3 + $0x30] sm:$0xff]
        %v1154 = vld [vmem:[#allocation3 + $0x38] sm:$0xff]
        %v1155 = vld [vmem:[#allocation3 + $0x40] sm:$0xff]
        %v1156 = vld [vmem:[#allocation3 + $0x48] sm:$0xff]
        %v1157 = vld [vmem:[#allocation3 + $0x50] sm:$0xff]
        %v1158 = vld [vmem:[#allocation3 + $0x58] sm:$0xff]
        %v1159 = vld [vmem:[#allocation3 + $0x60] sm:$0xff]
        %v1160 = vld [vmem:[#allocation3 + $0x68] sm:$0xff]
        %v1161 = vld [vmem:[#allocation3 + $0x70] sm:$0xff]
        %v1162 = vld [vmem:[#allocation3 + $0x78] sm:$0xff]
        %v1163 = vld [vmem:[#allocation3 + $0x80] sm:$0xff]
        %v1164 = vld [vmem:[#allocation3 + $0x88] sm:$0xff]
        %v1165 = vld [vmem:[#allocation3 + $0x90] sm:$0xff]
        %v1166 = vld [vmem:[#allocation3 + $0x98] sm:$0xff]
        %v1167 = vld [vmem:[#allocation3 + $0xa0] sm:$0xff]
        %v1168 = vld [vmem:[#allocation3 + $0xa8] sm:$0xff]
        %v1169 = vld [vmem:[#allocation3 + $0xb0] sm:$0xff]
        %v1170 = vld [vmem:[#allocation3 + $0xb8] sm:$0xff]
        %v1171 = vld [vmem:[#allocation3 + $0xc0] sm:$0xff]
        %v1172 = vld [vmem:[#allocation3 + $0xc8] sm:$0xff]
        %v1173 = vld [vmem:[#allocation3 + $0xd0] sm:$0xff]
        %v1174 = vld [vmem:[#allocation3 + $0xd8] sm:$0xff]
        %v1175 = vld [vmem:[#allocation3 + $0xe0] sm:$0xff]
        %v1176 = vld [vmem:[#allocation3 + $0xe8] sm:$0xff]
        %v1177 = vld [vmem:[#allocation3 + $0xf0] sm:$0xff]
        %v1178 = vld [vmem:[#allocation3 + $0xf8] sm:$0xff]
        %1179 = vmatprep.subr.bf16.mxu0 %v1148
        %1180 = vmatpush1.bf16.msra.mxu0 %v1147
        %1181 = vmatprep.subr.bf16.mxu0 %v1152
        %1182 = vmatpush1.bf16.msra.mxu0 %v1151
        %1183 = vmatprep.subr.bf16.mxu0 %v1156
        %1184 = vmatpush1.bf16.msra.mxu0 %v1155
        %1185 = vmatprep.subr.bf16.mxu0 %v1160
        %1186 = vmatpush1.bf16.msra.mxu0 %v1159
        %1187 = vmatprep.subr.bf16.mxu0 %v1164
        %1188 = vmatpush1.bf16.msra.mxu0 %v1163
        %1189 = vmatprep.subr.bf16.mxu0 %v1168
        %1190 = vmatpush1.bf16.msra.mxu0 %v1167
        %1191 = vmatprep.subr.bf16.mxu0 %v1172
        %1192 = vmatpush1.bf16.msra.mxu0 %v1171
        %1193 = vmatprep.subr.bf16.mxu0 %v1176
        %1194 = vmatpush1.bf16.msra.mxu0 %v1175
        %1195 = vmatprep.subr.bf16.mxu0 0
        %1196 = vmatpush1.bf16.msra.mxu0 0
        %1197 = vmatprep.subr.bf16.mxu0 0
        %1198 = vmatpush1.bf16.msra.mxu0 0
        %1199 = vmatprep.subr.bf16.mxu0 0
        %1200 = vmatpush1.bf16.msra.mxu0 0
        %1201 = vmatprep.subr.bf16.mxu0 0
        %1202 = vmatpush1.bf16.msra.mxu0 0
        %1203 = vmatprep.subr.bf16.mxu0 0
        %1204 = vmatpush1.bf16.msra.mxu0 0
        %1205 = vmatprep.subr.bf16.mxu0 0
        %1206 = vmatpush1.bf16.msra.mxu0 0
        %1207 = vmatprep.subr.bf16.mxu0 0
        %1208 = vmatpush1.bf16.msra.mxu0 0
        %1209 = vmatprep.subr.bf16.mxu0 0
        %1210 = vmatpush1.bf16.msra.mxu0 0
        %1211 = vmatprep.mubr.bf16.mxu0 0
        %1212 = vmatmul.mubr.bf16.gmra.mrb[0].mxu0 %v1146
        %v1213 = vpop.f32.mrb[0].mxu0
        %v1214 = vadd.f32 0.0, %v1213
        %v1215 = vpop.f32.mrb[0].mxu0
        %v1216 = vadd.f32 0.0, %v1215
        %v1217 = vpop.f32.mrb[0].mxu0
        %v1218 = vpop.f32.mrb[0].mxu0
        %1219 = vdwg.mxu0
        %1220 = vmatprep.subr.bf16.mxu0 %v1150
        %1221 = vmatpush1.bf16.msra.mxu0 %v1149
        %1222 = vmatprep.subr.bf16.mxu0 %v1154
        %1223 = vmatpush1.bf16.msra.mxu0 %v1153
        %1224 = vmatprep.subr.bf16.mxu0 %v1158
        %1225 = vmatpush1.bf16.msra.mxu0 %v1157
        %1226 = vmatprep.subr.bf16.mxu0 %v1162
        %1227 = vmatpush1.bf16.msra.mxu0 %v1161
        %1228 = vmatprep.subr.bf16.mxu0 %v1166
        %1229 = vmatpush1.bf16.msra.mxu0 %v1165
        %1230 = vmatprep.subr.bf16.mxu0 %v1170
        %1231 = vmatpush1.bf16.msra.mxu0 %v1169
        %1232 = vmatprep.subr.bf16.mxu0 %v1174
        %1233 = vmatpush1.bf16.msra.mxu0 %v1173
        %1234 = vmatprep.subr.bf16.mxu0 %v1178
        %1235 = vmatpush1.bf16.msra.mxu0 %v1177
        %1236 = vmatprep.subr.bf16.mxu0 0
        %1237 = vmatpush1.bf16.msra.mxu0 0
        %1238 = vmatprep.subr.bf16.mxu0 0
        %1239 = vmatpush1.bf16.msra.mxu0 0
        %1240 = vmatprep.subr.bf16.mxu0 0
        %1241 = vmatpush1.bf16.msra.mxu0 0
        %1242 = vmatprep.subr.bf16.mxu0 0
        %1243 = vmatpush1.bf16.msra.mxu0 0
        %1244 = vmatprep.subr.bf16.mxu0 0
        %1245 = vmatpush1.bf16.msra.mxu0 0
        %1246 = vmatprep.subr.bf16.mxu0 0
        %1247 = vmatpush1.bf16.msra.mxu0 0
        %1248 = vmatprep.subr.bf16.mxu0 0
        %1249 = vmatpush1.bf16.msra.mxu0 0
        %1250 = vmatprep.subr.bf16.mxu0 0
        %1251 = vmatpush1.bf16.msra.mxu0 0
        %1252 = vmatprep.mubr.bf16.mxu0 0
        %1253 = vmatmul.mubr.bf16.gmra.mrb[0].mxu0 %v1146
        %v1254 = vpop.f32.mrb[0].mxu0
        %v1255 = vadd.f32 0.0, %v1254
        %v1256 = vpop.f32.mrb[0].mxu0
        %v1257 = vadd.f32 0.0, %v1256
        %v1258 = vpop.f32.mrb[0].mxu0
        %v1259 = vpop.f32.mrb[0].mxu0
        %1260 = vdwg.mxu0
        %v1261 = vadd.f32 %v1142, %v1214
        %v1262 = vadd.f32 %v1143, %v1216
        %v1263 = vadd.f32 %v1144, %v1255
        %v1264 = vadd.f32 %v1145, %v1257
        %v1265 = vmul.f32 %v1261, %v960
        %v1266 = vmul.f32 %v1262, %v961
        %v1267 = vmul.f32 %v1263, %v962
        %v1268 = vmul.f32 %v1264, %v963
        %v1269 = vtanh.pop %v1265
        %v1270 = vtanh.pop %v1266
        %v1271 = vtanh.pop %v1267
        %v1272 = vtanh.pop %v1268
        %v1273 = vmul.f32 %v1269, %v960
        %v1274 = vmul.f32 %v1270, %v961
        %v1275 = vmul.f32 %v1271, %v962
        %v1276 = vmul.f32 %v1272, %v963
        %v1277 = vadd.f32 %v1273, %v964
        %v1278 = vadd.f32 %v1274, %v965
        %v1279 = vadd.f32 %v1275, %v966
        %v1280 = vadd.f32 %v1276, %v967
        %v1281 = vmul.f32 %v1278, %v1138
        %v1282 = vmul.f32 %v1277, %v1279
        %v1283 = vadd.f32 %v1281, %v1282
        %v1284 = vtanh.pop %v1283
        %v1285 = vmul.f32 %v1280, %v1284
        %s1286 = ssub.s32 11, %s968
        %v1287 = vstv %s1286
        %vm1288 = vcmp.gt.s32.totalorder %v942, %v1287
        %v1289 = vsel %vm1288, 1, 0
        %v1290 = vcvt.s32.f32 %v1289
        %1292 = vset.pattern.permute.xlu0 0
        %1293 = vperm.xlu0 %1292, %v1290
        %v1294 = vpop.permute.xlu0 %1293
        %v1296 = vsub.f32 %v1285, %v1137
        %v1297 = vmul.f32 %v1294, %v1296
        %v1298 = vadd.f32 %v1137, %v1297
        %1299 = vst [vmem:[#allocation6] sm:$0xff] %v1298
        %v1300 = vsub.f32 %v1283, %v1138
        %v1301 = vmul.f32 %v1294, %v1300
        %v1302 = vadd.f32 %v1138, %v1301
        %1303 = vst [vmem:[#allocation7] sm:$0xff] %v1302
        %v1304 = vmul.f32 %v1294, %v1285
        %v1305 = vpack.c.bf16 %v1304, %v1304
        %s1306 = scalar_lea.vmem %s314, 12
        %1307 = vst [vmem:[%s1306] sm:$0xf] %v1305
        %v1308 = vld [vmem:[#allocation4] sm:$0xff]
        %v1309 = vld [vmem:[#allocation5] sm:$0xff]
        %s1310 = scalar_lea.vmem %s260, 16 [#allocation8]
        %v1311 = vld [vmem:[%s1310] sm:$0xff]
        %v1312 = vld [vmem:[%s1310 + $0x8] sm:$0xff]
        %v1313 = vunpack.c.l.bf16 %v1311
        %v1314 = vunpack.c.h.bf16 %v1311
        %v1315 = vunpack.c.l.bf16 %v1312
        %v1316 = vunpack.c.h.bf16 %v1312
        %v1317 = vpack.c.bf16 %v1308, %v1308
        %v1318 = vld [vmem:[#allocation2] sm:$0xff]
        %v1319 = vld [vmem:[#allocation2 + $0x8] sm:$0xff]
        %v1320 = vld [vmem:[#allocation2 + $0x10] sm:$0xff]
        %v1321 = vld [vmem:[#allocation2 + $0x18] sm:$0xff]
        %v1322 = vld [vmem:[#allocation2 + $0x20] sm:$0xff]
        %v1323 = vld [vmem:[#allocation2 + $0x28] sm:$0xff]
        %v1324 = vld [vmem:[#allocation2 + $0x30] sm:$0xff]
        %v1325 = vld [vmem:[#allocation2 + $0x38] sm:$0xff]
        %v1326 = vld [vmem:[#allocation2 + $0x40] sm:$0xff]
        %v1327 = vld [vmem:[#allocation2 + $0x48] sm:$0xff]
        %v1328 = vld [vmem:[#allocation2 + $0x50] sm:$0xff]
        %v1329 = vld [vmem:[#allocation2 + $0x58] sm:$0xff]
        %v1330 = vld [vmem:[#allocation2 + $0x60] sm:$0xff]
        %v1331 = vld [vmem:[#allocation2 + $0x68] sm:$0xff]
        %v1332 = vld [vmem:[#allocation2 + $0x70] sm:$0xff]
        %v1333 = vld [vmem:[#allocation2 + $0x78] sm:$0xff]
        %v1334 = vld [vmem:[#allocation2 + $0x80] sm:$0xff]
        %v1335 = vld [vmem:[#allocation2 + $0x88] sm:$0xff]
        %v1336 = vld [vmem:[#allocation2 + $0x90] sm:$0xff]
        %v1337 = vld [vmem:[#allocation2 + $0x98] sm:$0xff]
        %v1338 = vld [vmem:[#allocation2 + $0xa0] sm:$0xff]
        %v1339 = vld [vmem:[#allocation2 + $0xa8] sm:$0xff]
        %v1340 = vld [vmem:[#allocation2 + $0xb0] sm:$0xff]
        %v1341 = vld [vmem:[#allocation2 + $0xb8] sm:$0xff]
        %v1342 = vld [vmem:[#allocation2 + $0xc0] sm:$0xff]
        %v1343 = vld [vmem:[#allocation2 + $0xc8] sm:$0xff]
        %v1344 = vld [vmem:[#allocation2 + $0xd0] sm:$0xff]
        %v1345 = vld [vmem:[#allocation2 + $0xd8] sm:$0xff]
        %v1346 = vld [vmem:[#allocation2 + $0xe0] sm:$0xff]
        %v1347 = vld [vmem:[#allocation2 + $0xe8] sm:$0xff]
        %v1348 = vld [vmem:[#allocation2 + $0xf0] sm:$0xff]
        %v1349 = vld [vmem:[#allocation2 + $0xf8] sm:$0xff]
        %1350 = vmatprep.subr.bf16.mxu0 %v1319
        %1351 = vmatpush1.bf16.msra.mxu0 %v1318
        %1352 = vmatprep.subr.bf16.mxu0 %v1323
        %1353 = vmatpush1.bf16.msra.mxu0 %v1322
        %1354 = vmatprep.subr.bf16.mxu0 %v1327
        %1355 = vmatpush1.bf16.msra.mxu0 %v1326
        %1356 = vmatprep.subr.bf16.mxu0 %v1331
        %1357 = vmatpush1.bf16.msra.mxu0 %v1330
        %1358 = vmatprep.subr.bf16.mxu0 %v1335
        %1359 = vmatpush1.bf16.msra.mxu0 %v1334
        %1360 = vmatprep.subr.bf16.mxu0 %v1339
        %1361 = vmatpush1.bf16.msra.mxu0 %v1338
        %1362 = vmatprep.subr.bf16.mxu0 %v1343
        %1363 = vmatpush1.bf16.msra.mxu0 %v1342
        %1364 = vmatprep.subr.bf16.mxu0 %v1347
        %1365 = vmatpush1.bf16.msra.mxu0 %v1346
        %1366 = vmatprep.subr.bf16.mxu0 0
        %1367 = vmatpush1.bf16.msra.mxu0 0
        %1368 = vmatprep.subr.bf16.mxu0 0
        %1369 = vmatpush1.bf16.msra.mxu0 0
        %1370 = vmatprep.subr.bf16.mxu0 0
        %1371 = vmatpush1.bf16.msra.mxu0 0
        %1372 = vmatprep.subr.bf16.mxu0 0
        %1373 = vmatpush1.bf16.msra.mxu0 0
        %1374 = vmatprep.subr.bf16.mxu0 0
        %1375 = vmatpush1.bf16.msra.mxu0 0
        %1376 = vmatprep.subr.bf16.mxu0 0
        %1377 = vmatpush1.bf16.msra.mxu0 0
        %1378 = vmatprep.subr.bf16.mxu0 0
        %1379 = vmatpush1.bf16.msra.mxu0 0
        %1380 = vmatprep.subr.bf16.mxu0 0
        %1381 = vmatpush1.bf16.msra.mxu0 0
        %1382 = vmatprep.mubr.bf16.mxu0 0
        %1383 = vmatmul.mubr.bf16.gmra.mrb[0].mxu0 %v1317
        %v1384 = vpop.f32.mrb[0].mxu0
        %v1385 = vadd.f32 0.0, %v1384
        %v1386 = vpop.f32.mrb[0].mxu0
        %v1387 = vadd.f32 0.0, %v1386
        %v1388 = vpop.f32.mrb[0].mxu0
        %v1389 = vpop.f32.mrb[0].mxu0
        %1390 = vdwg.mxu0
        %1391 = vmatprep.subr.bf16.mxu0 %v1321
        %1392 = vmatpush1.bf16.msra.mxu0 %v1320
        %1393 = vmatprep.subr.bf16.mxu0 %v1325
        %1394 = vmatpush1.bf16.msra.mxu0 %v1324
        %1395 = vmatprep.subr.bf16.mxu0 %v1329
        %1396 = vmatpush1.bf16.msra.mxu0 %v1328
        %1397 = vmatprep.subr.bf16.mxu0 %v1333
        %1398 = vmatpush1.bf16.msra.mxu0 %v1332
        %1399 = vmatprep.subr.bf16.mxu0 %v1337
        %1400 = vmatpush1.bf16.msra.mxu0 %v1336
        %1401 = vmatprep.subr.bf16.mxu0 %v1341
        %1402 = vmatpush1.bf16.msra.mxu0 %v1340
        %1403 = vmatprep.subr.bf16.mxu0 %v1345
        %1404 = vmatpush1.bf16.msra.mxu0 %v1344
        %1405 = vmatprep.subr.bf16.mxu0 %v1349
        %1406 = vmatpush1.bf16.msra.mxu0 %v1348
        %1407 = vmatprep.subr.bf16.mxu0 0
        %1408 = vmatpush1.bf16.msra.mxu0 0
        %1409 = vmatprep.subr.bf16.mxu0 0
        %1410 = vmatpush1.bf16.msra.mxu0 0
        %1411 = vmatprep.subr.bf16.mxu0 0
        %1412 = vmatpush1.bf16.msra.mxu0 0
        %1413 = vmatprep.subr.bf16.mxu0 0
        %1414 = vmatpush1.bf16.msra.mxu0 0
        %1415 = vmatprep.subr.bf16.mxu0 0
        %1416 = vmatpush1.bf16.msra.mxu0 0
        %1417 = vmatprep.subr.bf16.mxu0 0
        %1418 = vmatpush1.bf16.msra.mxu0 0
        %1419 = vmatprep.subr.bf16.mxu0 0
        %1420 = vmatpush1.bf16.msra.mxu0 0
        %1421 = vmatprep.subr.bf16.mxu0 0
        %1422 = vmatpush1.bf16.msra.mxu0 0
        %1423 = vmatprep.mubr.bf16.mxu0 0
        %1424 = vmatmul.mubr.bf16.gmra.mrb[0].mxu0 %v1317
        %v1425 = vpop.f32.mrb[0].mxu0
        %v1426 = vadd.f32 0.0, %v1425
        %v1427 = vpop.f32.mrb[0].mxu0
        %v1428 = vadd.f32 0.0, %v1427
        %v1429 = vpop.f32.mrb[0].mxu0
        %v1430 = vpop.f32.mrb[0].mxu0
        %1431 = vdwg.mxu0
        %v1432 = vadd.f32 %v1313, %v1385
        %v1433 = vadd.f32 %v1314, %v1387
        %v1434 = vadd.f32 %v1315, %v1426
        %v1435 = vadd.f32 %v1316, %v1428
        %v1436 = vmul.f32 %v1432, %v960
        %v1437 = vmul.f32 %v1433, %v961
        %v1438 = vmul.f32 %v1434, %v962
        %v1439 = vmul.f32 %v1435, %v963
        %v1440 = vtanh.pop %v1436
        %v1441 = vtanh.pop %v1437
        %v1442 = vtanh.pop %v1438
        %v1443 = vtanh.pop %v1439
        %v1444 = vmul.f32 %v1440, %v960
        %v1445 = vmul.f32 %v1441, %v961
        %v1446 = vmul.f32 %v1442, %v962
        %v1447 = vmul.f32 %v1443, %v963
        %v1448 = vadd.f32 %v1444, %v964
        %v1449 = vadd.f32 %v1445, %v965
        %v1450 = vadd.f32 %v1446, %v966
        %v1451 = vadd.f32 %v1447, %v967
        %v1452 = vmul.f32 %v1449, %v1309
        %v1453 = vmul.f32 %v1448, %v1450
        %v1454 = vadd.f32 %v1452, %v1453
        %v1455 = vtanh.pop %v1454
        %v1456 = vmul.f32 %v1451, %v1455
        %s1457 = sadd.s32 %s968, 1
        %v1458 = vstv %s1457
        %vm1459 = vcmp.gt.s32.totalorder %v942, %v1458
        %v1460 = vsel %vm1459, 1, 0
        %v1461 = vcvt.s32.f32 %v1460
        %1463 = vset.pattern.permute.xlu0 0
        %1464 = vperm.xlu0 %1463, %v1461
        %v1465 = vpop.permute.xlu0 %1464
        %v1467 = vsub.f32 %v1456, %v1308
        %v1468 = vmul.f32 %v1465, %v1467
        %v1469 = vadd.f32 %v1308, %v1468
        %1470 = vst [vmem:[#allocation4] sm:$0xff] %v1469
        %v1471 = vsub.f32 %v1454, %v1309
        %v1472 = vmul.f32 %v1465, %v1471
        %v1473 = vadd.f32 %v1309, %v1472
        %1474 = vst [vmem:[#allocation5] sm:$0xff] %v1473
        %v1475 = vmul.f32 %v1465, %v1456
        %v1476 = vpack.c.bf16 %v1475, %v1475
        %s1477 = scalar_lea.vmem %s307, 4
        %1478 = vst [vmem:[%s1477] sm:$0xf] %v1476
        %v1479 = vld [vmem:[#allocation6] sm:$0xff]
        %v1480 = vld [vmem:[#allocation7] sm:$0xff]
        %s1481 = scalar_lea.vmem %s267, 32 [#allocation9]
        %v1482 = vld [vmem:[%s1481] sm:$0xff]
        %v1483 = vld [vmem:[%s1481 + $0x8] sm:$0xff]
        %v1484 = vunpack.c.l.bf16 %v1482
        %v1485 = vunpack.c.h.bf16 %v1482
        %v1486 = vunpack.c.l.bf16 %v1483
        %v1487 = vunpack.c.h.bf16 %v1483
        %v1488 = vpack.c.bf16 %v1479, %v1479
        %v1489 = vld [vmem:[#allocation3] sm:$0xff]
        %v1490 = vld [vmem:[#allocation3 + $0x8] sm:$0xff]
        %v1491 = vld [vmem:[#allocation3 + $0x10] sm:$0xff]
        %v1492 = vld [vmem:[#allocation3 + $0x18] sm:$0xff]
        %v1493 = vld [vmem:[#allocation3 + $0x20] sm:$0xff]
        %v1494 = vld [vmem:[#allocation3 + $0x28] sm:$0xff]
        %v1495 = vld [vmem:[#allocation3 + $0x30] sm:$0xff]
        %v1496 = vld [vmem:[#allocation3 + $0x38] sm:$0xff]
        %v1497 = vld [vmem:[#allocation3 + $0x40] sm:$0xff]
        %v1498 = vld [vmem:[#allocation3 + $0x48] sm:$0xff]
        %v1499 = vld [vmem:[#allocation3 + $0x50] sm:$0xff]
        %v1500 = vld [vmem:[#allocation3 + $0x58] sm:$0xff]
        %v1501 = vld [vmem:[#allocation3 + $0x60] sm:$0xff]
        %v1502 = vld [vmem:[#allocation3 + $0x68] sm:$0xff]
        %v1503 = vld [vmem:[#allocation3 + $0x70] sm:$0xff]
        %v1504 = vld [vmem:[#allocation3 + $0x78] sm:$0xff]
        %v1505 = vld [vmem:[#allocation3 + $0x80] sm:$0xff]
        %v1506 = vld [vmem:[#allocation3 + $0x88] sm:$0xff]
        %v1507 = vld [vmem:[#allocation3 + $0x90] sm:$0xff]
        %v1508 = vld [vmem:[#allocation3 + $0x98] sm:$0xff]
        %v1509 = vld [vmem:[#allocation3 + $0xa0] sm:$0xff]
        %v1510 = vld [vmem:[#allocation3 + $0xa8] sm:$0xff]
        %v1511 = vld [vmem:[#allocation3 + $0xb0] sm:$0xff]
        %v1512 = vld [vmem:[#allocation3 + $0xb8] sm:$0xff]
        %v1513 = vld [vmem:[#allocation3 + $0xc0] sm:$0xff]
        %v1514 = vld [vmem:[#allocation3 + $0xc8] sm:$0xff]
        %v1515 = vld [vmem:[#allocation3 + $0xd0] sm:$0xff]
        %v1516 = vld [vmem:[#allocation3 + $0xd8] sm:$0xff]
        %v1517 = vld [vmem:[#allocation3 + $0xe0] sm:$0xff]
        %v1518 = vld [vmem:[#allocation3 + $0xe8] sm:$0xff]
        %v1519 = vld [vmem:[#allocation3 + $0xf0] sm:$0xff]
        %v1520 = vld [vmem:[#allocation3 + $0xf8] sm:$0xff]
        %1521 = vmatprep.subr.bf16.mxu0 %v1490
        %1522 = vmatpush1.bf16.msra.mxu0 %v1489
        %1523 = vmatprep.subr.bf16.mxu0 %v1494
        %1524 = vmatpush1.bf16.msra.mxu0 %v1493
        %1525 = vmatprep.subr.bf16.mxu0 %v1498
        %1526 = vmatpush1.bf16.msra.mxu0 %v1497
        %1527 = vmatprep.subr.bf16.mxu0 %v1502
        %1528 = vmatpush1.bf16.msra.mxu0 %v1501
        %1529 = vmatprep.subr.bf16.mxu0 %v1506
        %1530 = vmatpush1.bf16.msra.mxu0 %v1505
        %1531 = vmatprep.subr.bf16.mxu0 %v1510
        %1532 = vmatpush1.bf16.msra.mxu0 %v1509
        %1533 = vmatprep.subr.bf16.mxu0 %v1514
        %1534 = vmatpush1.bf16.msra.mxu0 %v1513
        %1535 = vmatprep.subr.bf16.mxu0 %v1518
        %1536 = vmatpush1.bf16.msra.mxu0 %v1517
        %1537 = vmatprep.subr.bf16.mxu0 0
        %1538 = vmatpush1.bf16.msra.mxu0 0
        %1539 = vmatprep.subr.bf16.mxu0 0
        %1540 = vmatpush1.bf16.msra.mxu0 0
        %1541 = vmatprep.subr.bf16.mxu0 0
        %1542 = vmatpush1.bf16.msra.mxu0 0
        %1543 = vmatprep.subr.bf16.mxu0 0
        %1544 = vmatpush1.bf16.msra.mxu0 0
        %1545 = vmatprep.subr.bf16.mxu0 0
        %1546 = vmatpush1.bf16.msra.mxu0 0
        %1547 = vmatprep.subr.bf16.mxu0 0
        %1548 = vmatpush1.bf16.msra.mxu0 0
        %1549 = vmatprep.subr.bf16.mxu0 0
        %1550 = vmatpush1.bf16.msra.mxu0 0
        %1551 = vmatprep.subr.bf16.mxu0 0
        %1552 = vmatpush1.bf16.msra.mxu0 0
        %1553 = vmatprep.mubr.bf16.mxu0 0
        %1554 = vmatmul.mubr.bf16.gmra.mrb[0].mxu0 %v1488
        %v1555 = vpop.f32.mrb[0].mxu0
        %v1556 = vadd.f32 0.0, %v1555
        %v1557 = vpop.f32.mrb[0].mxu0
        %v1558 = vadd.f32 0.0, %v1557
        %v1559 = vpop.f32.mrb[0].mxu0
        %v1560 = vpop.f32.mrb[0].mxu0
        %1561 = vdwg.mxu0
        %1562 = vmatprep.subr.bf16.mxu0 %v1492
        %1563 = vmatpush1.bf16.msra.mxu0 %v1491
        %1564 = vmatprep.subr.bf16.mxu0 %v1496
        %1565 = vmatpush1.bf16.msra.mxu0 %v1495
        %1566 = vmatprep.subr.bf16.mxu0 %v1500
        %1567 = vmatpush1.bf16.msra.mxu0 %v1499
        %1568 = vmatprep.subr.bf16.mxu0 %v1504
        %1569 = vmatpush1.bf16.msra.mxu0 %v1503
        %1570 = vmatprep.subr.bf16.mxu0 %v1508
        %1571 = vmatpush1.bf16.msra.mxu0 %v1507
        %1572 = vmatprep.subr.bf16.mxu0 %v1512
        %1573 = vmatpush1.bf16.msra.mxu0 %v1511
        %1574 = vmatprep.subr.bf16.mxu0 %v1516
        %1575 = vmatpush1.bf16.msra.mxu0 %v1515
        %1576 = vmatprep.subr.bf16.mxu0 %v1520
        %1577 = vmatpush1.bf16.msra.mxu0 %v1519
        %1578 = vmatprep.subr.bf16.mxu0 0
        %1579 = vmatpush1.bf16.msra.mxu0 0
        %1580 = vmatprep.subr.bf16.mxu0 0
        %1581 = vmatpush1.bf16.msra.mxu0 0
        %1582 = vmatprep.subr.bf16.mxu0 0
        %1583 = vmatpush1.bf16.msra.mxu0 0
        %1584 = vmatprep.subr.bf16.mxu0 0
        %1585 = vmatpush1.bf16.msra.mxu0 0
        %1586 = vmatprep.subr.bf16.mxu0 0
        %1587 = vmatpush1.bf16.msra.mxu0 0
        %1588 = vmatprep.subr.bf16.mxu0 0
        %1589 = vmatpush1.bf16.msra.mxu0 0
        %1590 = vmatprep.subr.bf16.mxu0 0
        %1591 = vmatpush1.bf16.msra.mxu0 0
        %1592 = vmatprep.subr.bf16.mxu0 0
        %1593 = vmatpush1.bf16.msra.mxu0 0
        %1594 = vmatprep.mubr.bf16.mxu0 0
        %1595 = vmatmul.mubr.bf16.gmra.mrb[0].mxu0 %v1488
        %v1596 = vpop.f32.mrb[0].mxu0
        %v1597 = vadd.f32 0.0, %v1596
        %v1598 = vpop.f32.mrb[0].mxu0
        %v1599 = vadd.f32 0.0, %v1598
        %v1600 = vpop.f32.mrb[0].mxu0
        %v1601 = vpop.f32.mrb[0].mxu0
        %1602 = vdwg.mxu0
        %v1603 = vadd.f32 %v1484, %v1556
        %v1604 = vadd.f32 %v1485, %v1558
        %v1605 = vadd.f32 %v1486, %v1597
        %v1606 = vadd.f32 %v1487, %v1599
        %v1607 = vmul.f32 %v1603, %v960
        %v1608 = vmul.f32 %v1604, %v961
        %v1609 = vmul.f32 %v1605, %v962
        %v1610 = vmul.f32 %v1606, %v963
        %v1611 = vtanh.pop %v1607
        %v1612 = vtanh.pop %v1608
        %v1613 = vtanh.pop %v1609
        %v1614 = vtanh.pop %v1610
        %v1615 = vmul.f32 %v1611, %v960
        %v1616 = vmul.f32 %v1612, %v961
        %v1617 = vmul.f32 %v1613, %v962
        %v1618 = vmul.f32 %v1614, %v963
        %v1619 = vadd.f32 %v1615, %v964
        %v1620 = vadd.f32 %v1616, %v965
        %v1621 = vadd.f32 %v1617, %v966
        %v1622 = vadd.f32 %v1618, %v967
        %v1623 = vmul.f32 %v1620, %v1480
        %v1624 = vmul.f32 %v1619, %v1621
        %v1625 = vadd.f32 %v1623, %v1624
        %v1626 = vtanh.pop %v1625
        %v1627 = vmul.f32 %v1622, %v1626
        %s1628 = ssub.s32 10, %s968
        %v1629 = vstv %s1628
        %vm1630 = vcmp.gt.s32.totalorder %v942, %v1629
        %v1631 = vsel %vm1630, 1, 0
        %v1632 = vcvt.s32.f32 %v1631
        %1634 = vset.pattern.permute.xlu0 0
        %1635 = vperm.xlu0 %1634, %v1632
        %v1636 = vpop.permute.xlu0 %1635
        %v1638 = vsub.f32 %v1627, %v1479
        %v1639 = vmul.f32 %v1636, %v1638
        %v1640 = vadd.f32 %v1479, %v1639
        %1641 = vst [vmem:[#allocation6] sm:$0xff] %v1640
        %v1642 = vsub.f32 %v1625, %v1480
        %v1643 = vmul.f32 %v1636, %v1642
        %v1644 = vadd.f32 %v1480, %v1643
        %1645 = vst [vmem:[#allocation7] sm:$0xff] %v1644
        %v1646 = vmul.f32 %v1636, %v1627
        %v1647 = vpack.c.bf16 %v1646, %v1646
        %s1648 = scalar_lea.vmem %s314, 8
        %1649 = vst [vmem:[%s1648] sm:$0xf] %v1647
        %v1650 = vld [vmem:[#allocation4] sm:$0xff]
        %v1651 = vld [vmem:[#allocation5] sm:$0xff]
        %s1652 = scalar_lea.vmem %s260, 32 [#allocation8]
        %v1653 = vld [vmem:[%s1652] sm:$0xff]
        %v1654 = vld [vmem:[%s1652 + $0x8] sm:$0xff]
        %v1655 = vunpack.c.l.bf16 %v1653
        %v1656 = vunpack.c.h.bf16 %v1653
        %v1657 = vunpack.c.l.bf16 %v1654
        %v1658 = vunpack.c.h.bf16 %v1654
        %v1659 = vpack.c.bf16 %v1650, %v1650
        %v1660 = vld [vmem:[#allocation2] sm:$0xff]
        %v1661 = vld [vmem:[#allocation2 + $0x8] sm:$0xff]
        %v1662 = vld [vmem:[#allocation2 + $0x10] sm:$0xff]
        %v1663 = vld [vmem:[#allocation2 + $0x18] sm:$0xff]
        %v1664 = vld [vmem:[#allocation2 + $0x20] sm:$0xff]
        %v1665 = vld [vmem:[#allocation2 + $0x28] sm:$0xff]
        %v1666 = vld [vmem:[#allocation2 + $0x30] sm:$0xff]
        %v1667 = vld [vmem:[#allocation2 + $0x38] sm:$0xff]
        %v1668 = vld [vmem:[#allocation2 + $0x40] sm:$0xff]
        %v1669 = vld [vmem:[#allocation2 + $0x48] sm:$0xff]
        %v1670 = vld [vmem:[#allocation2 + $0x50] sm:$0xff]
        %v1671 = vld [vmem:[#allocation2 + $0x58] sm:$0xff]
        %v1672 = vld [vmem:[#allocation2 + $0x60] sm:$0xff]
        %v1673 = vld [vmem:[#allocation2 + $0x68] sm:$0xff]
        %v1674 = vld [vmem:[#allocation2 + $0x70] sm:$0xff]
        %v1675 = vld [vmem:[#allocation2 + $0x78] sm:$0xff]
        %v1676 = vld [vmem:[#allocation2 + $0x80] sm:$0xff]
        %v1677 = vld [vmem:[#allocation2 + $0x88] sm:$0xff]
        %v1678 = vld [vmem:[#allocation2 + $0x90] sm:$0xff]
        %v1679 = vld [vmem:[#allocation2 + $0x98] sm:$0xff]
        %v1680 = vld [vmem:[#allocation2 + $0xa0] sm:$0xff]
        %v1681 = vld [vmem:[#allocation2 + $0xa8] sm:$0xff]
        %v1682 = vld [vmem:[#allocation2 + $0xb0] sm:$0xff]
        %v1683 = vld [vmem:[#allocation2 + $0xb8] sm:$0xff]
        %v1684 = vld [vmem:[#allocation2 + $0xc0] sm:$0xff]
        %v1685 = vld [vmem:[#allocation2 + $0xc8] sm:$0xff]
        %v1686 = vld [vmem:[#allocation2 + $0xd0] sm:$0xff]
        %v1687 = vld [vmem:[#allocation2 + $0xd8] sm:$0xff]
        %v1688 = vld [vmem:[#allocation2 + $0xe0] sm:$0xff]
        %v1689 = vld [vmem:[#allocation2 + $0xe8] sm:$0xff]
        %v1690 = vld [vmem:[#allocation2 + $0xf0] sm:$0xff]
        %v1691 = vld [vmem:[#allocation2 + $0xf8] sm:$0xff]
        %1692 = vmatprep.subr.bf16.mxu0 %v1661
        %1693 = vmatpush1.bf16.msra.mxu0 %v1660
        %1694 = vmatprep.subr.bf16.mxu0 %v1665
        %1695 = vmatpush1.bf16.msra.mxu0 %v1664
        %1696 = vmatprep.subr.bf16.mxu0 %v1669
        %1697 = vmatpush1.bf16.msra.mxu0 %v1668
        %1698 = vmatprep.subr.bf16.mxu0 %v1673
        %1699 = vmatpush1.bf16.msra.mxu0 %v1672
        %1700 = vmatprep.subr.bf16.mxu0 %v1677
        %1701 = vmatpush1.bf16.msra.mxu0 %v1676
        %1702 = vmatprep.subr.bf16.mxu0 %v1681
        %1703 = vmatpush1.bf16.msra.mxu0 %v1680
        %1704 = vmatprep.subr.bf16.mxu0 %v1685
        %1705 = vmatpush1.bf16.msra.mxu0 %v1684
        %1706 = vmatprep.subr.bf16.mxu0 %v1689
        %1707 = vmatpush1.bf16.msra.mxu0 %v1688
        %1708 = vmatprep.subr.bf16.mxu0 0
        %1709 = vmatpush1.bf16.msra.mxu0 0
        %1710 = vmatprep.subr.bf16.mxu0 0
        %1711 = vmatpush1.bf16.msra.mxu0 0
        %1712 = vmatprep.subr.bf16.mxu0 0
        %1713 = vmatpush1.bf16.msra.mxu0 0
        %1714 = vmatprep.subr.bf16.mxu0 0
        %1715 = vmatpush1.bf16.msra.mxu0 0
        %1716 = vmatprep.subr.bf16.mxu0 0
        %1717 = vmatpush1.bf16.msra.mxu0 0
        %1718 = vmatprep.subr.bf16.mxu0 0
        %1719 = vmatpush1.bf16.msra.mxu0 0
        %1720 = vmatprep.subr.bf16.mxu0 0
        %1721 = vmatpush1.bf16.msra.mxu0 0
        %1722 = vmatprep.subr.bf16.mxu0 0
        %1723 = vmatpush1.bf16.msra.mxu0 0
        %1724 = vmatprep.mubr.bf16.mxu0 0
        %1725 = vmatmul.mubr.bf16.gmra.mrb[0].mxu0 %v1659
        %v1726 = vpop.f32.mrb[0].mxu0
        %v1727 = vadd.f32 0.0, %v1726
        %v1728 = vpop.f32.mrb[0].mxu0
        %v1729 = vadd.f32 0.0, %v1728
        %v1730 = vpop.f32.mrb[0].mxu0
        %v1731 = vpop.f32.mrb[0].mxu0
        %1732 = vdwg.mxu0
        %1733 = vmatprep.subr.bf16.mxu0 %v1663
        %1734 = vmatpush1.bf16.msra.mxu0 %v1662
        %1735 = vmatprep.subr.bf16.mxu0 %v1667
        %1736 = vmatpush1.bf16.msra.mxu0 %v1666
        %1737 = vmatprep.subr.bf16.mxu0 %v1671
        %1738 = vmatpush1.bf16.msra.mxu0 %v1670
        %1739 = vmatprep.subr.bf16.mxu0 %v1675
        %1740 = vmatpush1.bf16.msra.mxu0 %v1674
        %1741 = vmatprep.subr.bf16.mxu0 %v1679
        %1742 = vmatpush1.bf16.msra.mxu0 %v1678
        %1743 = vmatprep.subr.bf16.mxu0 %v1683
        %1744 = vmatpush1.bf16.msra.mxu0 %v1682
        %1745 = vmatprep.subr.bf16.mxu0 %v1687
        %1746 = vmatpush1.bf16.msra.mxu0 %v1686
        %1747 = vmatprep.subr.bf16.mxu0 %v1691
        %1748 = vmatpush1.bf16.msra.mxu0 %v1690
        %1749 = vmatprep.subr.bf16.mxu0 0
        %1750 = vmatpush1.bf16.msra.mxu0 0
        %1751 = vmatprep.subr.bf16.mxu0 0
        %1752 = vmatpush1.bf16.msra.mxu0 0
        %1753 = vmatprep.subr.bf16.mxu0 0
        %1754 = vmatpush1.bf16.msra.mxu0 0
        %1755 = vmatprep.subr.bf16.mxu0 0
        %1756 = vmatpush1.bf16.msra.mxu0 0
        %1757 = vmatprep.subr.bf16.mxu0 0
        %1758 = vmatpush1.bf16.msra.mxu0 0
        %1759 = vmatprep.subr.bf16.mxu0 0
        %1760 = vmatpush1.bf16.msra.mxu0 0
        %1761 = vmatprep.subr.bf16.mxu0 0
        %1762 = vmatpush1.bf16.msra.mxu0 0
        %1763 = vmatprep.subr.bf16.mxu0 0
        %1764 = vmatpush1.bf16.msra.mxu0 0
        %1765 = vmatprep.mubr.bf16.mxu0 0
        %1766 = vmatmul.mubr.bf16.gmra.mrb[0].mxu0 %v1659
        %v1767 = vpop.f32.mrb[0].mxu0
        %v1768 = vadd.f32 0.0, %v1767
        %v1769 = vpop.f32.mrb[0].mxu0
        %v1770 = vadd.f32 0.0, %v1769
        %v1771 = vpop.f32.mrb[0].mxu0
        %v1772 = vpop.f32.mrb[0].mxu0
        %1773 = vdwg.mxu0
        %v1774 = vadd.f32 %v1655, %v1727
        %v1775 = vadd.f32 %v1656, %v1729
        %v1776 = vadd.f32 %v1657, %v1768
        %v1777 = vadd.f32 %v1658, %v1770
        %v1778 = vmul.f32 %v1774, %v960
        %v1779 = vmul.f32 %v1775, %v961
        %v1780 = vmul.f32 %v1776, %v962
        %v1781 = vmul.f32 %v1777, %v963
        %v1782 = vtanh.pop %v1778
        %v1783 = vtanh.pop %v1779
        %v1784 = vtanh.pop %v1780
        %v1785 = vtanh.pop %v1781
        %v1786 = vmul.f32 %v1782, %v960
        %v1787 = vmul.f32 %v1783, %v961
        %v1788 = vmul.f32 %v1784, %v962
        %v1789 = vmul.f32 %v1785, %v963
        %v1790 = vadd.f32 %v1786, %v964
        %v1791 = vadd.f32 %v1787, %v965
        %v1792 = vadd.f32 %v1788, %v966
        %v1793 = vadd.f32 %v1789, %v967
        %v1794 = vmul.f32 %v1791, %v1651
        %v1795 = vmul.f32 %v1790, %v1792
        %v1796 = vadd.f32 %v1794, %v1795
        %v1797 = vtanh.pop %v1796
        %v1798 = vmul.f32 %v1793, %v1797
        %s1799 = sadd.s32 %s968, 2
        %v1800 = vstv %s1799
        %vm1801 = vcmp.gt.s32.totalorder %v942, %v1800
        %v1802 = vsel %vm1801, 1, 0
        %v1803 = vcvt.s32.f32 %v1802
        %1805 = vset.pattern.permute.xlu0 0
        %1806 = vperm.xlu0 %1805, %v1803
        %v1807 = vpop.permute.xlu0 %1806
        %v1809 = vsub.f32 %v1798, %v1650
        %v1810 = vmul.f32 %v1807, %v1809
        %v1811 = vadd.f32 %v1650, %v1810
        %1812 = vst [vmem:[#allocation4] sm:$0xff] %v1811
        %v1813 = vsub.f32 %v1796, %v1651
        %v1814 = vmul.f32 %v1807, %v1813
        %v1815 = vadd.f32 %v1651, %v1814
        %1816 = vst [vmem:[#allocation5] sm:$0xff] %v1815
        %v1817 = vmul.f32 %v1807, %v1798
        %v1818 = vpack.c.bf16 %v1817, %v1817
        %s1819 = scalar_lea.vmem %s307, 8
        %1820 = vst [vmem:[%s1819] sm:$0xf] %v1818
        %v1821 = vld [vmem:[#allocation6] sm:$0xff]
        %v1822 = vld [vmem:[#allocation7] sm:$0xff]
        %s1823 = scalar_lea.vmem %s267, 16 [#allocation9]
        %v1824 = vld [vmem:[%s1823] sm:$0xff]
        %v1825 = vld [vmem:[%s1823 + $0x8] sm:$0xff]
        %v1826 = vunpack.c.l.bf16 %v1824
        %v1827 = vunpack.c.h.bf16 %v1824
        %v1828 = vunpack.c.l.bf16 %v1825
        %v1829 = vunpack.c.h.bf16 %v1825
        %v1830 = vpack.c.bf16 %v1821, %v1821
        %v1831 = vld [vmem:[#allocation3] sm:$0xff]
        %v1832 = vld [vmem:[#allocation3 + $0x8] sm:$0xff]
        %v1833 = vld [vmem:[#allocation3 + $0x10] sm:$0xff]
        %v1834 = vld [vmem:[#allocation3 + $0x18] sm:$0xff]
        %v1835 = vld [vmem:[#allocation3 + $0x20] sm:$0xff]
        %v1836 = vld [vmem:[#allocation3 + $0x28] sm:$0xff]
        %v1837 = vld [vmem:[#allocation3 + $0x30] sm:$0xff]
        %v1838 = vld [vmem:[#allocation3 + $0x38] sm:$0xff]
        %v1839 = vld [vmem:[#allocation3 + $0x40] sm:$0xff]
        %v1840 = vld [vmem:[#allocation3 + $0x48] sm:$0xff]
        %v1841 = vld [vmem:[#allocation3 + $0x50] sm:$0xff]
        %v1842 = vld [vmem:[#allocation3 + $0x58] sm:$0xff]
        %v1843 = vld [vmem:[#allocation3 + $0x60] sm:$0xff]
        %v1844 = vld [vmem:[#allocation3 + $0x68] sm:$0xff]
        %v1845 = vld [vmem:[#allocation3 + $0x70] sm:$0xff]
        %v1846 = vld [vmem:[#allocation3 + $0x78] sm:$0xff]
        %v1847 = vld [vmem:[#allocation3 + $0x80] sm:$0xff]
        %v1848 = vld [vmem:[#allocation3 + $0x88] sm:$0xff]
        %v1849 = vld [vmem:[#allocation3 + $0x90] sm:$0xff]
        %v1850 = vld [vmem:[#allocation3 + $0x98] sm:$0xff]
        %v1851 = vld [vmem:[#allocation3 + $0xa0] sm:$0xff]
        %v1852 = vld [vmem:[#allocation3 + $0xa8] sm:$0xff]
        %v1853 = vld [vmem:[#allocation3 + $0xb0] sm:$0xff]
        %v1854 = vld [vmem:[#allocation3 + $0xb8] sm:$0xff]
        %v1855 = vld [vmem:[#allocation3 + $0xc0] sm:$0xff]
        %v1856 = vld [vmem:[#allocation3 + $0xc8] sm:$0xff]
        %v1857 = vld [vmem:[#allocation3 + $0xd0] sm:$0xff]
        %v1858 = vld [vmem:[#allocation3 + $0xd8] sm:$0xff]
        %v1859 = vld [vmem:[#allocation3 + $0xe0] sm:$0xff]
        %v1860 = vld [vmem:[#allocation3 + $0xe8] sm:$0xff]
        %v1861 = vld [vmem:[#allocation3 + $0xf0] sm:$0xff]
        %v1862 = vld [vmem:[#allocation3 + $0xf8] sm:$0xff]
        %1863 = vmatprep.subr.bf16.mxu0 %v1832
        %1864 = vmatpush1.bf16.msra.mxu0 %v1831
        %1865 = vmatprep.subr.bf16.mxu0 %v1836
        %1866 = vmatpush1.bf16.msra.mxu0 %v1835
        %1867 = vmatprep.subr.bf16.mxu0 %v1840
        %1868 = vmatpush1.bf16.msra.mxu0 %v1839
        %1869 = vmatprep.subr.bf16.mxu0 %v1844
        %1870 = vmatpush1.bf16.msra.mxu0 %v1843
        %1871 = vmatprep.subr.bf16.mxu0 %v1848
        %1872 = vmatpush1.bf16.msra.mxu0 %v1847
        %1873 = vmatprep.subr.bf16.mxu0 %v1852
        %1874 = vmatpush1.bf16.msra.mxu0 %v1851
        %1875 = vmatprep.subr.bf16.mxu0 %v1856
        %1876 = vmatpush1.bf16.msra.mxu0 %v1855
        %1877 = vmatprep.subr.bf16.mxu0 %v1860
        %1878 = vmatpush1.bf16.msra.mxu0 %v1859
        %1879 = vmatprep.subr.bf16.mxu0 0
        %1880 = vmatpush1.bf16.msra.mxu0 0
        %1881 = vmatprep.subr.bf16.mxu0 0
        %1882 = vmatpush1.bf16.msra.mxu0 0
        %1883 = vmatprep.subr.bf16.mxu0 0
        %1884 = vmatpush1.bf16.msra.mxu0 0
        %1885 = vmatprep.subr.bf16.mxu0 0
        %1886 = vmatpush1.bf16.msra.mxu0 0
        %1887 = vmatprep.subr.bf16.mxu0 0
        %1888 = vmatpush1.bf16.msra.mxu0 0
        %1889 = vmatprep.subr.bf16.mxu0 0
        %1890 = vmatpush1.bf16.msra.mxu0 0
        %1891 = vmatprep.subr.bf16.mxu0 0
        %1892 = vmatpush1.bf16.msra.mxu0 0
        %1893 = vmatprep.subr.bf16.mxu0 0
        %1894 = vmatpush1.bf16.msra.mxu0 0
        %1895 = vmatprep.mubr.bf16.mxu0 0
        %1896 = vmatmul.mubr.bf16.gmra.mrb[0].mxu0 %v1830
        %v1897 = vpop.f32.mrb[0].mxu0
        %v1898 = vadd.f32 0.0, %v1897
        %v1899 = vpop.f32.mrb[0].mxu0
        %v1900 = vadd.f32 0.0, %v1899
        %v1901 = vpop.f32.mrb[0].mxu0
        %v1902 = vpop.f32.mrb[0].mxu0
        %1903 = vdwg.mxu0
        %1904 = vmatprep.subr.bf16.mxu0 %v1834
        %1905 = vmatpush1.bf16.msra.mxu0 %v1833
        %1906 = vmatprep.subr.bf16.mxu0 %v1838
        %1907 = vmatpush1.bf16.msra.mxu0 %v1837
        %1908 = vmatprep.subr.bf16.mxu0 %v1842
        %1909 = vmatpush1.bf16.msra.mxu0 %v1841
        %1910 = vmatprep.subr.bf16.mxu0 %v1846
        %1911 = vmatpush1.bf16.msra.mxu0 %v1845
        %1912 = vmatprep.subr.bf16.mxu0 %v1850
        %1913 = vmatpush1.bf16.msra.mxu0 %v1849
        %1914 = vmatprep.subr.bf16.mxu0 %v1854
        %1915 = vmatpush1.bf16.msra.mxu0 %v1853
        %1916 = vmatprep.subr.bf16.mxu0 %v1858
        %1917 = vmatpush1.bf16.msra.mxu0 %v1857
        %1918 = vmatprep.subr.bf16.mxu0 %v1862
        %1919 = vmatpush1.bf16.msra.mxu0 %v1861
        %1920 = vmatprep.subr.bf16.mxu0 0
        %1921 = vmatpush1.bf16.msra.mxu0 0
        %1922 = vmatprep.subr.bf16.mxu0 0
        %1923 = vmatpush1.bf16.msra.mxu0 0
        %1924 = vmatprep.subr.bf16.mxu0 0
        %1925 = vmatpush1.bf16.msra.mxu0 0
        %1926 = vmatprep.subr.bf16.mxu0 0
        %1927 = vmatpush1.bf16.msra.mxu0 0
        %1928 = vmatprep.subr.bf16.mxu0 0
        %1929 = vmatpush1.bf16.msra.mxu0 0
        %1930 = vmatprep.subr.bf16.mxu0 0
        %1931 = vmatpush1.bf16.msra.mxu0 0
        %1932 = vmatprep.subr.bf16.mxu0 0
        %1933 = vmatpush1.bf16.msra.mxu0 0
        %1934 = vmatprep.subr.bf16.mxu0 0
        %1935 = vmatpush1.bf16.msra.mxu0 0
        %1936 = vmatprep.mubr.bf16.mxu0 0
        %1937 = vmatmul.mubr.bf16.gmra.mrb[0].mxu0 %v1830
        %v1938 = vpop.f32.mrb[0].mxu0
        %v1939 = vadd.f32 0.0, %v1938
        %v1940 = vpop.f32.mrb[0].mxu0
        %v1941 = vadd.f32 0.0, %v1940
        %v1942 = vpop.f32.mrb[0].mxu0
        %v1943 = vpop.f32.mrb[0].mxu0
        %1944 = vdwg.mxu0
        %v1945 = vadd.f32 %v1826, %v1898
        %v1946 = vadd.f32 %v1827, %v1900
        %v1947 = vadd.f32 %v1828, %v1939
        %v1948 = vadd.f32 %v1829, %v1941
        %v1949 = vmul.f32 %v1945, %v960
        %v1950 = vmul.f32 %v1946, %v961
        %v1951 = vmul.f32 %v1947, %v962
        %v1952 = vmul.f32 %v1948, %v963
        %v1953 = vtanh.pop %v1949
        %v1954 = vtanh.pop %v1950
        %v1955 = vtanh.pop %v1951
        %v1956 = vtanh.pop %v1952
        %v1957 = vmul.f32 %v1953, %v960
        %v1958 = vmul.f32 %v1954, %v961
        %v1959 = vmul.f32 %v1955, %v962
        %v1960 = vmul.f32 %v1956, %v963
        %v1961 = vadd.f32 %v1957, %v964
        %v1962 = vadd.f32 %v1958, %v965
        %v1963 = vadd.f32 %v1959, %v966
        %v1964 = vadd.f32 %v1960, %v967
        %v1965 = vmul.f32 %v1962, %v1822
        %v1966 = vmul.f32 %v1961, %v1963
        %v1967 = vadd.f32 %v1965, %v1966
        %v1968 = vtanh.pop %v1967
        %v1969 = vmul.f32 %v1964, %v1968
        %s1970 = ssub.s32 9, %s968
        %v1971 = vstv %s1970
        %vm1972 = vcmp.gt.s32.totalorder %v942, %v1971
        %v1973 = vsel %vm1972, 1, 0
        %v1974 = vcvt.s32.f32 %v1973
        %1976 = vset.pattern.permute.xlu0 0
        %1977 = vperm.xlu0 %1976, %v1974
        %v1978 = vpop.permute.xlu0 %1977
        %v1980 = vsub.f32 %v1969, %v1821
        %v1981 = vmul.f32 %v1978, %v1980
        %v1982 = vadd.f32 %v1821, %v1981
        %1983 = vst [vmem:[#allocation6] sm:$0xff] %v1982
        %v1984 = vsub.f32 %v1967, %v1822
        %v1985 = vmul.f32 %v1978, %v1984
        %v1986 = vadd.f32 %v1822, %v1985
        %1987 = vst [vmem:[#allocation7] sm:$0xff] %v1986
        %v1988 = vmul.f32 %v1978, %v1969
        %v1989 = vpack.c.bf16 %v1988, %v1988
        %s1990 = scalar_lea.vmem %s314, 4
        %1991 = vst [vmem:[%s1990] sm:$0xf] %v1989
        %v1992 = vld [vmem:[#allocation4] sm:$0xff]
        %v1993 = vld [vmem:[#allocation5] sm:$0xff]
        %s1994 = scalar_lea.vmem %s260, 48 [#allocation8]
        %v1995 = vld [vmem:[%s1994] sm:$0xff]
        %v1996 = vld [vmem:[%s1994 + $0x8] sm:$0xff]
        %v1997 = vunpack.c.l.bf16 %v1995
        %v1998 = vunpack.c.h.bf16 %v1995
        %v1999 = vunpack.c.l.bf16 %v1996
        %v2000 = vunpack.c.h.bf16 %v1996
        %v2001 = vpack.c.bf16 %v1992, %v1992
        %v2002 = vld [vmem:[#allocation2] sm:$0xff]
        %v2003 = vld [vmem:[#allocation2 + $0x8] sm:$0xff]
        %v2004 = vld [vmem:[#allocation2 + $0x10] sm:$0xff]
        %v2005 = vld [vmem:[#allocation2 + $0x18] sm:$0xff]
        %v2006 = vld [vmem:[#allocation2 + $0x20] sm:$0xff]
        %v2007 = vld [vmem:[#allocation2 + $0x28] sm:$0xff]
        %v2008 = vld [vmem:[#allocation2 + $0x30] sm:$0xff]
        %v2009 = vld [vmem:[#allocation2 + $0x38] sm:$0xff]
        %v2010 = vld [vmem:[#allocation2 + $0x40] sm:$0xff]
        %v2011 = vld [vmem:[#allocation2 + $0x48] sm:$0xff]
        %v2012 = vld [vmem:[#allocation2 + $0x50] sm:$0xff]
        %v2013 = vld [vmem:[#allocation2 + $0x58] sm:$0xff]
        %v2014 = vld [vmem:[#allocation2 + $0x60] sm:$0xff]
        %v2015 = vld [vmem:[#allocation2 + $0x68] sm:$0xff]
        %v2016 = vld [vmem:[#allocation2 + $0x70] sm:$0xff]
        %v2017 = vld [vmem:[#allocation2 + $0x78] sm:$0xff]
        %v2018 = vld [vmem:[#allocation2 + $0x80] sm:$0xff]
        %v2019 = vld [vmem:[#allocation2 + $0x88] sm:$0xff]
        %v2020 = vld [vmem:[#allocation2 + $0x90] sm:$0xff]
        %v2021 = vld [vmem:[#allocation2 + $0x98] sm:$0xff]
        %v2022 = vld [vmem:[#allocation2 + $0xa0] sm:$0xff]
        %v2023 = vld [vmem:[#allocation2 + $0xa8] sm:$0xff]
        %v2024 = vld [vmem:[#allocation2 + $0xb0] sm:$0xff]
        %v2025 = vld [vmem:[#allocation2 + $0xb8] sm:$0xff]
        %v2026 = vld [vmem:[#allocation2 + $0xc0] sm:$0xff]
        %v2027 = vld [vmem:[#allocation2 + $0xc8] sm:$0xff]
        %v2028 = vld [vmem:[#allocation2 + $0xd0] sm:$0xff]
        %v2029 = vld [vmem:[#allocation2 + $0xd8] sm:$0xff]
        %v2030 = vld [vmem:[#allocation2 + $0xe0] sm:$0xff]
        %v2031 = vld [vmem:[#allocation2 + $0xe8] sm:$0xff]
        %v2032 = vld [vmem:[#allocation2 + $0xf0] sm:$0xff]
        %v2033 = vld [vmem:[#allocation2 + $0xf8] sm:$0xff]
        %2034 = vmatprep.subr.bf16.mxu0 %v2003
        %2035 = vmatpush1.bf16.msra.mxu0 %v2002
        %2036 = vmatprep.subr.bf16.mxu0 %v2007
        %2037 = vmatpush1.bf16.msra.mxu0 %v2006
        %2038 = vmatprep.subr.bf16.mxu0 %v2011
        %2039 = vmatpush1.bf16.msra.mxu0 %v2010
        %2040 = vmatprep.subr.bf16.mxu0 %v2015
        %2041 = vmatpush1.bf16.msra.mxu0 %v2014
        %2042 = vmatprep.subr.bf16.mxu0 %v2019
        %2043 = vmatpush1.bf16.msra.mxu0 %v2018
        %2044 = vmatprep.subr.bf16.mxu0 %v2023
        %2045 = vmatpush1.bf16.msra.mxu0 %v2022
        %2046 = vmatprep.subr.bf16.mxu0 %v2027
        %2047 = vmatpush1.bf16.msra.mxu0 %v2026
        %2048 = vmatprep.subr.bf16.mxu0 %v2031
        %2049 = vmatpush1.bf16.msra.mxu0 %v2030
        %2050 = vmatprep.subr.bf16.mxu0 0
        %2051 = vmatpush1.bf16.msra.mxu0 0
        %2052 = vmatprep.subr.bf16.mxu0 0
        %2053 = vmatpush1.bf16.msra.mxu0 0
        %2054 = vmatprep.subr.bf16.mxu0 0
        %2055 = vmatpush1.bf16.msra.mxu0 0
        %2056 = vmatprep.subr.bf16.mxu0 0
        %2057 = vmatpush1.bf16.msra.mxu0 0
        %2058 = vmatprep.subr.bf16.mxu0 0
        %2059 = vmatpush1.bf16.msra.mxu0 0
        %2060 = vmatprep.subr.bf16.mxu0 0
        %2061 = vmatpush1.bf16.msra.mxu0 0
        %2062 = vmatprep.subr.bf16.mxu0 0
        %2063 = vmatpush1.bf16.msra.mxu0 0
        %2064 = vmatprep.subr.bf16.mxu0 0
        %2065 = vmatpush1.bf16.msra.mxu0 0
        %2066 = vmatprep.mubr.bf16.mxu0 0
        %2067 = vmatmul.mubr.bf16.gmra.mrb[0].mxu0 %v2001
        %v2068 = vpop.f32.mrb[0].mxu0
        %v2069 = vadd.f32 0.0, %v2068
        %v2070 = vpop.f32.mrb[0].mxu0
        %v2071 = vadd.f32 0.0, %v2070
        %v2072 = vpop.f32.mrb[0].mxu0
        %v2073 = vpop.f32.mrb[0].mxu0
        %2074 = vdwg.mxu0
        %2075 = vmatprep.subr.bf16.mxu0 %v2005
        %2076 = vmatpush1.bf16.msra.mxu0 %v2004
        %2077 = vmatprep.subr.bf16.mxu0 %v2009
        %2078 = vmatpush1.bf16.msra.mxu0 %v2008
        %2079 = vmatprep.subr.bf16.mxu0 %v2013
        %2080 = vmatpush1.bf16.msra.mxu0 %v2012
        %2081 = vmatprep.subr.bf16.mxu0 %v2017
        %2082 = vmatpush1.bf16.msra.mxu0 %v2016
        %2083 = vmatprep.subr.bf16.mxu0 %v2021
        %2084 = vmatpush1.bf16.msra.mxu0 %v2020
        %2085 = vmatprep.subr.bf16.mxu0 %v2025
        %2086 = vmatpush1.bf16.msra.mxu0 %v2024
        %2087 = vmatprep.subr.bf16.mxu0 %v2029
        %2088 = vmatpush1.bf16.msra.mxu0 %v2028
        %2089 = vmatprep.subr.bf16.mxu0 %v2033
        %2090 = vmatpush1.bf16.msra.mxu0 %v2032
        %2091 = vmatprep.subr.bf16.mxu0 0
        %2092 = vmatpush1.bf16.msra.mxu0 0
        %2093 = vmatprep.subr.bf16.mxu0 0
        %2094 = vmatpush1.bf16.msra.mxu0 0
        %2095 = vmatprep.subr.bf16.mxu0 0
        %2096 = vmatpush1.bf16.msra.mxu0 0
        %2097 = vmatprep.subr.bf16.mxu0 0
        %2098 = vmatpush1.bf16.msra.mxu0 0
        %2099 = vmatprep.subr.bf16.mxu0 0
        %2100 = vmatpush1.bf16.msra.mxu0 0
        %2101 = vmatprep.subr.bf16.mxu0 0
        %2102 = vmatpush1.bf16.msra.mxu0 0
        %2103 = vmatprep.subr.bf16.mxu0 0
        %2104 = vmatpush1.bf16.msra.mxu0 0
        %2105 = vmatprep.subr.bf16.mxu0 0
        %2106 = vmatpush1.bf16.msra.mxu0 0
        %2107 = vmatprep.mubr.bf16.mxu0 0
        %2108 = vmatmul.mubr.bf16.gmra.mrb[0].mxu0 %v2001
        %v2109 = vpop.f32.mrb[0].mxu0
        %v2110 = vadd.f32 0.0, %v2109
        %v2111 = vpop.f32.mrb[0].mxu0
        %v2112 = vadd.f32 0.0, %v2111
        %v2113 = vpop.f32.mrb[0].mxu0
        %v2114 = vpop.f32.mrb[0].mxu0
        %2115 = vdwg.mxu0
        %v2116 = vadd.f32 %v1997, %v2069
        %v2117 = vadd.f32 %v1998, %v2071
        %v2118 = vadd.f32 %v1999, %v2110
        %v2119 = vadd.f32 %v2000, %v2112
        %v2120 = vmul.f32 %v2116, %v960
        %v2121 = vmul.f32 %v2117, %v961
        %v2122 = vmul.f32 %v2118, %v962
        %v2123 = vmul.f32 %v2119, %v963
        %v2124 = vtanh.pop %v2120
        %v2125 = vtanh.pop %v2121
        %v2126 = vtanh.pop %v2122
        %v2127 = vtanh.pop %v2123
        %v2128 = vmul.f32 %v2124, %v960
        %v2129 = vmul.f32 %v2125, %v961
        %v2130 = vmul.f32 %v2126, %v962
        %v2131 = vmul.f32 %v2127, %v963
        %v2132 = vadd.f32 %v2128, %v964
        %v2133 = vadd.f32 %v2129, %v965
        %v2134 = vadd.f32 %v2130, %v966
        %v2135 = vadd.f32 %v2131, %v967
        %v2136 = vmul.f32 %v2133, %v1993
        %v2137 = vmul.f32 %v2132, %v2134
        %v2138 = vadd.f32 %v2136, %v2137
        %v2139 = vtanh.pop %v2138
        %v2140 = vmul.f32 %v2135, %v2139
        %s2141 = sadd.s32 %s968, 3
        %v2142 = vstv %s2141
        %vm2143 = vcmp.gt.s32.totalorder %v942, %v2142
        %v2144 = vsel %vm2143, 1, 0
        %v2145 = vcvt.s32.f32 %v2144
        %2147 = vset.pattern.permute.xlu0 0
        %2148 = vperm.xlu0 %2147, %v2145
        %v2149 = vpop.permute.xlu0 %2148
        %v2151 = vsub.f32 %v2140, %v1992
        %v2152 = vmul.f32 %v2149, %v2151
        %v2153 = vadd.f32 %v1992, %v2152
        %2154 = vst [vmem:[#allocation4] sm:$0xff] %v2153
        %v2155 = vsub.f32 %v2138, %v1993
        %v2156 = vmul.f32 %v2149, %v2155
        %v2157 = vadd.f32 %v1993, %v2156
        %2158 = vst [vmem:[#allocation5] sm:$0xff] %v2157
        %v2159 = vmul.f32 %v2149, %v2140
        %v2160 = vpack.c.bf16 %v2159, %v2159
        %s2161 = scalar_lea.vmem %s307, 12
        %2162 = vst [vmem:[%s2161] sm:$0xf] %v2160
        %v2163 = vld [vmem:[#allocation6] sm:$0xff]
        %v2164 = vld [vmem:[#allocation7] sm:$0xff]
        %v2165 = vld [vmem:[%s267] sm:$0xff]
        %v2166 = vld [vmem:[%s267 + $0x8] sm:$0xff]
        %v2167 = vunpack.c.l.bf16 %v2165
        %v2168 = vunpack.c.h.bf16 %v2165
        %v2169 = vunpack.c.l.bf16 %v2166
        %v2170 = vunpack.c.h.bf16 %v2166
        %v2171 = vpack.c.bf16 %v2163, %v2163
        %v2172 = vld [vmem:[#allocation3] sm:$0xff]
        %v2173 = vld [vmem:[#allocation3 + $0x8] sm:$0xff]
        %v2174 = vld [vmem:[#allocation3 + $0x10] sm:$0xff]
        %v2175 = vld [vmem:[#allocation3 + $0x18] sm:$0xff]
        %v2176 = vld [vmem:[#allocation3 + $0x20] sm:$0xff]
        %v2177 = vld [vmem:[#allocation3 + $0x28] sm:$0xff]
        %v2178 = vld [vmem:[#allocation3 + $0x30] sm:$0xff]
        %v2179 = vld [vmem:[#allocation3 + $0x38] sm:$0xff]
        %v2180 = vld [vmem:[#allocation3 + $0x40] sm:$0xff]
        %v2181 = vld [vmem:[#allocation3 + $0x48] sm:$0xff]
        %v2182 = vld [vmem:[#allocation3 + $0x50] sm:$0xff]
        %v2183 = vld [vmem:[#allocation3 + $0x58] sm:$0xff]
        %v2184 = vld [vmem:[#allocation3 + $0x60] sm:$0xff]
        %v2185 = vld [vmem:[#allocation3 + $0x68] sm:$0xff]
        %v2186 = vld [vmem:[#allocation3 + $0x70] sm:$0xff]
        %v2187 = vld [vmem:[#allocation3 + $0x78] sm:$0xff]
        %v2188 = vld [vmem:[#allocation3 + $0x80] sm:$0xff]
        %v2189 = vld [vmem:[#allocation3 + $0x88] sm:$0xff]
        %v2190 = vld [vmem:[#allocation3 + $0x90] sm:$0xff]
        %v2191 = vld [vmem:[#allocation3 + $0x98] sm:$0xff]
        %v2192 = vld [vmem:[#allocation3 + $0xa0] sm:$0xff]
        %v2193 = vld [vmem:[#allocation3 + $0xa8] sm:$0xff]
        %v2194 = vld [vmem:[#allocation3 + $0xb0] sm:$0xff]
        %v2195 = vld [vmem:[#allocation3 + $0xb8] sm:$0xff]
        %v2196 = vld [vmem:[#allocation3 + $0xc0] sm:$0xff]
        %v2197 = vld [vmem:[#allocation3 + $0xc8] sm:$0xff]
        %v2198 = vld [vmem:[#allocation3 + $0xd0] sm:$0xff]
        %v2199 = vld [vmem:[#allocation3 + $0xd8] sm:$0xff]
        %v2200 = vld [vmem:[#allocation3 + $0xe0] sm:$0xff]
        %v2201 = vld [vmem:[#allocation3 + $0xe8] sm:$0xff]
        %v2202 = vld [vmem:[#allocation3 + $0xf0] sm:$0xff]
        %v2203 = vld [vmem:[#allocation3 + $0xf8] sm:$0xff]
        %2204 = vmatprep.subr.bf16.mxu0 %v2173
        %2205 = vmatpush1.bf16.msra.mxu0 %v2172
        %2206 = vmatprep.subr.bf16.mxu0 %v2177
        %2207 = vmatpush1.bf16.msra.mxu0 %v2176
        %2208 = vmatprep.subr.bf16.mxu0 %v2181
        %2209 = vmatpush1.bf16.msra.mxu0 %v2180
        %2210 = vmatprep.subr.bf16.mxu0 %v2185
        %2211 = vmatpush1.bf16.msra.mxu0 %v2184
        %2212 = vmatprep.subr.bf16.mxu0 %v2189
        %2213 = vmatpush1.bf16.msra.mxu0 %v2188
        %2214 = vmatprep.subr.bf16.mxu0 %v2193
        %2215 = vmatpush1.bf16.msra.mxu0 %v2192
        %2216 = vmatprep.subr.bf16.mxu0 %v2197
        %2217 = vmatpush1.bf16.msra.mxu0 %v2196
        %2218 = vmatprep.subr.bf16.mxu0 %v2201
        %2219 = vmatpush1.bf16.msra.mxu0 %v2200
        %2220 = vmatprep.subr.bf16.mxu0 0
        %2221 = vmatpush1.bf16.msra.mxu0 0
        %2222 = vmatprep.subr.bf16.mxu0 0
        %2223 = vmatpush1.bf16.msra.mxu0 0
        %2224 = vmatprep.subr.bf16.mxu0 0
        %2225 = vmatpush1.bf16.msra.mxu0 0
        %2226 = vmatprep.subr.bf16.mxu0 0
        %2227 = vmatpush1.bf16.msra.mxu0 0
        %2228 = vmatprep.subr.bf16.mxu0 0
        %2229 = vmatpush1.bf16.msra.mxu0 0
        %2230 = vmatprep.subr.bf16.mxu0 0
        %2231 = vmatpush1.bf16.msra.mxu0 0
        %2232 = vmatprep.subr.bf16.mxu0 0
        %2233 = vmatpush1.bf16.msra.mxu0 0
        %2234 = vmatprep.subr.bf16.mxu0 0
        %2235 = vmatpush1.bf16.msra.mxu0 0
        %2236 = vmatprep.mubr.bf16.mxu0 0
        %2237 = vmatmul.mubr.bf16.gmra.mrb[0].mxu0 %v2171
        %v2238 = vpop.f32.mrb[0].mxu0
        %v2239 = vadd.f32 0.0, %v2238
        %v2240 = vpop.f32.mrb[0].mxu0
        %v2241 = vadd.f32 0.0, %v2240
        %v2242 = vpop.f32.mrb[0].mxu0
        %v2243 = vpop.f32.mrb[0].mxu0
        %2244 = vdwg.mxu0
        %2245 = vmatprep.subr.bf16.mxu0 %v2175
        %2246 = vmatpush1.bf16.msra.mxu0 %v2174
        %2247 = vmatprep.subr.bf16.mxu0 %v2179
        %2248 = vmatpush1.bf16.msra.mxu0 %v2178
        %2249 = vmatprep.subr.bf16.mxu0 %v2183
        %2250 = vmatpush1.bf16.msra.mxu0 %v2182
        %2251 = vmatprep.subr.bf16.mxu0 %v2187
        %2252 = vmatpush1.bf16.msra.mxu0 %v2186
        %2253 = vmatprep.subr.bf16.mxu0 %v2191
        %2254 = vmatpush1.bf16.msra.mxu0 %v2190
        %2255 = vmatprep.subr.bf16.mxu0 %v2195
        %2256 = vmatpush1.bf16.msra.mxu0 %v2194
        %2257 = vmatprep.subr.bf16.mxu0 %v2199
        %2258 = vmatpush1.bf16.msra.mxu0 %v2198
        %2259 = vmatprep.subr.bf16.mxu0 %v2203
        %2260 = vmatpush1.bf16.msra.mxu0 %v2202
        %2261 = vmatprep.subr.bf16.mxu0 0
        %2262 = vmatpush1.bf16.msra.mxu0 0
        %2263 = vmatprep.subr.bf16.mxu0 0
        %2264 = vmatpush1.bf16.msra.mxu0 0
        %2265 = vmatprep.subr.bf16.mxu0 0
        %2266 = vmatpush1.bf16.msra.mxu0 0
        %2267 = vmatprep.subr.bf16.mxu0 0
        %2268 = vmatpush1.bf16.msra.mxu0 0
        %2269 = vmatprep.subr.bf16.mxu0 0
        %2270 = vmatpush1.bf16.msra.mxu0 0
        %2271 = vmatprep.subr.bf16.mxu0 0
        %2272 = vmatpush1.bf16.msra.mxu0 0
        %2273 = vmatprep.subr.bf16.mxu0 0
        %2274 = vmatpush1.bf16.msra.mxu0 0
        %2275 = vmatprep.subr.bf16.mxu0 0
        %2276 = vmatpush1.bf16.msra.mxu0 0
        %2277 = vmatprep.mubr.bf16.mxu0 0
        %2278 = vmatmul.mubr.bf16.gmra.mrb[0].mxu0 %v2171
        %v2279 = vpop.f32.mrb[0].mxu0
        %v2280 = vadd.f32 0.0, %v2279
        %v2281 = vpop.f32.mrb[0].mxu0
        %v2282 = vadd.f32 0.0, %v2281
        %v2283 = vpop.f32.mrb[0].mxu0
        %v2284 = vpop.f32.mrb[0].mxu0
        %2285 = vdwg.mxu0
        %v2286 = vadd.f32 %v2167, %v2239
        %v2287 = vadd.f32 %v2168, %v2241
        %v2288 = vadd.f32 %v2169, %v2280
        %v2289 = vadd.f32 %v2170, %v2282
        %v2290 = vmul.f32 %v2286, %v960
        %v2291 = vmul.f32 %v2287, %v961
        %v2292 = vmul.f32 %v2288, %v962
        %v2293 = vmul.f32 %v2289, %v963
        %v2294 = vtanh.pop %v2290
        %v2295 = vtanh.pop %v2291
        %v2296 = vtanh.pop %v2292
        %v2297 = vtanh.pop %v2293
        %v2298 = vmul.f32 %v2294, %v960
        %v2299 = vmul.f32 %v2295, %v961
        %v2300 = vmul.f32 %v2296, %v962
        %v2301 = vmul.f32 %v2297, %v963
        %v2302 = vadd.f32 %v2298, %v964
        %v2303 = vadd.f32 %v2299, %v965
        %v2304 = vadd.f32 %v2300, %v966
        %v2305 = vadd.f32 %v2301, %v967
        %v2306 = vmul.f32 %v2303, %v2164
        %v2307 = vmul.f32 %v2302, %v2304
        %v2308 = vadd.f32 %v2306, %v2307
        %v2309 = vtanh.pop %v2308
        %v2310 = vmul.f32 %v2305, %v2309
        %s2311 = ssub.s32 8, %s968
        %v2312 = vstv %s2311
        %vm2313 = vcmp.gt.s32.totalorder %v942, %v2312
        %v2314 = vsel %vm2313, 1, 0
        %v2315 = vcvt.s32.f32 %v2314
        %2317 = vset.pattern.permute.xlu0 0
        %2318 = vperm.xlu0 %2317, %v2315
        %v2319 = vpop.permute.xlu0 %2318
        %v2321 = vsub.f32 %v2310, %v2163
        %v2322 = vmul.f32 %v2319, %v2321
        %v2323 = vadd.f32 %v2163, %v2322
        %2324 = vst [vmem:[#allocation6] sm:$0xff] %v2323
        %v2325 = vsub.f32 %v2308, %v2164
        %v2326 = vmul.f32 %v2319, %v2325
        %v2327 = vadd.f32 %v2164, %v2326
        %2328 = vst [vmem:[#allocation7] sm:$0xff] %v2327
        %v2329 = vmul.f32 %v2319, %v2310
        %v2330 = vpack.c.bf16 %v2329, %v2329
        %2331 = vst [vmem:[%s314] sm:$0xf] %v2330
        %s2332 = smul.u32 4, %s18
        %p2333 = scmp.lt.s32.totalorder %s2332, 11
        %s2334 = scalar_select %p2333, %s2332, 11
        %s2335 = smul.addr %s2334, 4
        %s2336 = scalar_lea.vmem %s5, %s2335
        %s2337 = ssub.s32 2, %s18
        %s2338 = smul.u32 4, %s2337
        %p2339 = scmp.lt.s32.totalorder %s2338, 11
        %s2340 = scalar_select %p2339, %s2338, 11
        %s2341 = smul.addr %s2340, 4
        %s2342 = scalar_lea.vmem %s6, %s2341
        // Predicated region
        $region159: #{stackedrnns_forward.2} parent=69 // pred_check
          %p2343 = pneg %p111
        $region160: #{stackedrnns_forward.2} parent=69 // pred_check_branch
          %2345 = sbr.rel (%p2343) target = $region162
        $region161: #{stackedrnns_forward.2} parent=69 // pred_region
          %s2346 = smul.u32 4, %s18
        $region162: #{stackedrnns_forward.2} parent=69 // pred_fallthru
          _
        // Predicated region
        $region163: #{stackedrnns_forward.2} parent=69 // pred_check
          %p2347 = pneg %p139
        $region164: #{stackedrnns_forward.2} parent=69 // pred_check_branch
          %2349 = sbr.rel (%p2347) target = $region166
        $region165: #{stackedrnns_forward.2} parent=69 // pred_region
          %s2350 = ssub.s32 2, %s18
          %s2351 = smul.u32 4, %s2350
        $region166: #{stackedrnns_forward.2} parent=69 // pred_fallthru
          _
      $region70: #{stackedrnns_forward.2} parent=5 // pred_fallthru
        _
      %p2352 = scmp.le.s32.totalorder 2, %s13
      // Predicated region
      $region167: #{stackedrnns_forward.2} parent=5 // pred_check
        %p2353 = pneg %p2352
      $region168: #{stackedrnns_forward.2} parent=5 // pred_check_branch
        %2355 = sbr.rel (%p2353) target = $region170
      $region169: #{stackedrnns_forward.2} parent=5 // pred_region
        %s2356 = ssub.s32 %s13, 2
        // Predicated region
        $region171: #{stackedrnns_forward.2} parent=169 // pred_check
          %p2357 = pneg %p117
        $region172: #{stackedrnns_forward.2} parent=169 // pred_check_branch
          %2359 = sbr.rel (%p2357) target = $region174
        $region173: #{stackedrnns_forward.2} parent=169 // pred_region
          %s2360 = smul.u32 4, %s19
          %p2361 = scmp.lt.s32.totalorder %s2360, 11
          %s2362 = scalar_select %p2361, %s2360, 11
          %s2363 = smul.addr %s2362, 4
          %s2364 = scalar_lea.vmem %s5, %s2363
        $region174: #{stackedrnns_forward.2} parent=169 // pred_fallthru
          _
        // Predicated region
        $region175: #{stackedrnns_forward.2} parent=169 // pred_check
          %p2365 = pneg %p145
        $region176: #{stackedrnns_forward.2} parent=169 // pred_check_branch
          %2367 = sbr.rel (%p2365) target = $region178
        $region177: #{stackedrnns_forward.2} parent=169 // pred_region
          %s2368 = ssub.s32 2, %s19
          %s2369 = smul.u32 4, %s2368
          %p2370 = scmp.lt.s32.totalorder %s2369, 11
          %s2371 = scalar_select %p2370, %s2369, 11
          %s2372 = smul.addr %s2371, 4
          %s2373 = scalar_lea.vmem %s6, %s2372
        $region178: #{stackedrnns_forward.2} parent=169 // pred_fallthru
          _
      $region170: #{stackedrnns_forward.2} parent=5 // pred_fallthru
        _
    $region6: #{stackedrnns_forward.2} parent=1 // loop_footer
      %s17 = sadd.s32 1, %s13
    $region7: #{stackedrnns_forward.2} parent=1 // loop_footer_branch
      %12 = sbr.rel target = $region3
    $region8: #{stackedrnns_forward.2} parent=1 // loop_exit
      _

</llo_original>
